<compile_context>
chip_gen: v5e
topology: v5e:2x2
jax: 0.10.0
libtpu: 0.0.40
codegen_flags: <defaults>
</compile_context>

<pallas_src>
import jax
import jax.numpy as jnp
from jax import lax
from jax.experimental import pallas as pl
from jax.experimental.pallas import tpu as pltpu

EPS = 1e-5


def _vmem_budget():
    # Generation-aware scoped-VMEM budget: half of physical VMEM, <= 64 MiB
    # (v7x: 32 of 64 MiB; v5e/v6e: 64 of 128 MiB).
    try:
        cap = int(pltpu.get_tpu_info().vmem_capacity_bytes)
    except Exception:
        cap = 64 * 1024 * 1024
    return min(64 * 1024 * 1024, cap // 2)


VMEM_LIMIT = _vmem_budget()


# ----------------------------- Pallas kernels --------------------------------

def matmul_stats_kernel(x_ref, w_ref, b_ref, sum_ref, sq_ref):
    # Stats-only 1x1-conv tile: per-channel sum / sum-of-squares of x @ w + b.
    # No dense output -> the activation is recomputed in the apply pass instead
    # of being round-tripped through HBM.
    y = jnp.dot(x_ref[...], w_ref[...], preferred_element_type=jnp.float32)
    y = y + b_ref[...]
    sum_ref[...] = jnp.sum(y, axis=0, keepdims=True)
    sq_ref[...] = jnp.sum(y * y, axis=0, keepdims=True)
    # TODO(synk): on v5e, if the VALU slot saturates, do these column sums on
    # the MXU via a ones-row dot instead of jnp.sum(axis=0).


def matmul_affine_relu_kernel(x_ref, w_ref, s_ref, t_ref, o_ref):
    # Fused 1x1 conv + BN(affine) + ReLU: o = relu((x @ w) * s + t).
    y = jnp.dot(x_ref[...], w_ref[...], preferred_element_type=jnp.float32)
    o_ref[...] = jnp.maximum(y * s_ref[...] + t_ref[...], 0.0).astype(o_ref.dtype)


def dw3x3_s2_stats_kernel(ph_ref, w_ref, o_ref, sum_ref, sq_ref):
    # Depthwise 3x3 stride-2 pad-1 conv on a lane-flattened layout.
    #   ph_ref : (4, Hp, Wp*C2) bf16 - four stride-2 phases of the padded
    #            input, packed into one array (single block DMA per step).
    #   w_ref  : (9, Wo*C2)  f32     - per-tap weights pre-broadcast along Wo.
    #   o_ref  : (Ho, Wo*C2) bf16    - lane-dense output.
    # Per-image BN partial statistics are emitted as extra outputs.
    Ho, WoC2 = o_ref.shape
    C2 = ph_ref.shape[2] - WoC2          # Wp*C2 - Wo*C2  (Wp = Wo + 1)
    # Load each phase once; VPU math in f32 (v5e has no bf16 VALU).
    ph = [ph_ref[p].astype(jnp.float32) for p in range(4)]
    acc = None
    for kh in range(3):
        for kw in range(3):
            p = (kh % 2) * 2 + (kw % 2)
            r0, c0 = kh // 2, kw // 2
            patch = ph[p][r0:r0 + Ho, c0 * C2:c0 * C2 + WoC2]
            term = patch * w_ref[kh * 3 + kw:kh * 3 + kw + 1, :]
            acc = term if acc is None else acc + term      # first tap initializes
    o_ref[...] = acc.astype(o_ref.dtype)
    sum_ref[...] = jnp.sum(acc, axis=0, keepdims=True)
    sq_ref[...] = jnp.sum(acc * acc, axis=0, keepdims=True)


# ------------------------------- wrappers -------------------------------------

def _pick_tm(m, row_bytes, budget, target=2048):
    """Largest multiple-of-8 row tile dividing m whose double-buffered
    footprint fits comfortably inside the scoped-VMEM budget."""
    cap = min(target, max(8, budget // (4 * max(row_bytes, 1))))
    if m <= cap:
        return m
    t = (cap // 8) * 8
    while t >= 8:
        if m % t == 0:
            return t
        t -= 8
    # Awkward m with no multiple-of-8 divisor <= cap: a full-extent block keeps
    # the per-tile BN statistics exact (and satisfies the (8,128) rule).
    return m


def matmul_stats(x2d, w, bias):
    """Per-channel sum / sum-of-squares of x2d @ w + bias.  No dense output."""
    M, Cin = x2d.shape
    Cout = w.shape[1]
    TM = _pick_tm(M, 2 * Cin + 8 * Cout, VMEM_LIMIT)
    nt = M // TM
    s, q = pl.pallas_call(
        matmul_stats_kernel,
        out_shape=(jax.ShapeDtypeStruct((nt, 1, Cout), jnp.float32),
                   jax.ShapeDtypeStruct((nt, 1, Cout), jnp.float32)),
        grid=(nt,),
        in_specs=[pl.BlockSpec((TM, Cin), lambda i: (i, 0)),
                  pl.BlockSpec((Cin, Cout), lambda i: (0, 0)),
                  pl.BlockSpec((1, Cout), lambda i: (0, 0))],
        out_specs=(pl.BlockSpec((None, 1, Cout), lambda i: (i, 0, 0)),
                   pl.BlockSpec((None, 1, Cout), lambda i: (i, 0, 0))),
        compiler_params=pltpu.CompilerParams(
            dimension_semantics=("parallel",),
            vmem_limit_bytes=VMEM_LIMIT),
    )(x2d, w, bias.reshape(1, Cout).astype(jnp.float32))
    return jnp.sum(s, axis=(0, 1)), jnp.sum(q, axis=(0, 1))


def matmul_affine_relu(x2d, w, scale, shift, out_dtype):
    """relu((x2d @ w) * scale + shift): fused 1x1 conv + BN affine + ReLU."""
    M, Cin = x2d.shape
    Cout = w.shape[1]
    ob = jnp.dtype(out_dtype).itemsize
    TM = _pick_tm(M, 2 * Cin + (4 + ob) * Cout, VMEM_LIMIT)
    nt = M // TM
    # TODO(synk): for Cout < 128 a lane-dense flattened out block (in-kernel
    # reshape to (TM*Cout/128, 128)) would avoid masked vst on the store path.
    return pl.pallas_call(
        matmul_affine_relu_kernel,
        out_shape=jax.ShapeDtypeStruct((M, Cout), out_dtype),
        grid=(nt,),
        in_specs=[pl.BlockSpec((TM, Cin), lambda i: (i, 0)),
                  pl.BlockSpec((Cin, Cout), lambda i: (0, 0)),
                  pl.BlockSpec((1, Cout), lambda i: (0, 0)),
                  pl.BlockSpec((1, Cout), lambda i: (0, 0))],
        out_specs=pl.BlockSpec((TM, Cout), lambda i: (i, 0)),
        compiler_params=pltpu.CompilerParams(
            dimension_semantics=("parallel",),
            vmem_limit_bytes=VMEM_LIMIT),
    )(x2d, w, scale.reshape(1, Cout).astype(jnp.float32),
      shift.reshape(1, Cout).astype(jnp.float32))


def depthwise3x3_s2_stats(x, w3x3):
    """x: (N, H, W, C2) bf16 NHWC; w3x3: (3, 3, C2) f32.  stride=2, pad=1.
    Returns (y, sum_c, sumsq_c); y has lane-flat shape (N, Ho, Wo*C2), bf16."""
    N, H, W, C2 = x.shape
    Ho, Wo = (H + 1) // 2, (W + 1) // 2
    Hp, Wp = Ho + 1, Wo + 1
    # Zero-pad so every stride-2 phase has the same (Hp, Wp) shape, pack the
    # four phases into one array (one block DMA per grid step) and flatten
    # (Wp, C2) -> Wp*C2 so the kernel's math and stores are lane-dense.  Pure
    # data movement, fused by XLA with the concat that produces `x`.
    xp = jnp.pad(x, ((0, 0), (1, 2 * Hp - H - 1), (1, 2 * Wp - W - 1), (0, 0)))
    ph = jnp.stack([xp[:, 0::2, 0::2, :], xp[:, 0::2, 1::2, :],
                    xp[:, 1::2, 0::2, :], xp[:, 1::2, 1::2, :]], axis=1)
    ph = ph.reshape(N, 4, Hp, Wp * C2)
    w_t = jnp.tile(w3x3.reshape(9, 1, C2).astype(jnp.float32),
                   (1, Wo, 1)).reshape(9, Wo * C2)
    # TODO(synk): for very large H*W on v7x (64 MiB VMEM), tile over output
    # rows with a one-row halo instead of whole images per grid step.
    out, s, q = pl.pallas_call(
        dw3x3_s2_stats_kernel,
        out_shape=(jax.ShapeDtypeStruct((N, Ho, Wo * C2), jnp.bfloat16),
                   jax.ShapeDtypeStruct((N, 1, Wo * C2), jnp.float32),
                   jax.ShapeDtypeStruct((N, 1, Wo * C2), jnp.float32)),
        grid=(N,),
        in_specs=[pl.BlockSpec((None, 4, Hp, Wp * C2), lambda n: (n, 0, 0, 0)),
                  pl.BlockSpec((9, Wo * C2), lambda n: (0, 0))],
        out_specs=(pl.BlockSpec((None, Ho, Wo * C2), lambda n: (n, 0, 0)),
                   pl.BlockSpec((None, 1, Wo * C2), lambda n: (n, 0, 0)),
                   pl.BlockSpec((None, 1, Wo * C2), lambda n: (n, 0, 0))),
        compiler_params=pltpu.CompilerParams(
            dimension_semantics=("parallel",),
            vmem_limit_bytes=VMEM_LIMIT),
    )(ph, w_t)
    sum_c = jnp.sum(s.reshape(N, Wo, C2), axis=(0, 1))
    sq_c = jnp.sum(q.reshape(N, Wo, C2), axis=(0, 1))
    return out, sum_c, sq_c


def _bn_scale_bias(ch_sum, ch_sumsq, count, gamma, beta):
    # Training-mode BatchNorm (biased variance, eps=1e-5), single-pass in f32.
    mean = ch_sum / count
    var = jnp.maximum(ch_sumsq / count - mean * mean, 0.0)   # guard cancellation
    scale = gamma / jnp.sqrt(var + EPS)
    return scale, beta - mean * scale


def downsample_unit_forward(x_nchw, p):
    N, C, H, W = x_nchw.shape
    C2 = 2 * C
    # NCHW -> NHWC and the bf16 cast in one XLA pass.
    # TODO(synk): fold this transpose into the stage-1 kernels by contracting
    # over the channel axis of an NCHW tile with dot_general.
    xb = jnp.transpose(x_nchw, (0, 2, 3, 1)).astype(jnp.bfloat16)
    M0 = N * H * W
    x2 = xb.reshape(M0, C)
    w1 = p['w1r'].astype(jnp.bfloat16)

    # ---- right-branch head: conv1r + bn1r + relu -----------------------------
    # Pass 1: BN statistics only (no dense y1 write); pass 2 recomputes the
    # matmul and applies BN+ReLU, writing y1a directly in bf16.
    s1, q1 = matmul_stats(x2, w1, jnp.zeros((C,), jnp.float32))
    sc1, bi1 = _bn_scale_bias(s1, q1, M0, p['g1r'], p['b1r'])
    y1a = matmul_affine_relu(x2, w1, sc1, bi1, jnp.bfloat16)          # (M0, C) bf16

    # ---- both depthwise 3x3 s2 convs in one kernel (fused BN stats) ----------
    both = jnp.concatenate([y1a.reshape(N, H, W, C), xb], axis=-1)    # [right | left]
    w_dw = jnp.concatenate([p['w2r'], p['w1l']], axis=-1)             # (3, 3, 2C)
    d, sd, qd = depthwise3x3_s2_stats(both, w_dw)                     # (N,Ho,Wo*2C) bf16
    Ho = d.shape[1]
    Wo = d.shape[2] // C2
    M1 = N * Ho * Wo
    sc_d, bi_d = _bn_scale_bias(sd, qd, M1,
                                jnp.concatenate([p['g2r'], p['g1l']]),
                                jnp.concatenate([p['b2r'], p['b1l']]))

    # ---- conv3r + conv2l as ONE (2C,2C) matmul -------------------------------
    # BN2r/BN1l folded into weights (input-side scale) and bias; output columns
    # pre-permuted so channel_shuffle(groups=2) + concat are free.  (The zero
    # blocks are harmless while memory-bound at ShuffleNet widths; for
    # MXU-bound wide stages split into two CxC dots instead.)
    zc = jnp.zeros((C, C), jnp.float32)
    w_big = jnp.concatenate(
        [jnp.stack([p['w3r'], zc], axis=-1).reshape(C, C2),
         jnp.stack([zc, p['w2l']], axis=-1).reshape(C, C2)], axis=0)  # (2C, 2C)
    w_eff = (sc_d[:, None] * w_big).astype(jnp.bfloat16)
    b_eff = bi_d @ w_big
    d2 = d.reshape(M1, C2)

    # Pass 1: stats of the merged conv output; pass 2 recomputes the matmul and
    # applies the final BN (bn3r/bn2l interleaved) + ReLU - no yf round trip.
    sf, qf = matmul_stats(d2, w_eff, b_eff)
    g_f = jnp.stack([p['g3r'], p['g2l']], axis=-1).reshape(C2)
    b_f = jnp.stack([p['b3r'], p['b2l']], axis=-1).reshape(C2)
    sc_f, bi_f = _bn_scale_bias(sf, qf, M1, g_f, b_f)
    out2d = matmul_affine_relu(d2, w_eff, sc_f, b_eff * sc_f + bi_f, jnp.float32)

    out = out2d.reshape(N, Ho, Wo, C2)
    # TODO(synk): fold this NHWC->NCHW transpose into the final kernel's
    # out_spec (transposed dot_general writing (C2, rows) blocks).
    return jnp.transpose(out, (0, 3, 1, 2))


# ----------------------- pure-JAX f32 reference (for checking) ----------------

def _ref_conv1x1(x, w):
    return lax.conv_general_dilated(
        x, w.reshape(1, 1, *w.shape), (1, 1), 'VALID',
        dimension_numbers=('NHWC', 'HWIO', 'NHWC'),
        precision=lax.Precision.HIGHEST)


def _ref_dw(x, w):
    C = x.shape[-1]
    return lax.conv_general_dilated(
        x, w.reshape(3, 3, 1, C), (2, 2), ((1, 1), (1, 1)),
        dimension_numbers=('NHWC', 'HWIO', 'NHWC'), feature_group_count=C,
        precision=lax.Precision.HIGHEST)


def _ref_bn(y, g, b, relu):
    mean = y.mean(axis=(0, 1, 2))
    var = ((y - mean) ** 2).mean(axis=(0, 1, 2))
    out = (y - mean) / jnp.sqrt(var + EPS) * g + b
    return jnp.maximum(out, 0.0) if relu else out


def channel_shuffle_nhwc(x, groups):
    N, H, W, C = x.shape
    cpg = C // groups
    return x.reshape(N, H, W, groups, cpg).transpose(0, 1, 2, 4, 3).reshape(N, H, W, C)


def ref_forward(x_nchw, p):
    x = jnp.transpose(x_nchw, (0, 2, 3, 1)).astype(jnp.float32)
    r = _ref_bn(_ref_conv1x1(x, p['w1r']), p['g1r'], p['b1r'], True)
    r = _ref_bn(_ref_dw(r, p['w2r']), p['g2r'], p['b2r'], False)
    r = _ref_bn(_ref_conv1x1(r, p['w3r']), p['g3r'], p['b3r'], True)
    l = _ref_bn(_ref_dw(x, p['w1l']), p['g1l'], p['b1l'], False)
    l = _ref_bn(_ref_conv1x1(l, p['w2l']), p['g2l'], p['b2l'], True)
    cat = jnp.concatenate([r, l], axis=-1)
    return jnp.transpose(channel_shuffle_nhwc(cat, 2), (0, 3, 1, 2))


# ----------------------------------- main --------------------------------------

if __name__ == "__main__":
    N, C, H, W = 2, 8, 16, 16
    key = jax.random.PRNGKey(0)
    ks = jax.random.split(key, 17)

    def bn_params(k1, k2):
        return (jax.random.uniform(k1, (C,), jnp.float32, 0.5, 1.5),
                jax.random.normal(k2, (C,), jnp.float32) * 0.1)

    x = jax.random.normal(ks[0], (N, C, H, W), jnp.float32)
    params = {}
    params['w1r'] = jax.random.normal(ks[1], (C, C), jnp.float32) * 0.3      # conv1r (Cin, Cout)
    params['g1r'], params['b1r'] = bn_params(ks[2], ks[3])
    params['w2r'] = jax.random.normal(ks[4], (3, 3, C), jnp.float32) * 0.3   # conv2r depthwise
    params['g2r'], params['b2r'] = bn_params(ks[5], ks[6])
    params['w3r'] = jax.random.normal(ks[7], (C, C), jnp.float32) * 0.3      # conv3r
    params['g3r'], params['b3r'] = bn_params(ks[8], ks[9])
    params['w1l'] = jax.random.normal(ks[10], (3, 3, C), jnp.float32) * 0.3  # conv1l depthwise
    params['g1l'], params['b1l'] = bn_params(ks[11], ks[12])
    params['w2l'] = jax.random.normal(ks[13], (C, C), jnp.float32) * 0.3     # conv2l
    params['g2l'], params['b2l'] = bn_params(ks[14], ks[15])

    out = jax.jit(downsample_unit_forward)(x, params)
    out = jax.block_until_ready(out)
    assert out.shape == (N, 2 * C, H // 2, W // 2), out.shape

    ref = ref_forward(x, params)
    scale = float(jnp.max(jnp.abs(ref)))
    err = float(jnp.max(jnp.abs(out - ref)))
    # Activations are stored in bf16 between stages, so compare against the
    # pure-f32 reference with a bf16-scale tolerance relative to the output
    # magnitude (structural bugs produce errors of order `scale`).
    if err > 0.06 * (scale + 1.0):
        raise SystemExit(
            f"mismatch vs pure-f32 reference: max abs err {err:e} (ref scale {scale:.3f})")
    print("KERNEL_OK")
</pallas_src>

<mosaic_0001>
module attributes {stable_mosaic.version = 11 : i64} {
  func.func @matmul_stats_kernel(%arg0: i32, %arg1: memref<512x8xbf16, #tpu.memory_space<vmem>>, %arg2: memref<8x8xbf16, #tpu.memory_space<vmem>>, %arg3: memref<1x8xf32, #tpu.memory_space<vmem>>, %arg4: memref<1x1x8xf32, #tpu.memory_space<vmem>>, %arg5: memref<1x1x8xf32, #tpu.memory_space<vmem>>) attributes {dimension_semantics = [#tpu.dimension_semantics<parallel>], iteration_bounds = array<i64: 1>, scalar_prefetch = 0 : i64, scratch_operands = 0 : i64, tpu.core_type = #tpu.core_type<tc>, window_params = [{transform_indices = @transform_0, window_bounds = array<i64: 512, 8>}, {pipeline_mode = #tpu.pipeline_mode<synchronous>, transform_indices = @transform_1, window_bounds = array<i64: 8, 8>}, {pipeline_mode = #tpu.pipeline_mode<synchronous>, transform_indices = @transform_2, window_bounds = array<i64: 1, 8>}, {transform_indices = @transform_3, window_bounds = array<i64: 1, 1, 8>}, {transform_indices = @transform_4, window_bounds = array<i64: 1, 1, 8>}]} {
    %c0 = arith.constant 0 : index
    %c0_0 = arith.constant 0 : index
    %0 = vector.load %arg1[%c0, %c0_0] : memref<512x8xbf16, #tpu.memory_space<vmem>>, vector<512x8xbf16>
    %c0_1 = arith.constant 0 : index
    %c0_2 = arith.constant 0 : index
    %1 = vector.load %arg2[%c0_1, %c0_2] : memref<8x8xbf16, #tpu.memory_space<vmem>>, vector<8x8xbf16>
    %cst = arith.constant dense<0.000000e+00> : vector<512x8xf32>
    %2 = tpu.matmul %0, %1, %cst {dimension_numbers = #tpu.dot_dimension_numbers<[1], [0], [0], [1], [0, 0, 1, 1], [], []>} : vector<512x8xbf16>, vector<8x8xbf16>, vector<512x8xf32> -> vector<512x8xf32>
    %c0_3 = arith.constant 0 : index
    %c0_4 = arith.constant 0 : index
    %3 = vector.load %arg3[%c0_3, %c0_4] : memref<1x8xf32, #tpu.memory_space<vmem>>, vector<1x8xf32>
    %4 = vector.broadcast %3 : vector<1x8xf32> to vector<512x8xf32>
    %5 = arith.addf %2, %4 : vector<512x8xf32>
    %cst_5 = arith.constant dense<0.000000e+00> : vector<8xf32>
    %6 = vector.multi_reduction <add>, %5, %cst_5 [0] : vector<512x8xf32> to vector<8xf32>
    %7 = vector.shape_cast %6 : vector<8xf32> to vector<1x8xf32>
    %c0_6 = arith.constant 0 : index
    %c0_7 = arith.constant 0 : index
    %c0_8 = arith.constant 0 : index
    %8 = vector.load %arg4[%c0_6, %c0_7, %c0_8] : memref<1x1x8xf32, #tpu.memory_space<vmem>>, vector<1x1x8xf32>
    %9 = vector.shape_cast %8 : vector<1x1x8xf32> to vector<1x8xf32>
    %10 = vector.shape_cast %7 : vector<1x8xf32> to vector<1x1x8xf32>
    tpu.vector_store %arg4[%c0_6, %c0_7, %c0_8], %10 {strides = array<i32>} : memref<1x1x8xf32, #tpu.memory_space<vmem>>, vector<1x1x8xf32>,
    %11 = arith.mulf %5, %5 : vector<512x8xf32>
    %cst_9 = arith.constant dense<0.000000e+00> : vector<8xf32>
    %12 = vector.multi_reduction <add>, %11, %cst_9 [0] : vector<512x8xf32> to vector<8xf32>
    %13 = vector.shape_cast %12 : vector<8xf32> to vector<1x8xf32>
    %c0_10 = arith.constant 0 : index
    %c0_11 = arith.constant 0 : index
    %c0_12 = arith.constant 0 : index
    %14 = vector.load %arg5[%c0_10, %c0_11, %c0_12] : memref<1x1x8xf32, #tpu.memory_space<vmem>>, vector<1x1x8xf32>
    %15 = vector.shape_cast %14 : vector<1x1x8xf32> to vector<1x8xf32>
    %16 = vector.shape_cast %13 : vector<1x8xf32> to vector<1x1x8xf32>
    tpu.vector_store %arg5[%c0_10, %c0_11, %c0_12], %16 {strides = array<i32>} : memref<1x1x8xf32, #tpu.memory_space<vmem>>, vector<1x1x8xf32>,
    return
  }
  func.func @transform_0(%arg0: i32) -> (i32, i32) {
    %c0_i32 = arith.constant 0 : i32
    %c0_i32_0 = arith.constant 0 : i32
    return %arg0, %c0_i32 : i32, i32
  }
  func.func @transform_1(%arg0: i32) -> (i32, i32) {
    %c0_i32 = arith.constant 0 : i32
    %c0_i32_0 = arith.constant 0 : i32
    %c0_i32_1 = arith.constant 0 : i32
    return %c0_i32, %c0_i32_0 : i32, i32
  }
  func.func @transform_2(%arg0: i32) -> (i32, i32) {
    %c0_i32 = arith.constant 0 : i32
    %c0_i32_0 = arith.constant 0 : i32
    %c0_i32_1 = arith.constant 0 : i32
    return %c0_i32, %c0_i32_0 : i32, i32
  }
  func.func @transform_3(%arg0: i32) -> (i32, i32, i32) {
    %c0_i32 = arith.constant 0 : i32
    %c0_i32_0 = arith.constant 0 : i32
    %c0_i32_1 = arith.constant 0 : i32
    return %arg0, %c0_i32, %c0_i32_0 : i32, i32, i32
  }
  func.func @transform_4(%arg0: i32) -> (i32, i32, i32) {
    %c0_i32 = arith.constant 0 : i32
    %c0_i32_0 = arith.constant 0 : i32
    %c0_i32_1 = arith.constant 0 : i32
    return %arg0, %c0_i32, %c0_i32_0 : i32, i32, i32
  }
}

module attributes {stable_mosaic.version = 11 : i64} {
  func.func @matmul_affine_relu_kernel(%arg0: i32, %arg1: memref<512x8xbf16, #tpu.memory_space<vmem>>, %arg2: memref<8x8xbf16, #tpu.memory_space<vmem>>, %arg3: memref<1x8xf32, #tpu.memory_space<vmem>>, %arg4: memref<1x8xf32, #tpu.memory_space<vmem>>, %arg5: memref<512x8xbf16, #tpu.memory_space<vmem>>) attributes {dimension_semantics = [#tpu.dimension_semantics<parallel>], iteration_bounds = array<i64: 1>, scalar_prefetch = 0 : i64, scratch_operands = 0 : i64, tpu.core_type = #tpu.core_type<tc>, window_params = [{transform_indices = @transform_0, window_bounds = array<i64: 512, 8>}, {pipeline_mode = #tpu.pipeline_mode<synchronous>, transform_indices = @transform_1, window_bounds = array<i64: 8, 8>}, {pipeline_mode = #tpu.pipeline_mode<synchronous>, transform_indices = @transform_2, window_bounds = array<i64: 1, 8>}, {pipeline_mode = #tpu.pipeline_mode<synchronous>, transform_indices = @transform_3, window_bounds = array<i64: 1, 8>}, {transform_indices = @transform_4, window_bounds = array<i64: 512, 8>}]} {
    %c0 = arith.constant 0 : index
    %c0_0 = arith.constant 0 : index
    %0 = vector.load %arg1[%c0, %c0_0] : memref<512x8xbf16, #tpu.memory_space<vmem>>, vector<512x8xbf16>
    %c0_1 = arith.constant 0 : index
    %c0_2 = arith.constant 0 : index
    %1 = vector.load %arg2[%c0_1, %c0_2] : memref<8x8xbf16, #tpu.memory_space<vmem>>, vector<8x8xbf16>
    %cst = arith.constant dense<0.000000e+00> : vector<512x8xf32>
    %2 = tpu.matmul %0, %1, %cst {dimension_numbers = #tpu.dot_dimension_numbers<[1], [0], [0], [1], [0, 0, 1, 1], [], []>} : vector<512x8xbf16>, vector<8x8xbf16>, vector<512x8xf32> -> vector<512x8xf32>
    %c0_3 = arith.constant 0 : index
    %c0_4 = arith.constant 0 : index
    %3 = vector.load %arg3[%c0_3, %c0_4] : memref<1x8xf32, #tpu.memory_space<vmem>>, vector<1x8xf32>
    %4 = vector.broadcast %3 : vector<1x8xf32> to vector<512x8xf32>
    %5 = arith.mulf %2, %4 : vector<512x8xf32>
    %c0_5 = arith.constant 0 : index
    %c0_6 = arith.constant 0 : index
    %6 = vector.load %arg4[%c0_5, %c0_6] : memref<1x8xf32, #tpu.memory_space<vmem>>, vector<1x8xf32>
    %7 = vector.broadcast %6 : vector<1x8xf32> to vector<512x8xf32>
    %8 = arith.addf %5, %7 : vector<512x8xf32>
    %cst_7 = arith.constant 0.000000e+00 : f32
    %9 = vector.broadcast %cst_7 : f32 to vector<512x8xf32>
    %10 = arith.maximumf %8, %9 : vector<512x8xf32>
    %11 = arith.truncf %10 : vector<512x8xf32> to vector<512x8xbf16>
    %c0_8 = arith.constant 0 : index
    %c0_9 = arith.constant 0 : index
    %12 = vector.load %arg5[%c0_8, %c0_9] : memref<512x8xbf16, #tpu.memory_space<vmem>>, vector<512x8xbf16>
    tpu.vector_store %arg5[%c0_8, %c0_9], %11 {strides = array<i32>} : memref<512x8xbf16, #tpu.memory_space<vmem>>, vector<512x8xbf16>,
    return
  }
  func.func @transform_0(%arg0: i32) -> (i32, i32) {
    %c0_i32 = arith.constant 0 : i32
    %c0_i32_0 = arith.constant 0 : i32
    return %arg0, %c0_i32 : i32, i32
  }
  func.func @transform_1(%arg0: i32) -> (i32, i32) {
    %c0_i32 = arith.constant 0 : i32
    %c0_i32_0 = arith.constant 0 : i32
    %c0_i32_1 = arith.constant 0 : i32
    return %c0_i32, %c0_i32_0 : i32, i32
  }
  func.func @transform_2(%arg0: i32) -> (i32, i32) {
    %c0_i32 = arith.constant 0 : i32
    %c0_i32_0 = arith.constant 0 : i32
    %c0_i32_1 = arith.constant 0 : i32
    return %c0_i32, %c0_i32_0 : i32, i32
  }
  func.func @transform_3(%arg0: i32) -> (i32, i32) {
    %c0_i32 = arith.constant 0 : i32
    %c0_i32_0 = arith.constant 0 : i32
    %c0_i32_1 = arith.constant 0 : i32
    return %c0_i32, %c0_i32_0 : i32, i32
  }
  func.func @transform_4(%arg0: i32) -> (i32, i32) {
    %c0_i32 = arith.constant 0 : i32
    %c0_i32_0 = arith.constant 0 : i32
    return %arg0, %c0_i32 : i32, i32
  }
}

module attributes {stable_mosaic.version = 11 : i64} {
  func.func @dw3x3_s2_stats_kernel(%arg0: i32, %arg1: memref<1x4x9x144xbf16, #tpu.memory_space<vmem>>, %arg2: memref<9x128xf32, #tpu.memory_space<vmem>>, %arg3: memref<1x8x128xbf16, #tpu.memory_space<vmem>>, %arg4: memref<1x1x128xf32, #tpu.memory_space<vmem>>, %arg5: memref<1x1x128xf32, #tpu.memory_space<vmem>>) attributes {dimension_semantics = [#tpu.dimension_semantics<parallel>], iteration_bounds = array<i64: 2>, scalar_prefetch = 0 : i64, scratch_operands = 0 : i64, tpu.core_type = #tpu.core_type<tc>, window_params = [{transform_indices = @transform_0, window_bounds = array<i64: 1, 4, 9, 144>}, {pipeline_mode = #tpu.pipeline_mode<synchronous>, transform_indices = @transform_1, window_bounds = array<i64: 9, 128>}, {transform_indices = @transform_2, window_bounds = array<i64: 1, 8, 128>}, {transform_indices = @transform_3, window_bounds = array<i64: 1, 1, 128>}, {transform_indices = @transform_4, window_bounds = array<i64: 1, 1, 128>}]} {
    %c0 = arith.constant 0 : index
    %c0_0 = arith.constant 0 : index
    %c0_1 = arith.constant 0 : index
    %c0_2 = arith.constant 0 : index
    %0 = vector.load %arg1[%c0, %c0_0, %c0_1, %c0_2] : memref<1x4x9x144xbf16, #tpu.memory_space<vmem>>, vector<1x1x9x144xbf16>
    %1 = vector.shape_cast %0 : vector<1x1x9x144xbf16> to vector<9x144xbf16>
    %2 = arith.extf %1 : vector<9x144xbf16> to vector<9x144xf32>
    %c0_3 = arith.constant 0 : index
    %c1 = arith.constant 1 : index
    %c0_4 = arith.constant 0 : index
    %c0_5 = arith.constant 0 : index
    %3 = vector.load %arg1[%c0_3, %c1, %c0_4, %c0_5] : memref<1x4x9x144xbf16, #tpu.memory_space<vmem>>, vector<1x1x9x144xbf16>
    %4 = vector.shape_cast %3 : vector<1x1x9x144xbf16> to vector<9x144xbf16>
    %5 = arith.extf %4 : vector<9x144xbf16> to vector<9x144xf32>
    %c0_6 = arith.constant 0 : index
    %c2 = arith.constant 2 : index
    %c0_7 = arith.constant 0 : index
    %c0_8 = arith.constant 0 : index
    %6 = vector.load %arg1[%c0_6, %c2, %c0_7, %c0_8] : memref<1x4x9x144xbf16, #tpu.memory_space<vmem>>, vector<1x1x9x144xbf16>
    %7 = vector.shape_cast %6 : vector<1x1x9x144xbf16> to vector<9x144xbf16>
    %8 = arith.extf %7 : vector<9x144xbf16> to vector<9x144xf32>
    %c0_9 = arith.constant 0 : index
    %c3 = arith.constant 3 : index
    %c0_10 = arith.constant 0 : index
    %c0_11 = arith.constant 0 : index
    %9 = vector.load %arg1[%c0_9, %c3, %c0_10, %c0_11] : memref<1x4x9x144xbf16, #tpu.memory_space<vmem>>, vector<1x1x9x144xbf16>
    %10 = vector.shape_cast %9 : vector<1x1x9x144xbf16> to vector<9x144xbf16>
    %11 = arith.extf %10 : vector<9x144xbf16> to vector<9x144xf32>
    %12 = vector.extract_strided_slice %2 {offsets = [0, 0], sizes = [8, 128], strides = [1, 1]} : vector<9x144xf32> to vector<8x128xf32>
    %c0_12 = arith.constant 0 : index
    %c0_13 = arith.constant 0 : index
    %13 = vector.load %arg2[%c0_12, %c0_13] : memref<9x128xf32, #tpu.memory_space<vmem>>, vector<1x128xf32>
    %14 = vector.broadcast %13 : vector<1x128xf32> to vector<8x128xf32>
    %15 = arith.mulf %12, %14 : vector<8x128xf32>
    %16 = vector.extract_strided_slice %5 {offsets = [0, 0], sizes = [8, 128], strides = [1, 1]} : vector<9x144xf32> to vector<8x128xf32>
    %c1_14 = arith.constant 1 : index
    %c0_15 = arith.constant 0 : index
    %17 = vector.load %arg2[%c1_14, %c0_15] : memref<9x128xf32, #tpu.memory_space<vmem>>, vector<1x128xf32>
    %18 = vector.broadcast %17 : vector<1x128xf32> to vector<8x128xf32>
    %19 = arith.mulf %16, %18 : vector<8x128xf32>
    %20 = arith.addf %15, %19 : vector<8x128xf32>
    %21 = vector.extract_strided_slice %2 {offsets = [0, 16], sizes = [8, 128], strides = [1, 1]} : vector<9x144xf32> to vector<8x128xf32>
    %c2_16 = arith.constant 2 : index
    %c0_17 = arith.constant 0 : index
    %22 = vector.load %arg2[%c2_16, %c0_17] : memref<9x128xf32, #tpu.memory_space<vmem>>, vector<1x128xf32>
    %23 = vector.broadcast %22 : vector<1x128xf32> to vector<8x128xf32>
    %24 = arith.mulf %21, %23 : vector<8x128xf32>
    %25 = arith.addf %20, %24 : vector<8x128xf32>
    %26 = vector.extract_strided_slice %8 {offsets = [0, 0], sizes = [8, 128], strides = [1, 1]} : vector<9x144xf32> to vector<8x128xf32>
    %c3_18 = arith.constant 3 : index
    %c0_19 = arith.constant 0 : index
    %27 = vector.load %arg2[%c3_18, %c0_19] : memref<9x128xf32, #tpu.memory_space<vmem>>, vector<1x128xf32>
    %28 = vector.broadcast %27 : vector<1x128xf32> to vector<8x128xf32>
    %29 = arith.mulf %26, %28 : vector<8x128xf32>
    %30 = arith.addf %25, %29 : vector<8x128xf32>
    %31 = vector.extract_strided_slice %11 {offsets = [0, 0], sizes = [8, 128], strides = [1, 1]} : vector<9x144xf32> to vector<8x128xf32>
    %c4 = arith.constant 4 : index
    %c0_20 = arith.constant 0 : index
    %32 = vector.load %arg2[%c4, %c0_20] : memref<9x128xf32, #tpu.memory_space<vmem>>, vector<1x128xf32>
    %33 = vector.broadcast %32 : vector<1x128xf32> to vector<8x128xf32>
    %34 = arith.mulf %31, %33 : vector<8x128xf32>
    %35 = arith.addf %30, %34 : vector<8x128xf32>
    %36 = vector.extract_strided_slice %8 {offsets = [0, 16], sizes = [8, 128], strides = [1, 1]} : vector<9x144xf32> to vector<8x128xf32>
    %c5 = arith.constant 5 : index
    %c0_21 = arith.constant 0 : index
    %37 = vector.load %arg2[%c5, %c0_21] : memref<9x128xf32, #tpu.memory_space<vmem>>, vector<1x128xf32>
    %38 = vector.broadcast %37 : vector<1x128xf32> to vector<8x128xf32>
    %39 = arith.mulf %36, %38 : vector<8x128xf32>
    %40 = arith.addf %35, %39 : vector<8x128xf32>
    %41 = vector.extract_strided_slice %2 {offsets = [1, 0], sizes = [8, 128], strides = [1, 1]} : vector<9x144xf32> to vector<8x128xf32>
    %c6 = arith.constant 6 : index
    %c0_22 = arith.constant 0 : index
    %42 = vector.load %arg2[%c6, %c0_22] : memref<9x128xf32, #tpu.memory_space<vmem>>, vector<1x128xf32>
    %43 = vector.broadcast %42 : vector<1x128xf32> to vector<8x128xf32>
    %44 = arith.mulf %41, %43 : vector<8x128xf32>
    %45 = arith.addf %40, %44 : vector<8x128xf32>
    %46 = vector.extract_strided_slice %5 {offsets = [1, 0], sizes = [8, 128], strides = [1, 1]} : vector<9x144xf32> to vector<8x128xf32>
    %c7 = arith.constant 7 : index
    %c0_23 = arith.constant 0 : index
    %47 = vector.load %arg2[%c7, %c0_23] : memref<9x128xf32, #tpu.memory_space<vmem>>, vector<1x128xf32>
    %48 = vector.broadcast %47 : vector<1x128xf32> to vector<8x128xf32>
    %49 = arith.mulf %46, %48 : vector<8x128xf32>
    %50 = arith.addf %45, %49 : vector<8x128xf32>
    %51 = vector.extract_strided_slice %2 {offsets = [1, 16], sizes = [8, 128], strides = [1, 1]} : vector<9x144xf32> to vector<8x128xf32>
    %c8 = arith.constant 8 : index
    %c0_24 = arith.constant 0 : index
    %52 = vector.load %arg2[%c8, %c0_24] : memref<9x128xf32, #tpu.memory_space<vmem>>, vector<1x128xf32>
    %53 = vector.broadcast %52 : vector<1x128xf32> to vector<8x128xf32>
    %54 = arith.mulf %51, %53 : vector<8x128xf32>
    %55 = arith.addf %50, %54 : vector<8x128xf32>
    %56 = arith.truncf %55 : vector<8x128xf32> to vector<8x128xbf16>
    %c0_25 = arith.constant 0 : index
    %c0_26 = arith.constant 0 : index
    %c0_27 = arith.constant 0 : index
    %57 = vector.load %arg3[%c0_25, %c0_26, %c0_27] : memref<1x8x128xbf16, #tpu.memory_space<vmem>>, vector<1x8x128xbf16>
    %58 = vector.shape_cast %57 : vector<1x8x128xbf16> to vector<8x128xbf16>
    %59 = vector.shape_cast %56 : vector<8x128xbf16> to vector<1x8x128xbf16>
    tpu.vector_store %arg3[%c0_25, %c0_26, %c0_27], %59 {strides = array<i32>} : memref<1x8x128xbf16, #tpu.memory_space<vmem>>, vector<1x8x128xbf16>,
    %cst = arith.constant dense<0.000000e+00> : vector<128xf32>
    %60 = vector.multi_reduction <add>, %55, %cst [0] : vector<8x128xf32> to vector<128xf32>
    %61 = vector.shape_cast %60 : vector<128xf32> to vector<1x128xf32>
    %c0_28 = arith.constant 0 : index
    %c0_29 = arith.constant 0 : index
    %c0_30 = arith.constant 0 : index
    %62 = vector.load %arg4[%c0_28, %c0_29, %c0_30] : memref<1x1x128xf32, #tpu.memory_space<vmem>>, vector<1x1x128xf32>
    %63 = vector.shape_cast %62 : vector<1x1x128xf32> to vector<1x128xf32>
    %64 = vector.shape_cast %61 : vector<1x128xf32> to vector<1x1x128xf32>
    tpu.vector_store %arg4[%c0_28, %c0_29, %c0_30], %64 {strides = array<i32>} : memref<1x1x128xf32, #tpu.memory_space<vmem>>, vector<1x1x128xf32>,
    %65 = arith.mulf %55, %55 : vector<8x128xf32>
    %cst_31 = arith.constant dense<0.000000e+00> : vector<128xf32>
    %66 = vector.multi_reduction <add>, %65, %cst_31 [0] : vector<8x128xf32> to vector<128xf32>
    %67 = vector.shape_cast %66 : vector<128xf32> to vector<1x128xf32>
    %c0_32 = arith.constant 0 : index
    %c0_33 = arith.constant 0 : index
    %c0_34 = arith.constant 0 : index
    %68 = vector.load %arg5[%c0_32, %c0_33, %c0_34] : memref<1x1x128xf32, #tpu.memory_space<vmem>>, vector<1x1x128xf32>
    %69 = vector.shape_cast %68 : vector<1x1x128xf32> to vector<1x128xf32>
    %70 = vector.shape_cast %67 : vector<1x128xf32> to vector<1x1x128xf32>
    tpu.vector_store %arg5[%c0_32, %c0_33, %c0_34], %70 {strides = array<i32>} : memref<1x1x128xf32, #tpu.memory_space<vmem>>, vector<1x1x128xf32>,
    return
  }
  func.func @transform_0(%arg0: i32) -> (i32, i32, i32, i32) {
    %c0_i32 = arith.constant 0 : i32
    %c0_i32_0 = arith.constant 0 : i32
    %c0_i32_1 = arith.constant 0 : i32
    %c0_i32_2 = arith.constant 0 : i32
    return %arg0, %c0_i32, %c0_i32_0, %c0_i32_1 : i32, i32, i32, i32
  }
  func.func @transform_1(%arg0: i32) -> (i32, i32) {
    %c0_i32 = arith.constant 0 : i32
    %c0_i32_0 = arith.constant 0 : i32
    %c0_i32_1 = arith.constant 0 : i32
    return %c0_i32, %c0_i32_0 : i32, i32
  }
  func.func @transform_2(%arg0: i32) -> (i32, i32, i32) {
    %c0_i32 = arith.constant 0 : i32
    %c0_i32_0 = arith.constant 0 : i32
    %c0_i32_1 = arith.constant 0 : i32
    return %arg0, %c0_i32, %c0_i32_0 : i32, i32, i32
  }
  func.func @transform_3(%arg0: i32) -> (i32, i32, i32) {
    %c0_i32 = arith.constant 0 : i32
    %c0_i32_0 = arith.constant 0 : i32
    %c0_i32_1 = arith.constant 0 : i32
    return %arg0, %c0_i32, %c0_i32_0 : i32, i32, i32
  }
  func.func @transform_4(%arg0: i32) -> (i32, i32, i32) {
    %c0_i32 = arith.constant 0 : i32
    %c0_i32_0 = arith.constant 0 : i32
    %c0_i32_1 = arith.constant 0 : i32
    return %arg0, %c0_i32, %c0_i32_0 : i32, i32, i32
  }
}

module attributes {stable_mosaic.version = 11 : i64} {
  func.func @matmul_stats_kernel(%arg0: i32, %arg1: memref<128x16xbf16, #tpu.memory_space<vmem>>, %arg2: memref<16x16xbf16, #tpu.memory_space<vmem>>, %arg3: memref<1x16xf32, #tpu.memory_space<vmem>>, %arg4: memref<1x1x16xf32, #tpu.memory_space<vmem>>, %arg5: memref<1x1x16xf32, #tpu.memory_space<vmem>>) attributes {dimension_semantics = [#tpu.dimension_semantics<parallel>], iteration_bounds = array<i64: 1>, scalar_prefetch = 0 : i64, scratch_operands = 0 : i64, tpu.core_type = #tpu.core_type<tc>, window_params = [{transform_indices = @transform_0, window_bounds = array<i64: 128, 16>}, {pipeline_mode = #tpu.pipeline_mode<synchronous>, transform_indices = @transform_1, window_bounds = array<i64: 16, 16>}, {pipeline_mode = #tpu.pipeline_mode<synchronous>, transform_indices = @transform_2, window_bounds = array<i64: 1, 16>}, {transform_indices = @transform_3, window_bounds = array<i64: 1, 1, 16>}, {transform_indices = @transform_4, window_bounds = array<i64: 1, 1, 16>}]} {
    %c0 = arith.constant 0 : index
    %c0_0 = arith.constant 0 : index
    %0 = vector.load %arg1[%c0, %c0_0] : memref<128x16xbf16, #tpu.memory_space<vmem>>, vector<128x16xbf16>
    %c0_1 = arith.constant 0 : index
    %c0_2 = arith.constant 0 : index
    %1 = vector.load %arg2[%c0_1, %c0_2] : memref<16x16xbf16, #tpu.memory_space<vmem>>, vector<16x16xbf16>
    %cst = arith.constant dense<0.000000e+00> : vector<128x16xf32>
    %2 = tpu.matmul %0, %1, %cst {dimension_numbers = #tpu.dot_dimension_numbers<[1], [0], [0], [1], [0, 0, 1, 1], [], []>} : vector<128x16xbf16>, vector<16x16xbf16>, vector<128x16xf32> -> vector<128x16xf32>
    %c0_3 = arith.constant 0 : index
    %c0_4 = arith.constant 0 : index
    %3 = vector.load %arg3[%c0_3, %c0_4] : memref<1x16xf32, #tpu.memory_space<vmem>>, vector<1x16xf32>
    %4 = vector.broadcast %3 : vector<1x16xf32> to vector<128x16xf32>
    %5 = arith.addf %2, %4 : vector<128x16xf32>
    %cst_5 = arith.constant dense<0.000000e+00> : vector<16xf32>
    %6 = vector.multi_reduction <add>, %5, %cst_5 [0] : vector<128x16xf32> to vector<16xf32>
    %7 = vector.shape_cast %6 : vector<16xf32> to vector<1x16xf32>
    %c0_6 = arith.constant 0 : index
    %c0_7 = arith.constant 0 : index
    %c0_8 = arith.constant 0 : index
    %8 = vector.load %arg4[%c0_6, %c0_7, %c0_8] : memref<1x1x16xf32, #tpu.memory_space<vmem>>, vector<1x1x16xf32>
    %9 = vector.shape_cast %8 : vector<1x1x16xf32> to vector<1x16xf32>
    %10 = vector.shape_cast %7 : vector<1x16xf32> to vector<1x1x16xf32>
    tpu.vector_store %arg4[%c0_6, %c0_7, %c0_8], %10 {strides = array<i32>} : memref<1x1x16xf32, #tpu.memory_space<vmem>>, vector<1x1x16xf32>,
    %11 = arith.mulf %5, %5 : vector<128x16xf32>
    %cst_9 = arith.constant dense<0.000000e+00> : vector<16xf32>
    %12 = vector.multi_reduction <add>, %11, %cst_9 [0] : vector<128x16xf32> to vector<16xf32>
    %13 = vector.shape_cast %12 : vector<16xf32> to vector<1x16xf32>
    %c0_10 = arith.constant 0 : index
    %c0_11 = arith.constant 0 : index
    %c0_12 = arith.constant 0 : index
    %14 = vector.load %arg5[%c0_10, %c0_11, %c0_12] : memref<1x1x16xf32, #tpu.memory_space<vmem>>, vector<1x1x16xf32>
    %15 = vector.shape_cast %14 : vector<1x1x16xf32> to vector<1x16xf32>
    %16 = vector.shape_cast %13 : vector<1x16xf32> to vector<1x1x16xf32>
    tpu.vector_store %arg5[%c0_10, %c0_11, %c0_12], %16 {strides = array<i32>} : memref<1x1x16xf32, #tpu.memory_space<vmem>>, vector<1x1x16xf32>,
    return
  }
  func.func @transform_0(%arg0: i32) -> (i32, i32) {
    %c0_i32 = arith.constant 0 : i32
    %c0_i32_0 = arith.constant 0 : i32
    return %arg0, %c0_i32 : i32, i32
  }
  func.func @transform_1(%arg0: i32) -> (i32, i32) {
    %c0_i32 = arith.constant 0 : i32
    %c0_i32_0 = arith.constant 0 : i32
    %c0_i32_1 = arith.constant 0 : i32
    return %c0_i32, %c0_i32_0 : i32, i32
  }
  func.func @transform_2(%arg0: i32) -> (i32, i32) {
    %c0_i32 = arith.constant 0 : i32
    %c0_i32_0 = arith.constant 0 : i32
    %c0_i32_1 = arith.constant 0 : i32
    return %c0_i32, %c0_i32_0 : i32, i32
  }
  func.func @transform_3(%arg0: i32) -> (i32, i32, i32) {
    %c0_i32 = arith.constant 0 : i32
    %c0_i32_0 = arith.constant 0 : i32
    %c0_i32_1 = arith.constant 0 : i32
    return %arg0, %c0_i32, %c0_i32_0 : i32, i32, i32
  }
  func.func @transform_4(%arg0: i32) -> (i32, i32, i32) {
    %c0_i32 = arith.constant 0 : i32
    %c0_i32_0 = arith.constant 0 : i32
    %c0_i32_1 = arith.constant 0 : i32
    return %arg0, %c0_i32, %c0_i32_0 : i32, i32, i32
  }
}

module attributes {stable_mosaic.version = 11 : i64} {
  func.func @matmul_affine_relu_kernel(%arg0: i32, %arg1: memref<128x16xbf16, #tpu.memory_space<vmem>>, %arg2: memref<16x16xbf16, #tpu.memory_space<vmem>>, %arg3: memref<1x16xf32, #tpu.memory_space<vmem>>, %arg4: memref<1x16xf32, #tpu.memory_space<vmem>>, %arg5: memref<128x16xf32, #tpu.memory_space<vmem>>) attributes {dimension_semantics = [#tpu.dimension_semantics<parallel>], iteration_bounds = array<i64: 1>, scalar_prefetch = 0 : i64, scratch_operands = 0 : i64, tpu.core_type = #tpu.core_type<tc>, window_params = [{transform_indices = @transform_0, window_bounds = array<i64: 128, 16>}, {pipeline_mode = #tpu.pipeline_mode<synchronous>, transform_indices = @transform_1, window_bounds = array<i64: 16, 16>}, {pipeline_mode = #tpu.pipeline_mode<synchronous>, transform_indices = @transform_2, window_bounds = array<i64: 1, 16>}, {pipeline_mode = #tpu.pipeline_mode<synchronous>, transform_indices = @transform_3, window_bounds = array<i64: 1, 16>}, {transform_indices = @transform_4, window_bounds = array<i64: 128, 16>}]} {
    %c0 = arith.constant 0 : index
    %c0_0 = arith.constant 0 : index
    %0 = vector.load %arg1[%c0, %c0_0] : memref<128x16xbf16, #tpu.memory_space<vmem>>, vector<128x16xbf16>
    %c0_1 = arith.constant 0 : index
    %c0_2 = arith.constant 0 : index
    %1 = vector.load %arg2[%c0_1, %c0_2] : memref<16x16xbf16, #tpu.memory_space<vmem>>, vector<16x16xbf16>
    %cst = arith.constant dense<0.000000e+00> : vector<128x16xf32>
    %2 = tpu.matmul %0, %1, %cst {dimension_numbers = #tpu.dot_dimension_numbers<[1], [0], [0], [1], [0, 0, 1, 1], [], []>} : vector<128x16xbf16>, vector<16x16xbf16>, vector<128x16xf32> -> vector<128x16xf32>
    %c0_3 = arith.constant 0 : index
    %c0_4 = arith.constant 0 : index
    %3 = vector.load %arg3[%c0_3, %c0_4] : memref<1x16xf32, #tpu.memory_space<vmem>>, vector<1x16xf32>
    %4 = vector.broadcast %3 : vector<1x16xf32> to vector<128x16xf32>
    %5 = arith.mulf %2, %4 : vector<128x16xf32>
    %c0_5 = arith.constant 0 : index
    %c0_6 = arith.constant 0 : index
    %6 = vector.load %arg4[%c0_5, %c0_6] : memref<1x16xf32, #tpu.memory_space<vmem>>, vector<1x16xf32>
    %7 = vector.broadcast %6 : vector<1x16xf32> to vector<128x16xf32>
    %8 = arith.addf %5, %7 : vector<128x16xf32>
    %cst_7 = arith.constant 0.000000e+00 : f32
    %9 = vector.broadcast %cst_7 : f32 to vector<128x16xf32>
    %10 = arith.maximumf %8, %9 : vector<128x16xf32>
    %c0_8 = arith.constant 0 : index
    %c0_9 = arith.constant 0 : index
    %11 = vector.load %arg5[%c0_8, %c0_9] : memref<128x16xf32, #tpu.memory_space<vmem>>, vector<128x16xf32>
    tpu.vector_store %arg5[%c0_8, %c0_9], %10 {strides = array<i32>} : memref<128x16xf32, #tpu.memory_space<vmem>>, vector<128x16xf32>,
    return
  }
  func.func @transform_0(%arg0: i32) -> (i32, i32) {
    %c0_i32 = arith.constant 0 : i32
    %c0_i32_0 = arith.constant 0 : i32
    return %arg0, %c0_i32 : i32, i32
  }
  func.func @transform_1(%arg0: i32) -> (i32, i32) {
    %c0_i32 = arith.constant 0 : i32
    %c0_i32_0 = arith.constant 0 : i32
    %c0_i32_1 = arith.constant 0 : i32
    return %c0_i32, %c0_i32_0 : i32, i32
  }
  func.func @transform_2(%arg0: i32) -> (i32, i32) {
    %c0_i32 = arith.constant 0 : i32
    %c0_i32_0 = arith.constant 0 : i32
    %c0_i32_1 = arith.constant 0 : i32
    return %c0_i32, %c0_i32_0 : i32, i32
  }
  func.func @transform_3(%arg0: i32) -> (i32, i32) {
    %c0_i32 = arith.constant 0 : i32
    %c0_i32_0 = arith.constant 0 : i32
    %c0_i32_1 = arith.constant 0 : i32
    return %c0_i32, %c0_i32_0 : i32, i32
  }
  func.func @transform_4(%arg0: i32) -> (i32, i32) {
    %c0_i32 = arith.constant 0 : i32
    %c0_i32_0 = arith.constant 0 : i32
    return %arg0, %c0_i32 : i32, i32
  }
}

</mosaic_0001>

<llo_original>
// kernel: downsample_unit_forward.5
$region0: #{downsample_unit_forward.5}
  #allocation0 [shape = 'u32[]', space=smem, size = 0x4, offset = 0x4, fixed_abs, tag = 'smem constant byte address 0x4 - core index']
  #allocation1 [shape = 'u32[72,128]{1,0:T(1,128)}', space=vmem, size = 0x9000, scoped, tag = 'internal scratch']
  %s0 = inlined_call_operand.vmem [shape: bf16[512,8], index: 0, kind: input, shape index: {}]
  %s1 = inlined_call_operand.vmem [shape: bf16[8,8], index: 1, kind: input, shape index: {}]
  %s2 = inlined_call_operand.vmem [shape: f32[1,8], index: 2, kind: input, shape index: {}]
  %s3 = inlined_call_operand.vmem [shape: f32[1,1,8], index: 3, kind: output, shape index: {0}]
  %s4 = inlined_call_operand.vmem [shape: f32[1,1,8], index: 4, kind: output, shape index: {1}]
  %5 = xla_tuple %s3, %s4
  %s6 = sld [smem:[#allocation0]]
  $region30: #{downsample_unit_forward.5} parent=0
    _
  %s8 = ssub.s32 1, %s6
  %s9 = scalar_select 0, %s8, %s6
  // Predicated region
  $region2: #{downsample_unit_forward.5} parent=0 // pred_check
    _
  $region3: #{downsample_unit_forward.5} parent=0 // pred_check_branch
    %11 = sbr.rel (0) target = $region5
  $region4: #{downsample_unit_forward.5} parent=0 // pred_region
    _
  $region5: #{downsample_unit_forward.5} parent=0 // pred_fallthru
    _
  // Predicated region
  $region6: #{downsample_unit_forward.5} parent=0 // pred_check
    _
  $region7: #{downsample_unit_forward.5} parent=0 // pred_check_branch
    %13 = sbr.rel (0) target = $region9
  $region8: #{downsample_unit_forward.5} parent=0 // pred_region
    _
  $region9: #{downsample_unit_forward.5} parent=0 // pred_fallthru
    _
  // Predicated region
  $region10: #{downsample_unit_forward.5} parent=0 // pred_check
    _
  $region11: #{downsample_unit_forward.5} parent=0 // pred_check_branch
    %15 = sbr.rel (0) target = $region13
  $region12: #{downsample_unit_forward.5} parent=0 // pred_region
    _
  $region13: #{downsample_unit_forward.5} parent=0 // pred_fallthru
    _
  %v17 = vld [vmem:[%s0] sm:$0xf]
  %v18 = vld [vmem:[%s0 + $0x4] sm:$0xf]
  %v19 = vld [vmem:[%s0 + $0x8] sm:$0xf]
  %v20 = vld [vmem:[%s0 + $0xc] sm:$0xf]
  %v21 = vld [vmem:[%s0 + $0x10] sm:$0xf]
  %v22 = vld [vmem:[%s0 + $0x14] sm:$0xf]
  %v23 = vld [vmem:[%s0 + $0x18] sm:$0xf]
  %v24 = vld [vmem:[%s0 + $0x1c] sm:$0xf]
  %v25 = vld [vmem:[%s0 + $0x20] sm:$0xf]
  %v26 = vld [vmem:[%s0 + $0x24] sm:$0xf]
  %v27 = vld [vmem:[%s0 + $0x28] sm:$0xf]
  %v28 = vld [vmem:[%s0 + $0x2c] sm:$0xf]
  %v29 = vld [vmem:[%s0 + $0x30] sm:$0xf]
  %v30 = vld [vmem:[%s0 + $0x34] sm:$0xf]
  %v31 = vld [vmem:[%s0 + $0x38] sm:$0xf]
  %v32 = vld [vmem:[%s0 + $0x3c] sm:$0xf]
  %v33 = vld [vmem:[%s0 + $0x40] sm:$0xf]
  %v34 = vld [vmem:[%s0 + $0x44] sm:$0xf]
  %v35 = vld [vmem:[%s0 + $0x48] sm:$0xf]
  %v36 = vld [vmem:[%s0 + $0x4c] sm:$0xf]
  %v37 = vld [vmem:[%s0 + $0x50] sm:$0xf]
  %v38 = vld [vmem:[%s0 + $0x54] sm:$0xf]
  %v39 = vld [vmem:[%s0 + $0x58] sm:$0xf]
  %v40 = vld [vmem:[%s0 + $0x5c] sm:$0xf]
  %v41 = vld [vmem:[%s0 + $0x60] sm:$0xf]
  %v42 = vld [vmem:[%s0 + $0x64] sm:$0xf]
  %v43 = vld [vmem:[%s0 + $0x68] sm:$0xf]
  %v44 = vld [vmem:[%s0 + $0x6c] sm:$0xf]
  %v45 = vld [vmem:[%s0 + $0x70] sm:$0xf]
  %v46 = vld [vmem:[%s0 + $0x74] sm:$0xf]
  %v47 = vld [vmem:[%s0 + $0x78] sm:$0xf]
  %v48 = vld [vmem:[%s0 + $0x7c] sm:$0xf]
  %v49 = vld [vmem:[%s0 + $0x80] sm:$0xf]
  %v50 = vld [vmem:[%s0 + $0x84] sm:$0xf]
  %v51 = vld [vmem:[%s0 + $0x88] sm:$0xf]
  %v52 = vld [vmem:[%s0 + $0x8c] sm:$0xf]
  %v53 = vld [vmem:[%s0 + $0x90] sm:$0xf]
  %v54 = vld [vmem:[%s0 + $0x94] sm:$0xf]
  %v55 = vld [vmem:[%s0 + $0x98] sm:$0xf]
  %v56 = vld [vmem:[%s0 + $0x9c] sm:$0xf]
  %v57 = vld [vmem:[%s0 + $0xa0] sm:$0xf]
  %v58 = vld [vmem:[%s0 + $0xa4] sm:$0xf]
  %v59 = vld [vmem:[%s0 + $0xa8] sm:$0xf]
  %v60 = vld [vmem:[%s0 + $0xac] sm:$0xf]
  %v61 = vld [vmem:[%s0 + $0xb0] sm:$0xf]
  %v62 = vld [vmem:[%s0 + $0xb4] sm:$0xf]
  %v63 = vld [vmem:[%s0 + $0xb8] sm:$0xf]
  %v64 = vld [vmem:[%s0 + $0xbc] sm:$0xf]
  %v65 = vld [vmem:[%s0 + $0xc0] sm:$0xf]
  %v66 = vld [vmem:[%s0 + $0xc4] sm:$0xf]
  %v67 = vld [vmem:[%s0 + $0xc8] sm:$0xf]
  %v68 = vld [vmem:[%s0 + $0xcc] sm:$0xf]
  %v69 = vld [vmem:[%s0 + $0xd0] sm:$0xf]
  %v70 = vld [vmem:[%s0 + $0xd4] sm:$0xf]
  %v71 = vld [vmem:[%s0 + $0xd8] sm:$0xf]
  %v72 = vld [vmem:[%s0 + $0xdc] sm:$0xf]
  %v73 = vld [vmem:[%s0 + $0xe0] sm:$0xf]
  %v74 = vld [vmem:[%s0 + $0xe4] sm:$0xf]
  %v75 = vld [vmem:[%s0 + $0xe8] sm:$0xf]
  %v76 = vld [vmem:[%s0 + $0xec] sm:$0xf]
  %v77 = vld [vmem:[%s0 + $0xf0] sm:$0xf]
  %v78 = vld [vmem:[%s0 + $0xf4] sm:$0xf]
  %v79 = vld [vmem:[%s0 + $0xf8] sm:$0xf]
  %v80 = vld [vmem:[%s0 + $0xfc] sm:$0xf]
  %v81 = vld [vmem:[%s1] sm:$0xf]
  %v82 = vld [vmem:[%s2] sm:$0x1]
  %v84 = vperm.slane %v82, 0
  %v150 = vunpack.c.l.b16 %v17
  %v151 = vunpack.c.l.b16 %v18
  %v152 = vunpack.c.l.b16 %v19
  %v153 = vunpack.c.l.b16 %v20
  %v154 = vunpack.c.l.b16 %v21
  %v155 = vunpack.c.l.b16 %v22
  %v156 = vunpack.c.l.b16 %v23
  %v157 = vunpack.c.l.b16 %v24
  %v158 = vunpack.c.l.b16 %v25
  %v159 = vunpack.c.l.b16 %v26
  %v160 = vunpack.c.l.b16 %v27
  %v161 = vunpack.c.l.b16 %v28
  %v162 = vunpack.c.l.b16 %v29
  %v163 = vunpack.c.l.b16 %v30
  %v164 = vunpack.c.l.b16 %v31
  %v165 = vunpack.c.l.b16 %v32
  %v166 = vunpack.c.l.b16 %v33
  %v167 = vunpack.c.l.b16 %v34
  %v168 = vunpack.c.l.b16 %v35
  %v169 = vunpack.c.l.b16 %v36
  %v170 = vunpack.c.l.b16 %v37
  %v171 = vunpack.c.l.b16 %v38
  %v172 = vunpack.c.l.b16 %v39
  %v173 = vunpack.c.l.b16 %v40
  %v174 = vunpack.c.l.b16 %v41
  %v175 = vunpack.c.l.b16 %v42
  %v176 = vunpack.c.l.b16 %v43
  %v177 = vunpack.c.l.b16 %v44
  %v178 = vunpack.c.l.b16 %v45
  %v179 = vunpack.c.l.b16 %v46
  %v180 = vunpack.c.l.b16 %v47
  %v181 = vunpack.c.l.b16 %v48
  %v182 = vunpack.c.l.b16 %v49
  %v183 = vunpack.c.l.b16 %v50
  %v184 = vunpack.c.l.b16 %v51
  %v185 = vunpack.c.l.b16 %v52
  %v186 = vunpack.c.l.b16 %v53
  %v187 = vunpack.c.l.b16 %v54
  %v188 = vunpack.c.l.b16 %v55
  %v189 = vunpack.c.l.b16 %v56
  %v190 = vunpack.c.l.b16 %v57
  %v191 = vunpack.c.l.b16 %v58
  %v192 = vunpack.c.l.b16 %v59
  %v193 = vunpack.c.l.b16 %v60
  %v194 = vunpack.c.l.b16 %v61
  %v195 = vunpack.c.l.b16 %v62
  %v196 = vunpack.c.l.b16 %v63
  %v197 = vunpack.c.l.b16 %v64
  %v198 = vunpack.c.l.b16 %v65
  %v199 = vunpack.c.l.b16 %v66
  %v200 = vunpack.c.l.b16 %v67
  %v201 = vunpack.c.l.b16 %v68
  %v202 = vunpack.c.l.b16 %v69
  %v203 = vunpack.c.l.b16 %v70
  %v204 = vunpack.c.l.b16 %v71
  %v205 = vunpack.c.l.b16 %v72
  %v206 = vunpack.c.l.b16 %v73
  %v207 = vunpack.c.l.b16 %v74
  %v208 = vunpack.c.l.b16 %v75
  %v209 = vunpack.c.l.b16 %v76
  %v210 = vunpack.c.l.b16 %v77
  %v211 = vunpack.c.l.b16 %v78
  %v212 = vunpack.c.l.b16 %v79
  %v213 = vunpack.c.l.b16 %v80
  %v214 = vpack.c.b16 %v151, %v150
  %v215 = vpack.c.b16 %v153, %v152
  %v216 = vpack.c.b16 %v155, %v154
  %v217 = vpack.c.b16 %v157, %v156
  %v218 = vpack.c.b16 %v159, %v158
  %v219 = vpack.c.b16 %v161, %v160
  %v220 = vpack.c.b16 %v163, %v162
  %v221 = vpack.c.b16 %v165, %v164
  %v222 = vpack.c.b16 %v167, %v166
  %v223 = vpack.c.b16 %v169, %v168
  %v224 = vpack.c.b16 %v171, %v170
  %v225 = vpack.c.b16 %v173, %v172
  %v226 = vpack.c.b16 %v175, %v174
  %v227 = vpack.c.b16 %v177, %v176
  %v228 = vpack.c.b16 %v179, %v178
  %v229 = vpack.c.b16 %v181, %v180
  %v230 = vpack.c.b16 %v183, %v182
  %v231 = vpack.c.b16 %v185, %v184
  %v232 = vpack.c.b16 %v187, %v186
  %v233 = vpack.c.b16 %v189, %v188
  %v234 = vpack.c.b16 %v191, %v190
  %v235 = vpack.c.b16 %v193, %v192
  %v236 = vpack.c.b16 %v195, %v194
  %v237 = vpack.c.b16 %v197, %v196
  %v238 = vpack.c.b16 %v199, %v198
  %v239 = vpack.c.b16 %v201, %v200
  %v240 = vpack.c.b16 %v203, %v202
  %v241 = vpack.c.b16 %v205, %v204
  %v242 = vpack.c.b16 %v207, %v206
  %v243 = vpack.c.b16 %v209, %v208
  %v244 = vpack.c.b16 %v211, %v210
  %v245 = vpack.c.b16 %v213, %v212
  %vm246 = vcmask 64512
  %v248 = vsel %vm246, %v214, 0
  %v251 = vsel %vm246, %v215, 0
  %v254 = vsel %vm246, %v216, 0
  %v257 = vsel %vm246, %v217, 0
  %v260 = vsel %vm246, %v218, 0
  %v263 = vsel %vm246, %v219, 0
  %v266 = vsel %vm246, %v220, 0
  %v269 = vsel %vm246, %v221, 0
  %v272 = vsel %vm246, %v222, 0
  %v275 = vsel %vm246, %v223, 0
  %v278 = vsel %vm246, %v224, 0
  %v281 = vsel %vm246, %v225, 0
  %v284 = vsel %vm246, %v226, 0
  %v287 = vsel %vm246, %v227, 0
  %v290 = vsel %vm246, %v228, 0
  %v293 = vsel %vm246, %v229, 0
  %v296 = vsel %vm246, %v230, 0
  %v299 = vsel %vm246, %v231, 0
  %v302 = vsel %vm246, %v232, 0
  %v305 = vsel %vm246, %v233, 0
  %v308 = vsel %vm246, %v234, 0
  %v311 = vsel %vm246, %v235, 0
  %v314 = vsel %vm246, %v236, 0
  %v317 = vsel %vm246, %v237, 0
  %v320 = vsel %vm246, %v238, 0
  %v323 = vsel %vm246, %v239, 0
  %v326 = vsel %vm246, %v240, 0
  %v329 = vsel %vm246, %v241, 0
  %v332 = vsel %vm246, %v242, 0
  %v335 = vsel %vm246, %v243, 0
  %v338 = vsel %vm246, %v244, 0
  %v341 = vsel %vm246, %v245, 0
  %vm343 = vcmask 1043456
  %v345 = vsel %vm343, %v81, 0
  %347 = vmatpush.bf16.msra.mxu0 0
  %348 = vmatpush.bf16.msra.mxu0 0
  %349 = vmatpush.bf16.msra.mxu0 0
  %350 = vmatpush.bf16.msra.mxu0 0
  %351 = vmatpush.bf16.msra.mxu0 0
  %352 = vmatpush.bf16.msra.mxu0 0
  %353 = vmatpush.bf16.msra.mxu0 0
  %354 = vmatpush.bf16.msra.mxu0 %v345
  %355 = vmatmul.bf16.gmra.mxu0 %v248
  %v356 = vpop.f32.mrf.mxu0
  %v357 = vadd.f32 %v84, %v356
  %v358 = vpop.f32.mrf.mxu0
  %v359 = vadd.f32 %v84, %v358
  %360 = vmatmul.bf16.gmra.mxu0 %v251
  %v361 = vpop.f32.mrf.mxu0
  %v362 = vadd.f32 %v84, %v361
  %v363 = vpop.f32.mrf.mxu0
  %v364 = vadd.f32 %v84, %v363
  %365 = vmatmul.bf16.gmra.mxu0 %v254
  %v366 = vpop.f32.mrf.mxu0
  %v367 = vadd.f32 %v84, %v366
  %v368 = vpop.f32.mrf.mxu0
  %v369 = vadd.f32 %v84, %v368
  %370 = vmatmul.bf16.gmra.mxu0 %v257
  %v371 = vpop.f32.mrf.mxu0
  %v372 = vadd.f32 %v84, %v371
  %v373 = vpop.f32.mrf.mxu0
  %v374 = vadd.f32 %v84, %v373
  %375 = vmatmul.bf16.gmra.mxu0 %v260
  %v376 = vpop.f32.mrf.mxu0
  %v377 = vadd.f32 %v84, %v376
  %v378 = vpop.f32.mrf.mxu0
  %v379 = vadd.f32 %v84, %v378
  %380 = vmatmul.bf16.gmra.mxu0 %v263
  %v381 = vpop.f32.mrf.mxu0
  %v382 = vadd.f32 %v84, %v381
  %v383 = vpop.f32.mrf.mxu0
  %v384 = vadd.f32 %v84, %v383
  %385 = vmatmul.bf16.gmra.mxu0 %v266
  %v386 = vpop.f32.mrf.mxu0
  %v387 = vadd.f32 %v84, %v386
  %v388 = vpop.f32.mrf.mxu0
  %v389 = vadd.f32 %v84, %v388
  %390 = vmatmul.bf16.gmra.mxu0 %v269
  %v391 = vpop.f32.mrf.mxu0
  %v392 = vadd.f32 %v84, %v391
  %v393 = vpop.f32.mrf.mxu0
  %v394 = vadd.f32 %v84, %v393
  %395 = vmatmul.bf16.gmra.mxu0 %v272
  %v396 = vpop.f32.mrf.mxu0
  %v397 = vadd.f32 %v84, %v396
  %v398 = vpop.f32.mrf.mxu0
  %v399 = vadd.f32 %v84, %v398
  %400 = vmatmul.bf16.gmra.mxu0 %v275
  %v401 = vpop.f32.mrf.mxu0
  %v402 = vadd.f32 %v84, %v401
  %v403 = vpop.f32.mrf.mxu0
  %v404 = vadd.f32 %v84, %v403
  %405 = vmatmul.bf16.gmra.mxu0 %v278
  %v406 = vpop.f32.mrf.mxu0
  %v407 = vadd.f32 %v84, %v406
  %v408 = vpop.f32.mrf.mxu0
  %v409 = vadd.f32 %v84, %v408
  %410 = vmatmul.bf16.gmra.mxu0 %v281
  %v411 = vpop.f32.mrf.mxu0
  %v412 = vadd.f32 %v84, %v411
  %v413 = vpop.f32.mrf.mxu0
  %v414 = vadd.f32 %v84, %v413
  %415 = vmatmul.bf16.gmra.mxu0 %v284
  %v416 = vpop.f32.mrf.mxu0
  %v417 = vadd.f32 %v84, %v416
  %v418 = vpop.f32.mrf.mxu0
  %v419 = vadd.f32 %v84, %v418
  %420 = vmatmul.bf16.gmra.mxu0 %v287
  %v421 = vpop.f32.mrf.mxu0
  %v422 = vadd.f32 %v84, %v421
  %v423 = vpop.f32.mrf.mxu0
  %v424 = vadd.f32 %v84, %v423
  %425 = vmatmul.bf16.gmra.mxu0 %v290
  %v426 = vpop.f32.mrf.mxu0
  %v427 = vadd.f32 %v84, %v426
  %v428 = vpop.f32.mrf.mxu0
  %v429 = vadd.f32 %v84, %v428
  %430 = vmatmul.bf16.gmra.mxu0 %v293
  %v431 = vpop.f32.mrf.mxu0
  %v432 = vadd.f32 %v84, %v431
  %v433 = vpop.f32.mrf.mxu0
  %v434 = vadd.f32 %v84, %v433
  %435 = vmatmul.bf16.gmra.mxu0 %v296
  %v436 = vpop.f32.mrf.mxu0
  %v437 = vadd.f32 %v84, %v436
  %v438 = vpop.f32.mrf.mxu0
  %v439 = vadd.f32 %v84, %v438
  %440 = vmatmul.bf16.gmra.mxu0 %v299
  %v441 = vpop.f32.mrf.mxu0
  %v442 = vadd.f32 %v84, %v441
  %v443 = vpop.f32.mrf.mxu0
  %v444 = vadd.f32 %v84, %v443
  %445 = vmatmul.bf16.gmra.mxu0 %v302
  %v446 = vpop.f32.mrf.mxu0
  %v447 = vadd.f32 %v84, %v446
  %v448 = vpop.f32.mrf.mxu0
  %v449 = vadd.f32 %v84, %v448
  %450 = vmatmul.bf16.gmra.mxu0 %v305
  %v451 = vpop.f32.mrf.mxu0
  %v452 = vadd.f32 %v84, %v451
  %v453 = vpop.f32.mrf.mxu0
  %v454 = vadd.f32 %v84, %v453
  %455 = vmatmul.bf16.gmra.mxu0 %v308
  %v456 = vpop.f32.mrf.mxu0
  %v457 = vadd.f32 %v84, %v456
  %v458 = vpop.f32.mrf.mxu0
  %v459 = vadd.f32 %v84, %v458
  %460 = vmatmul.bf16.gmra.mxu0 %v311
  %v461 = vpop.f32.mrf.mxu0
  %v462 = vadd.f32 %v84, %v461
  %v463 = vpop.f32.mrf.mxu0
  %v464 = vadd.f32 %v84, %v463
  %465 = vmatmul.bf16.gmra.mxu0 %v314
  %v466 = vpop.f32.mrf.mxu0
  %v467 = vadd.f32 %v84, %v466
  %v468 = vpop.f32.mrf.mxu0
  %v469 = vadd.f32 %v84, %v468
  %470 = vmatmul.bf16.gmra.mxu0 %v317
  %v471 = vpop.f32.mrf.mxu0
  %v472 = vadd.f32 %v84, %v471
  %v473 = vpop.f32.mrf.mxu0
  %v474 = vadd.f32 %v84, %v473
  %475 = vmatmul.bf16.gmra.mxu0 %v320
  %v476 = vpop.f32.mrf.mxu0
  %v477 = vadd.f32 %v84, %v476
  %v478 = vpop.f32.mrf.mxu0
  %v479 = vadd.f32 %v84, %v478
  %480 = vmatmul.bf16.gmra.mxu0 %v323
  %v481 = vpop.f32.mrf.mxu0
  %v482 = vadd.f32 %v84, %v481
  %v483 = vpop.f32.mrf.mxu0
  %v484 = vadd.f32 %v84, %v483
  %485 = vmatmul.bf16.gmra.mxu0 %v326
  %v486 = vpop.f32.mrf.mxu0
  %v487 = vadd.f32 %v84, %v486
  %v488 = vpop.f32.mrf.mxu0
  %v489 = vadd.f32 %v84, %v488
  %490 = vmatmul.bf16.gmra.mxu0 %v329
  %v491 = vpop.f32.mrf.mxu0
  %v492 = vadd.f32 %v84, %v491
  %v493 = vpop.f32.mrf.mxu0
  %v494 = vadd.f32 %v84, %v493
  %495 = vmatmul.bf16.gmra.mxu0 %v332
  %v496 = vpop.f32.mrf.mxu0
  %v497 = vadd.f32 %v84, %v496
  %v498 = vpop.f32.mrf.mxu0
  %v499 = vadd.f32 %v84, %v498
  %500 = vmatmul.bf16.gmra.mxu0 %v335
  %v501 = vpop.f32.mrf.mxu0
  %v502 = vadd.f32 %v84, %v501
  %v503 = vpop.f32.mrf.mxu0
  %v504 = vadd.f32 %v84, %v503
  %505 = vmatmul.bf16.gmra.mxu0 %v338
  %v506 = vpop.f32.mrf.mxu0
  %v507 = vadd.f32 %v84, %v506
  %v508 = vpop.f32.mrf.mxu0
  %v509 = vadd.f32 %v84, %v508
  %510 = vmatmul.bf16.gmra.mxu0 %v341
  %v511 = vpop.f32.mrf.mxu0
  %v512 = vadd.f32 %v84, %v511
  %v513 = vpop.f32.mrf.mxu0
  %v514 = vadd.f32 %v84, %v513
  %515 = vdwg.mxu0
  %v516 = vsel %vm246, %v357, 0.0
  %v517 = vsel %vm246, %v359, 0.0
  %v518 = vadd.f32 %v516, %v517
  %v519 = vsel %vm246, %v362, 0.0
  %v520 = vadd.f32 %v518, %v519
  %v521 = vsel %vm246, %v364, 0.0
  %v522 = vadd.f32 %v520, %v521
  %v523 = vsel %vm246, %v367, 0.0
  %v524 = vadd.f32 %v522, %v523
  %v525 = vsel %vm246, %v369, 0.0
  %v526 = vadd.f32 %v524, %v525
  %v527 = vsel %vm246, %v372, 0.0
  %v528 = vadd.f32 %v526, %v527
  %v529 = vsel %vm246, %v374, 0.0
  %v530 = vadd.f32 %v528, %v529
  %v531 = vsel %vm246, %v377, 0.0
  %v532 = vadd.f32 %v530, %v531
  %v533 = vsel %vm246, %v379, 0.0
  %v534 = vadd.f32 %v532, %v533
  %v535 = vsel %vm246, %v382, 0.0
  %v536 = vadd.f32 %v534, %v535
  %v537 = vsel %vm246, %v384, 0.0
  %v538 = vadd.f32 %v536, %v537
  %v539 = vsel %vm246, %v387, 0.0
  %v540 = vadd.f32 %v538, %v539
  %v541 = vsel %vm246, %v389, 0.0
  %v542 = vadd.f32 %v540, %v541
  %v543 = vsel %vm246, %v392, 0.0
  %v544 = vadd.f32 %v542, %v543
  %v545 = vsel %vm246, %v394, 0.0
  %v546 = vadd.f32 %v544, %v545
  %v547 = vsel %vm246, %v397, 0.0
  %v548 = vadd.f32 %v546, %v547
  %v549 = vsel %vm246, %v399, 0.0
  %v550 = vadd.f32 %v548, %v549
  %v551 = vsel %vm246, %v402, 0.0
  %v552 = vadd.f32 %v550, %v551
  %v553 = vsel %vm246, %v404, 0.0
  %v554 = vadd.f32 %v552, %v553
  %v555 = vsel %vm246, %v407, 0.0
  %v556 = vadd.f32 %v554, %v555
  %v557 = vsel %vm246, %v409, 0.0
  %v558 = vadd.f32 %v556, %v557
  %v559 = vsel %vm246, %v412, 0.0
  %v560 = vadd.f32 %v558, %v559
  %v561 = vsel %vm246, %v414, 0.0
  %v562 = vadd.f32 %v560, %v561
  %v563 = vsel %vm246, %v417, 0.0
  %v564 = vadd.f32 %v562, %v563
  %v565 = vsel %vm246, %v419, 0.0
  %v566 = vadd.f32 %v564, %v565
  %v567 = vsel %vm246, %v422, 0.0
  %v568 = vadd.f32 %v566, %v567
  %v569 = vsel %vm246, %v424, 0.0
  %v570 = vadd.f32 %v568, %v569
  %v571 = vsel %vm246, %v427, 0.0
  %v572 = vadd.f32 %v570, %v571
  %v573 = vsel %vm246, %v429, 0.0
  %v574 = vadd.f32 %v572, %v573
  %v575 = vsel %vm246, %v432, 0.0
  %v576 = vadd.f32 %v574, %v575
  %v577 = vsel %vm246, %v434, 0.0
  %v578 = vadd.f32 %v576, %v577
  %v579 = vsel %vm246, %v437, 0.0
  %v580 = vadd.f32 %v578, %v579
  %v581 = vsel %vm246, %v439, 0.0
  %v582 = vadd.f32 %v580, %v581
  %v583 = vsel %vm246, %v442, 0.0
  %v584 = vadd.f32 %v582, %v583
  %v585 = vsel %vm246, %v444, 0.0
  %v586 = vadd.f32 %v584, %v585
  %v587 = vsel %vm246, %v447, 0.0
  %v588 = vadd.f32 %v586, %v587
  %v589 = vsel %vm246, %v449, 0.0
  %v590 = vadd.f32 %v588, %v589
  %v591 = vsel %vm246, %v452, 0.0
  %v592 = vadd.f32 %v590, %v591
  %v593 = vsel %vm246, %v454, 0.0
  %v594 = vadd.f32 %v592, %v593
  %v595 = vsel %vm246, %v457, 0.0
  %v596 = vadd.f32 %v594, %v595
  %v597 = vsel %vm246, %v459, 0.0
  %v598 = vadd.f32 %v596, %v597
  %v599 = vsel %vm246, %v462, 0.0
  %v600 = vadd.f32 %v598, %v599
  %v601 = vsel %vm246, %v464, 0.0
  %v602 = vadd.f32 %v600, %v601
  %v603 = vsel %vm246, %v467, 0.0
  %v604 = vadd.f32 %v602, %v603
  %v605 = vsel %vm246, %v469, 0.0
  %v606 = vadd.f32 %v604, %v605
  %v607 = vsel %vm246, %v472, 0.0
  %v608 = vadd.f32 %v606, %v607
  %v609 = vsel %vm246, %v474, 0.0
  %v610 = vadd.f32 %v608, %v609
  %v611 = vsel %vm246, %v477, 0.0
  %v612 = vadd.f32 %v610, %v611
  %v613 = vsel %vm246, %v479, 0.0
  %v614 = vadd.f32 %v612, %v613
  %v615 = vsel %vm246, %v482, 0.0
  %v616 = vadd.f32 %v614, %v615
  %v617 = vsel %vm246, %v484, 0.0
  %v618 = vadd.f32 %v616, %v617
  %v619 = vsel %vm246, %v487, 0.0
  %v620 = vadd.f32 %v618, %v619
  %v621 = vsel %vm246, %v489, 0.0
  %v622 = vadd.f32 %v620, %v621
  %v623 = vsel %vm246, %v492, 0.0
  %v624 = vadd.f32 %v622, %v623
  %v625 = vsel %vm246, %v494, 0.0
  %v626 = vadd.f32 %v624, %v625
  %v627 = vsel %vm246, %v497, 0.0
  %v628 = vadd.f32 %v626, %v627
  %v629 = vsel %vm246, %v499, 0.0
  %v630 = vadd.f32 %v628, %v629
  %v631 = vsel %vm246, %v502, 0.0
  %v632 = vadd.f32 %v630, %v631
  %v633 = vsel %vm246, %v504, 0.0
  %v634 = vadd.f32 %v632, %v633
  %v635 = vsel %vm246, %v507, 0.0
  %v636 = vadd.f32 %v634, %v635
  %v637 = vsel %vm246, %v509, 0.0
  %v638 = vadd.f32 %v636, %v637
  %v639 = vsel %vm246, %v512, 0.0
  %v640 = vadd.f32 %v638, %v639
  %v641 = vsel %vm246, %v514, 0.0
  %v642 = vadd.f32 %v640, %v641
  %v643 = vrot.slane %v642, 4
  %v644 = vadd.f32 %v642, %v643
  %v645 = vrot.slane %v644, 2
  %v646 = vadd.f32 %v644, %v645
  %v647 = vrot.slane %v646, 1
  %v648 = vadd.f32 %v646, %v647
  %vm649 = vcmask 57344
  %650 = vst.msk [vmem:[%s3] sm:$0x1] %vm649, %v648
  %v651 = vmul.f32 %v357, %v357
  %v652 = vmul.f32 %v359, %v359
  %v653 = vmul.f32 %v362, %v362
  %v654 = vmul.f32 %v364, %v364
  %v655 = vmul.f32 %v367, %v367
  %v656 = vmul.f32 %v369, %v369
  %v657 = vmul.f32 %v372, %v372
  %v658 = vmul.f32 %v374, %v374
  %v659 = vmul.f32 %v377, %v377
  %v660 = vmul.f32 %v379, %v379
  %v661 = vmul.f32 %v382, %v382
  %v662 = vmul.f32 %v384, %v384
  %v663 = vmul.f32 %v387, %v387
  %v664 = vmul.f32 %v389, %v389
  %v665 = vmul.f32 %v392, %v392
  %v666 = vmul.f32 %v394, %v394
  %v667 = vmul.f32 %v397, %v397
  %v668 = vmul.f32 %v399, %v399
  %v669 = vmul.f32 %v402, %v402
  %v670 = vmul.f32 %v404, %v404
  %v671 = vmul.f32 %v407, %v407
  %v672 = vmul.f32 %v409, %v409
  %v673 = vmul.f32 %v412, %v412
  %v674 = vmul.f32 %v414, %v414
  %v675 = vmul.f32 %v417, %v417
  %v676 = vmul.f32 %v419, %v419
  %v677 = vmul.f32 %v422, %v422
  %v678 = vmul.f32 %v424, %v424
  %v679 = vmul.f32 %v427, %v427
  %v680 = vmul.f32 %v429, %v429
  %v681 = vmul.f32 %v432, %v432
  %v682 = vmul.f32 %v434, %v434
  %v683 = vmul.f32 %v437, %v437
  %v684 = vmul.f32 %v439, %v439
  %v685 = vmul.f32 %v442, %v442
  %v686 = vmul.f32 %v444, %v444
  %v687 = vmul.f32 %v447, %v447
  %v688 = vmul.f32 %v449, %v449
  %v689 = vmul.f32 %v452, %v452
  %v690 = vmul.f32 %v454, %v454
  %v691 = vmul.f32 %v457, %v457
  %v692 = vmul.f32 %v459, %v459
  %v693 = vmul.f32 %v462, %v462
  %v694 = vmul.f32 %v464, %v464
  %v695 = vmul.f32 %v467, %v467
  %v696 = vmul.f32 %v469, %v469
  %v697 = vmul.f32 %v472, %v472
  %v698 = vmul.f32 %v474, %v474
  %v699 = vmul.f32 %v477, %v477
  %v700 = vmul.f32 %v479, %v479
  %v701 = vmul.f32 %v482, %v482
  %v702 = vmul.f32 %v484, %v484
  %v703 = vmul.f32 %v487, %v487
  %v704 = vmul.f32 %v489, %v489
  %v705 = vmul.f32 %v492, %v492
  %v706 = vmul.f32 %v494, %v494
  %v707 = vmul.f32 %v497, %v497
  %v708 = vmul.f32 %v499, %v499
  %v709 = vmul.f32 %v502, %v502
  %v710 = vmul.f32 %v504, %v504
  %v711 = vmul.f32 %v507, %v507
  %v712 = vmul.f32 %v509, %v509
  %v713 = vmul.f32 %v512, %v512
  %v714 = vmul.f32 %v514, %v514
  %v715 = vsel %vm246, %v651, 0.0
  %v716 = vsel %vm246, %v652, 0.0
  %v717 = vadd.f32 %v715, %v716
  %v718 = vsel %vm246, %v653, 0.0
  %v719 = vadd.f32 %v717, %v718
  %v720 = vsel %vm246, %v654, 0.0
  %v721 = vadd.f32 %v719, %v720
  %v722 = vsel %vm246, %v655, 0.0
  %v723 = vadd.f32 %v721, %v722
  %v724 = vsel %vm246, %v656, 0.0
  %v725 = vadd.f32 %v723, %v724
  %v726 = vsel %vm246, %v657, 0.0
  %v727 = vadd.f32 %v725, %v726
  %v728 = vsel %vm246, %v658, 0.0
  %v729 = vadd.f32 %v727, %v728
  %v730 = vsel %vm246, %v659, 0.0
  %v731 = vadd.f32 %v729, %v730
  %v732 = vsel %vm246, %v660, 0.0
  %v733 = vadd.f32 %v731, %v732
  %v734 = vsel %vm246, %v661, 0.0
  %v735 = vadd.f32 %v733, %v734
  %v736 = vsel %vm246, %v662, 0.0
  %v737 = vadd.f32 %v735, %v736
  %v738 = vsel %vm246, %v663, 0.0
  %v739 = vadd.f32 %v737, %v738
  %v740 = vsel %vm246, %v664, 0.0
  %v741 = vadd.f32 %v739, %v740
  %v742 = vsel %vm246, %v665, 0.0
  %v743 = vadd.f32 %v741, %v742
  %v744 = vsel %vm246, %v666, 0.0
  %v745 = vadd.f32 %v743, %v744
  %v746 = vsel %vm246, %v667, 0.0
  %v747 = vadd.f32 %v745, %v746
  %v748 = vsel %vm246, %v668, 0.0
  %v749 = vadd.f32 %v747, %v748
  %v750 = vsel %vm246, %v669, 0.0
  %v751 = vadd.f32 %v749, %v750
  %v752 = vsel %vm246, %v670, 0.0
  %v753 = vadd.f32 %v751, %v752
  %v754 = vsel %vm246, %v671, 0.0
  %v755 = vadd.f32 %v753, %v754
  %v756 = vsel %vm246, %v672, 0.0
  %v757 = vadd.f32 %v755, %v756
  %v758 = vsel %vm246, %v673, 0.0
  %v759 = vadd.f32 %v757, %v758
  %v760 = vsel %vm246, %v674, 0.0
  %v761 = vadd.f32 %v759, %v760
  %v762 = vsel %vm246, %v675, 0.0
  %v763 = vadd.f32 %v761, %v762
  %v764 = vsel %vm246, %v676, 0.0
  %v765 = vadd.f32 %v763, %v764
  %v766 = vsel %vm246, %v677, 0.0
  %v767 = vadd.f32 %v765, %v766
  %v768 = vsel %vm246, %v678, 0.0
  %v769 = vadd.f32 %v767, %v768
  %v770 = vsel %vm246, %v679, 0.0
  %v771 = vadd.f32 %v769, %v770
  %v772 = vsel %vm246, %v680, 0.0
  %v773 = vadd.f32 %v771, %v772
  %v774 = vsel %vm246, %v681, 0.0
  %v775 = vadd.f32 %v773, %v774
  %v776 = vsel %vm246, %v682, 0.0
  %v777 = vadd.f32 %v775, %v776
  %v778 = vsel %vm246, %v683, 0.0
  %v779 = vadd.f32 %v777, %v778
  %v780 = vsel %vm246, %v684, 0.0
  %v781 = vadd.f32 %v779, %v780
  %v782 = vsel %vm246, %v685, 0.0
  %v783 = vadd.f32 %v781, %v782
  %v784 = vsel %vm246, %v686, 0.0
  %v785 = vadd.f32 %v783, %v784
  %v786 = vsel %vm246, %v687, 0.0
  %v787 = vadd.f32 %v785, %v786
  %v788 = vsel %vm246, %v688, 0.0
  %v789 = vadd.f32 %v787, %v788
  %v790 = vsel %vm246, %v689, 0.0
  %v791 = vadd.f32 %v789, %v790
  %v792 = vsel %vm246, %v690, 0.0
  %v793 = vadd.f32 %v791, %v792
  %v794 = vsel %vm246, %v691, 0.0
  %v795 = vadd.f32 %v793, %v794
  %v796 = vsel %vm246, %v692, 0.0
  %v797 = vadd.f32 %v795, %v796
  %v798 = vsel %vm246, %v693, 0.0
  %v799 = vadd.f32 %v797, %v798
  %v800 = vsel %vm246, %v694, 0.0
  %v801 = vadd.f32 %v799, %v800
  %v802 = vsel %vm246, %v695, 0.0
  %v803 = vadd.f32 %v801, %v802
  %v804 = vsel %vm246, %v696, 0.0
  %v805 = vadd.f32 %v803, %v804
  %v806 = vsel %vm246, %v697, 0.0
  %v807 = vadd.f32 %v805, %v806
  %v808 = vsel %vm246, %v698, 0.0
  %v809 = vadd.f32 %v807, %v808
  %v810 = vsel %vm246, %v699, 0.0
  %v811 = vadd.f32 %v809, %v810
  %v812 = vsel %vm246, %v700, 0.0
  %v813 = vadd.f32 %v811, %v812
  %v814 = vsel %vm246, %v701, 0.0
  %v815 = vadd.f32 %v813, %v814
  %v816 = vsel %vm246, %v702, 0.0
  %v817 = vadd.f32 %v815, %v816
  %v818 = vsel %vm246, %v703, 0.0
  %v819 = vadd.f32 %v817, %v818
  %v820 = vsel %vm246, %v704, 0.0
  %v821 = vadd.f32 %v819, %v820
  %v822 = vsel %vm246, %v705, 0.0
  %v823 = vadd.f32 %v821, %v822
  %v824 = vsel %vm246, %v706, 0.0
  %v825 = vadd.f32 %v823, %v824
  %v826 = vsel %vm246, %v707, 0.0
  %v827 = vadd.f32 %v825, %v826
  %v828 = vsel %vm246, %v708, 0.0
  %v829 = vadd.f32 %v827, %v828
  %v830 = vsel %vm246, %v709, 0.0
  %v831 = vadd.f32 %v829, %v830
  %v832 = vsel %vm246, %v710, 0.0
  %v833 = vadd.f32 %v831, %v832
  %v834 = vsel %vm246, %v711, 0.0
  %v835 = vadd.f32 %v833, %v834
  %v836 = vsel %vm246, %v712, 0.0
  %v837 = vadd.f32 %v835, %v836
  %v838 = vsel %vm246, %v713, 0.0
  %v839 = vadd.f32 %v837, %v838
  %v840 = vsel %vm246, %v714, 0.0
  %v841 = vadd.f32 %v839, %v840
  %v842 = vrot.slane %v841, 4
  %v843 = vadd.f32 %v841, %v842
  %v844 = vrot.slane %v843, 2
  %v845 = vadd.f32 %v843, %v844
  %v846 = vrot.slane %v845, 1
  %v847 = vadd.f32 %v845, %v846
  %848 = vst.msk [vmem:[%s4] sm:$0x1] %vm649, %v847
  // Predicated region
  $region14: #{downsample_unit_forward.5} parent=0 // pred_check
    _
  $region15: #{downsample_unit_forward.5} parent=0 // pred_check_branch
    %850 = sbr.rel (0) target = $region17
  $region16: #{downsample_unit_forward.5} parent=0 // pred_region
    _
  $region17: #{downsample_unit_forward.5} parent=0 // pred_fallthru
    _
  // Predicated region
  $region18: #{downsample_unit_forward.5} parent=0 // pred_check
    _
  $region19: #{downsample_unit_forward.5} parent=0 // pred_check_branch
    %852 = sbr.rel (0) target = $region21
  $region20: #{downsample_unit_forward.5} parent=0 // pred_region
    _
  $region21: #{downsample_unit_forward.5} parent=0 // pred_fallthru
    _
  // Predicated region
  $region22: #{downsample_unit_forward.5} parent=0 // pred_check
    _
  $region23: #{downsample_unit_forward.5} parent=0 // pred_check_branch
    %854 = sbr.rel (0) target = $region25
  $region24: #{downsample_unit_forward.5} parent=0 // pred_region
    _
  $region25: #{downsample_unit_forward.5} parent=0 // pred_fallthru
    _
  // Predicated region
  $region26: #{downsample_unit_forward.5} parent=0 // pred_check
    _
  $region27: #{downsample_unit_forward.5} parent=0 // pred_check_branch
    %856 = sbr.rel (0) target = $region29
  $region28: #{downsample_unit_forward.5} parent=0 // pred_region
    _
  $region29: #{downsample_unit_forward.5} parent=0 // pred_fallthru
    _

// kernel: downsample_unit_forward.6
$region0: #{downsample_unit_forward.6}
  #allocation0 [shape = 'u32[]', space=smem, size = 0x4, offset = 0x4, fixed_abs, tag = 'smem constant byte address 0x4 - core index']
  #allocation1 [shape = 'u32[72,128]{1,0:T(1,128)}', space=vmem, size = 0x9000, scoped, tag = 'internal scratch']
  %s0 = inlined_call_operand.vmem [shape: bf16[512,8], index: 0, kind: input, shape index: {}]
  %s1 = inlined_call_operand.vmem [shape: bf16[8,8], index: 1, kind: input, shape index: {}]
  %s2 = inlined_call_operand.vmem [shape: f32[1,8], index: 2, kind: input, shape index: {}]
  %s3 = inlined_call_operand.vmem [shape: f32[1,8], index: 3, kind: input, shape index: {}]
  %s4 = inlined_call_operand.vmem [shape: bf16[512,8], index: 4, kind: output, shape index: {}]
  %s5 = sld [smem:[#allocation0]]
  $region26: #{downsample_unit_forward.6} parent=0
    _
  %s7 = ssub.s32 1, %s5
  %s8 = scalar_select 0, %s7, %s5
  // Predicated region
  $region2: #{downsample_unit_forward.6} parent=0 // pred_check
    _
  $region3: #{downsample_unit_forward.6} parent=0 // pred_check_branch
    %10 = sbr.rel (0) target = $region5
  $region4: #{downsample_unit_forward.6} parent=0 // pred_region
    _
  $region5: #{downsample_unit_forward.6} parent=0 // pred_fallthru
    _
  // Predicated region
  $region6: #{downsample_unit_forward.6} parent=0 // pred_check
    _
  $region7: #{downsample_unit_forward.6} parent=0 // pred_check_branch
    %12 = sbr.rel (0) target = $region9
  $region8: #{downsample_unit_forward.6} parent=0 // pred_region
    _
  $region9: #{downsample_unit_forward.6} parent=0 // pred_fallthru
    _
  // Predicated region
  $region10: #{downsample_unit_forward.6} parent=0 // pred_check
    _
  $region11: #{downsample_unit_forward.6} parent=0 // pred_check_branch
    %14 = sbr.rel (0) target = $region13
  $region12: #{downsample_unit_forward.6} parent=0 // pred_region
    _
  $region13: #{downsample_unit_forward.6} parent=0 // pred_fallthru
    _
  // Predicated region
  $region14: #{downsample_unit_forward.6} parent=0 // pred_check
    _
  $region15: #{downsample_unit_forward.6} parent=0 // pred_check_branch
    %16 = sbr.rel (0) target = $region17
  $region16: #{downsample_unit_forward.6} parent=0 // pred_region
    _
  $region17: #{downsample_unit_forward.6} parent=0 // pred_fallthru
    _
  %v18 = vld [vmem:[%s0] sm:$0xf]
  %v19 = vld [vmem:[%s0 + $0x4] sm:$0xf]
  %v20 = vld [vmem:[%s0 + $0x8] sm:$0xf]
  %v21 = vld [vmem:[%s0 + $0xc] sm:$0xf]
  %v22 = vld [vmem:[%s0 + $0x10] sm:$0xf]
  %v23 = vld [vmem:[%s0 + $0x14] sm:$0xf]
  %v24 = vld [vmem:[%s0 + $0x18] sm:$0xf]
  %v25 = vld [vmem:[%s0 + $0x1c] sm:$0xf]
  %v26 = vld [vmem:[%s0 + $0x20] sm:$0xf]
  %v27 = vld [vmem:[%s0 + $0x24] sm:$0xf]
  %v28 = vld [vmem:[%s0 + $0x28] sm:$0xf]
  %v29 = vld [vmem:[%s0 + $0x2c] sm:$0xf]
  %v30 = vld [vmem:[%s0 + $0x30] sm:$0xf]
  %v31 = vld [vmem:[%s0 + $0x34] sm:$0xf]
  %v32 = vld [vmem:[%s0 + $0x38] sm:$0xf]
  %v33 = vld [vmem:[%s0 + $0x3c] sm:$0xf]
  %v34 = vld [vmem:[%s0 + $0x40] sm:$0xf]
  %v35 = vld [vmem:[%s0 + $0x44] sm:$0xf]
  %v36 = vld [vmem:[%s0 + $0x48] sm:$0xf]
  %v37 = vld [vmem:[%s0 + $0x4c] sm:$0xf]
  %v38 = vld [vmem:[%s0 + $0x50] sm:$0xf]
  %v39 = vld [vmem:[%s0 + $0x54] sm:$0xf]
  %v40 = vld [vmem:[%s0 + $0x58] sm:$0xf]
  %v41 = vld [vmem:[%s0 + $0x5c] sm:$0xf]
  %v42 = vld [vmem:[%s0 + $0x60] sm:$0xf]
  %v43 = vld [vmem:[%s0 + $0x64] sm:$0xf]
  %v44 = vld [vmem:[%s0 + $0x68] sm:$0xf]
  %v45 = vld [vmem:[%s0 + $0x6c] sm:$0xf]
  %v46 = vld [vmem:[%s0 + $0x70] sm:$0xf]
  %v47 = vld [vmem:[%s0 + $0x74] sm:$0xf]
  %v48 = vld [vmem:[%s0 + $0x78] sm:$0xf]
  %v49 = vld [vmem:[%s0 + $0x7c] sm:$0xf]
  %v50 = vld [vmem:[%s0 + $0x80] sm:$0xf]
  %v51 = vld [vmem:[%s0 + $0x84] sm:$0xf]
  %v52 = vld [vmem:[%s0 + $0x88] sm:$0xf]
  %v53 = vld [vmem:[%s0 + $0x8c] sm:$0xf]
  %v54 = vld [vmem:[%s0 + $0x90] sm:$0xf]
  %v55 = vld [vmem:[%s0 + $0x94] sm:$0xf]
  %v56 = vld [vmem:[%s0 + $0x98] sm:$0xf]
  %v57 = vld [vmem:[%s0 + $0x9c] sm:$0xf]
  %v58 = vld [vmem:[%s0 + $0xa0] sm:$0xf]
  %v59 = vld [vmem:[%s0 + $0xa4] sm:$0xf]
  %v60 = vld [vmem:[%s0 + $0xa8] sm:$0xf]
  %v61 = vld [vmem:[%s0 + $0xac] sm:$0xf]
  %v62 = vld [vmem:[%s0 + $0xb0] sm:$0xf]
  %v63 = vld [vmem:[%s0 + $0xb4] sm:$0xf]
  %v64 = vld [vmem:[%s0 + $0xb8] sm:$0xf]
  %v65 = vld [vmem:[%s0 + $0xbc] sm:$0xf]
  %v66 = vld [vmem:[%s0 + $0xc0] sm:$0xf]
  %v67 = vld [vmem:[%s0 + $0xc4] sm:$0xf]
  %v68 = vld [vmem:[%s0 + $0xc8] sm:$0xf]
  %v69 = vld [vmem:[%s0 + $0xcc] sm:$0xf]
  %v70 = vld [vmem:[%s0 + $0xd0] sm:$0xf]
  %v71 = vld [vmem:[%s0 + $0xd4] sm:$0xf]
  %v72 = vld [vmem:[%s0 + $0xd8] sm:$0xf]
  %v73 = vld [vmem:[%s0 + $0xdc] sm:$0xf]
  %v74 = vld [vmem:[%s0 + $0xe0] sm:$0xf]
  %v75 = vld [vmem:[%s0 + $0xe4] sm:$0xf]
  %v76 = vld [vmem:[%s0 + $0xe8] sm:$0xf]
  %v77 = vld [vmem:[%s0 + $0xec] sm:$0xf]
  %v78 = vld [vmem:[%s0 + $0xf0] sm:$0xf]
  %v79 = vld [vmem:[%s0 + $0xf4] sm:$0xf]
  %v80 = vld [vmem:[%s0 + $0xf8] sm:$0xf]
  %v81 = vld [vmem:[%s0 + $0xfc] sm:$0xf]
  %v82 = vld [vmem:[%s1] sm:$0xf]
  %v147 = vunpack.c.l.b16 %v18
  %v148 = vunpack.c.l.b16 %v19
  %v149 = vunpack.c.l.b16 %v20
  %v150 = vunpack.c.l.b16 %v21
  %v151 = vunpack.c.l.b16 %v22
  %v152 = vunpack.c.l.b16 %v23
  %v153 = vunpack.c.l.b16 %v24
  %v154 = vunpack.c.l.b16 %v25
  %v155 = vunpack.c.l.b16 %v26
  %v156 = vunpack.c.l.b16 %v27
  %v157 = vunpack.c.l.b16 %v28
  %v158 = vunpack.c.l.b16 %v29
  %v159 = vunpack.c.l.b16 %v30
  %v160 = vunpack.c.l.b16 %v31
  %v161 = vunpack.c.l.b16 %v32
  %v162 = vunpack.c.l.b16 %v33
  %v163 = vunpack.c.l.b16 %v34
  %v164 = vunpack.c.l.b16 %v35
  %v165 = vunpack.c.l.b16 %v36
  %v166 = vunpack.c.l.b16 %v37
  %v167 = vunpack.c.l.b16 %v38
  %v168 = vunpack.c.l.b16 %v39
  %v169 = vunpack.c.l.b16 %v40
  %v170 = vunpack.c.l.b16 %v41
  %v171 = vunpack.c.l.b16 %v42
  %v172 = vunpack.c.l.b16 %v43
  %v173 = vunpack.c.l.b16 %v44
  %v174 = vunpack.c.l.b16 %v45
  %v175 = vunpack.c.l.b16 %v46
  %v176 = vunpack.c.l.b16 %v47
  %v177 = vunpack.c.l.b16 %v48
  %v178 = vunpack.c.l.b16 %v49
  %v179 = vunpack.c.l.b16 %v50
  %v180 = vunpack.c.l.b16 %v51
  %v181 = vunpack.c.l.b16 %v52
  %v182 = vunpack.c.l.b16 %v53
  %v183 = vunpack.c.l.b16 %v54
  %v184 = vunpack.c.l.b16 %v55
  %v185 = vunpack.c.l.b16 %v56
  %v186 = vunpack.c.l.b16 %v57
  %v187 = vunpack.c.l.b16 %v58
  %v188 = vunpack.c.l.b16 %v59
  %v189 = vunpack.c.l.b16 %v60
  %v190 = vunpack.c.l.b16 %v61
  %v191 = vunpack.c.l.b16 %v62
  %v192 = vunpack.c.l.b16 %v63
  %v193 = vunpack.c.l.b16 %v64
  %v194 = vunpack.c.l.b16 %v65
  %v195 = vunpack.c.l.b16 %v66
  %v196 = vunpack.c.l.b16 %v67
  %v197 = vunpack.c.l.b16 %v68
  %v198 = vunpack.c.l.b16 %v69
  %v199 = vunpack.c.l.b16 %v70
  %v200 = vunpack.c.l.b16 %v71
  %v201 = vunpack.c.l.b16 %v72
  %v202 = vunpack.c.l.b16 %v73
  %v203 = vunpack.c.l.b16 %v74
  %v204 = vunpack.c.l.b16 %v75
  %v205 = vunpack.c.l.b16 %v76
  %v206 = vunpack.c.l.b16 %v77
  %v207 = vunpack.c.l.b16 %v78
  %v208 = vunpack.c.l.b16 %v79
  %v209 = vunpack.c.l.b16 %v80
  %v210 = vunpack.c.l.b16 %v81
  %v211 = vpack.c.b16 %v148, %v147
  %v212 = vpack.c.b16 %v150, %v149
  %v213 = vpack.c.b16 %v152, %v151
  %v214 = vpack.c.b16 %v154, %v153
  %v215 = vpack.c.b16 %v156, %v155
  %v216 = vpack.c.b16 %v158, %v157
  %v217 = vpack.c.b16 %v160, %v159
  %v218 = vpack.c.b16 %v162, %v161
  %v219 = vpack.c.b16 %v164, %v163
  %v220 = vpack.c.b16 %v166, %v165
  %v221 = vpack.c.b16 %v168, %v167
  %v222 = vpack.c.b16 %v170, %v169
  %v223 = vpack.c.b16 %v172, %v171
  %v224 = vpack.c.b16 %v174, %v173
  %v225 = vpack.c.b16 %v176, %v175
  %v226 = vpack.c.b16 %v178, %v177
  %v227 = vpack.c.b16 %v180, %v179
  %v228 = vpack.c.b16 %v182, %v181
  %v229 = vpack.c.b16 %v184, %v183
  %v230 = vpack.c.b16 %v186, %v185
  %v231 = vpack.c.b16 %v188, %v187
  %v232 = vpack.c.b16 %v190, %v189
  %v233 = vpack.c.b16 %v192, %v191
  %v234 = vpack.c.b16 %v194, %v193
  %v235 = vpack.c.b16 %v196, %v195
  %v236 = vpack.c.b16 %v198, %v197
  %v237 = vpack.c.b16 %v200, %v199
  %v238 = vpack.c.b16 %v202, %v201
  %v239 = vpack.c.b16 %v204, %v203
  %v240 = vpack.c.b16 %v206, %v205
  %v241 = vpack.c.b16 %v208, %v207
  %v242 = vpack.c.b16 %v210, %v209
  %vm243 = vcmask 64512
  %v245 = vsel %vm243, %v211, 0
  %v248 = vsel %vm243, %v212, 0
  %v251 = vsel %vm243, %v213, 0
  %v254 = vsel %vm243, %v214, 0
  %v257 = vsel %vm243, %v215, 0
  %v260 = vsel %vm243, %v216, 0
  %v263 = vsel %vm243, %v217, 0
  %v266 = vsel %vm243, %v218, 0
  %v269 = vsel %vm243, %v219, 0
  %v272 = vsel %vm243, %v220, 0
  %v275 = vsel %vm243, %v221, 0
  %v278 = vsel %vm243, %v222, 0
  %v281 = vsel %vm243, %v223, 0
  %v284 = vsel %vm243, %v224, 0
  %v287 = vsel %vm243, %v225, 0
  %v290 = vsel %vm243, %v226, 0
  %v293 = vsel %vm243, %v227, 0
  %v296 = vsel %vm243, %v228, 0
  %v299 = vsel %vm243, %v229, 0
  %v302 = vsel %vm243, %v230, 0
  %v305 = vsel %vm243, %v231, 0
  %v308 = vsel %vm243, %v232, 0
  %v311 = vsel %vm243, %v233, 0
  %v314 = vsel %vm243, %v234, 0
  %v317 = vsel %vm243, %v235, 0
  %v320 = vsel %vm243, %v236, 0
  %v323 = vsel %vm243, %v237, 0
  %v326 = vsel %vm243, %v238, 0
  %v329 = vsel %vm243, %v239, 0
  %v332 = vsel %vm243, %v240, 0
  %v335 = vsel %vm243, %v241, 0
  %v338 = vsel %vm243, %v242, 0
  %vm340 = vcmask 1043456
  %v342 = vsel %vm340, %v82, 0
  %344 = vmatpush.bf16.msra.mxu0 0
  %345 = vmatpush.bf16.msra.mxu0 0
  %346 = vmatpush.bf16.msra.mxu0 0
  %347 = vmatpush.bf16.msra.mxu0 0
  %348 = vmatpush.bf16.msra.mxu0 0
  %349 = vmatpush.bf16.msra.mxu0 0
  %350 = vmatpush.bf16.msra.mxu0 0
  %351 = vmatpush.bf16.msra.mxu0 %v342
  %352 = vmatmul.bf16.gmra.mxu0 %v245
  %v353 = vpop.f32.mrf.mxu0
  %v354 = vadd.f32 0.0, %v353
  %v355 = vpop.f32.mrf.mxu0
  %v356 = vadd.f32 0.0, %v355
  %357 = vmatmul.bf16.gmra.mxu0 %v248
  %v358 = vpop.f32.mrf.mxu0
  %v359 = vadd.f32 0.0, %v358
  %v360 = vpop.f32.mrf.mxu0
  %v361 = vadd.f32 0.0, %v360
  %362 = vmatmul.bf16.gmra.mxu0 %v251
  %v363 = vpop.f32.mrf.mxu0
  %v364 = vadd.f32 0.0, %v363
  %v365 = vpop.f32.mrf.mxu0
  %v366 = vadd.f32 0.0, %v365
  %367 = vmatmul.bf16.gmra.mxu0 %v254
  %v368 = vpop.f32.mrf.mxu0
  %v369 = vadd.f32 0.0, %v368
  %v370 = vpop.f32.mrf.mxu0
  %v371 = vadd.f32 0.0, %v370
  %372 = vmatmul.bf16.gmra.mxu0 %v257
  %v373 = vpop.f32.mrf.mxu0
  %v374 = vadd.f32 0.0, %v373
  %v375 = vpop.f32.mrf.mxu0
  %v376 = vadd.f32 0.0, %v375
  %377 = vmatmul.bf16.gmra.mxu0 %v260
  %v378 = vpop.f32.mrf.mxu0
  %v379 = vadd.f32 0.0, %v378
  %v380 = vpop.f32.mrf.mxu0
  %v381 = vadd.f32 0.0, %v380
  %382 = vmatmul.bf16.gmra.mxu0 %v263
  %v383 = vpop.f32.mrf.mxu0
  %v384 = vadd.f32 0.0, %v383
  %v385 = vpop.f32.mrf.mxu0
  %v386 = vadd.f32 0.0, %v385
  %387 = vmatmul.bf16.gmra.mxu0 %v266
  %v388 = vpop.f32.mrf.mxu0
  %v389 = vadd.f32 0.0, %v388
  %v390 = vpop.f32.mrf.mxu0
  %v391 = vadd.f32 0.0, %v390
  %392 = vmatmul.bf16.gmra.mxu0 %v269
  %v393 = vpop.f32.mrf.mxu0
  %v394 = vadd.f32 0.0, %v393
  %v395 = vpop.f32.mrf.mxu0
  %v396 = vadd.f32 0.0, %v395
  %397 = vmatmul.bf16.gmra.mxu0 %v272
  %v398 = vpop.f32.mrf.mxu0
  %v399 = vadd.f32 0.0, %v398
  %v400 = vpop.f32.mrf.mxu0
  %v401 = vadd.f32 0.0, %v400
  %402 = vmatmul.bf16.gmra.mxu0 %v275
  %v403 = vpop.f32.mrf.mxu0
  %v404 = vadd.f32 0.0, %v403
  %v405 = vpop.f32.mrf.mxu0
  %v406 = vadd.f32 0.0, %v405
  %407 = vmatmul.bf16.gmra.mxu0 %v278
  %v408 = vpop.f32.mrf.mxu0
  %v409 = vadd.f32 0.0, %v408
  %v410 = vpop.f32.mrf.mxu0
  %v411 = vadd.f32 0.0, %v410
  %412 = vmatmul.bf16.gmra.mxu0 %v281
  %v413 = vpop.f32.mrf.mxu0
  %v414 = vadd.f32 0.0, %v413
  %v415 = vpop.f32.mrf.mxu0
  %v416 = vadd.f32 0.0, %v415
  %417 = vmatmul.bf16.gmra.mxu0 %v284
  %v418 = vpop.f32.mrf.mxu0
  %v419 = vadd.f32 0.0, %v418
  %v420 = vpop.f32.mrf.mxu0
  %v421 = vadd.f32 0.0, %v420
  %422 = vmatmul.bf16.gmra.mxu0 %v287
  %v423 = vpop.f32.mrf.mxu0
  %v424 = vadd.f32 0.0, %v423
  %v425 = vpop.f32.mrf.mxu0
  %v426 = vadd.f32 0.0, %v425
  %427 = vmatmul.bf16.gmra.mxu0 %v290
  %v428 = vpop.f32.mrf.mxu0
  %v429 = vadd.f32 0.0, %v428
  %v430 = vpop.f32.mrf.mxu0
  %v431 = vadd.f32 0.0, %v430
  %432 = vmatmul.bf16.gmra.mxu0 %v293
  %v433 = vpop.f32.mrf.mxu0
  %v434 = vadd.f32 0.0, %v433
  %v435 = vpop.f32.mrf.mxu0
  %v436 = vadd.f32 0.0, %v435
  %437 = vmatmul.bf16.gmra.mxu0 %v296
  %v438 = vpop.f32.mrf.mxu0
  %v439 = vadd.f32 0.0, %v438
  %v440 = vpop.f32.mrf.mxu0
  %v441 = vadd.f32 0.0, %v440
  %442 = vmatmul.bf16.gmra.mxu0 %v299
  %v443 = vpop.f32.mrf.mxu0
  %v444 = vadd.f32 0.0, %v443
  %v445 = vpop.f32.mrf.mxu0
  %v446 = vadd.f32 0.0, %v445
  %447 = vmatmul.bf16.gmra.mxu0 %v302
  %v448 = vpop.f32.mrf.mxu0
  %v449 = vadd.f32 0.0, %v448
  %v450 = vpop.f32.mrf.mxu0
  %v451 = vadd.f32 0.0, %v450
  %452 = vmatmul.bf16.gmra.mxu0 %v305
  %v453 = vpop.f32.mrf.mxu0
  %v454 = vadd.f32 0.0, %v453
  %v455 = vpop.f32.mrf.mxu0
  %v456 = vadd.f32 0.0, %v455
  %457 = vmatmul.bf16.gmra.mxu0 %v308
  %v458 = vpop.f32.mrf.mxu0
  %v459 = vadd.f32 0.0, %v458
  %v460 = vpop.f32.mrf.mxu0
  %v461 = vadd.f32 0.0, %v460
  %462 = vmatmul.bf16.gmra.mxu0 %v311
  %v463 = vpop.f32.mrf.mxu0
  %v464 = vadd.f32 0.0, %v463
  %v465 = vpop.f32.mrf.mxu0
  %v466 = vadd.f32 0.0, %v465
  %467 = vmatmul.bf16.gmra.mxu0 %v314
  %v468 = vpop.f32.mrf.mxu0
  %v469 = vadd.f32 0.0, %v468
  %v470 = vpop.f32.mrf.mxu0
  %v471 = vadd.f32 0.0, %v470
  %472 = vmatmul.bf16.gmra.mxu0 %v317
  %v473 = vpop.f32.mrf.mxu0
  %v474 = vadd.f32 0.0, %v473
  %v475 = vpop.f32.mrf.mxu0
  %v476 = vadd.f32 0.0, %v475
  %477 = vmatmul.bf16.gmra.mxu0 %v320
  %v478 = vpop.f32.mrf.mxu0
  %v479 = vadd.f32 0.0, %v478
  %v480 = vpop.f32.mrf.mxu0
  %v481 = vadd.f32 0.0, %v480
  %482 = vmatmul.bf16.gmra.mxu0 %v323
  %v483 = vpop.f32.mrf.mxu0
  %v484 = vadd.f32 0.0, %v483
  %v485 = vpop.f32.mrf.mxu0
  %v486 = vadd.f32 0.0, %v485
  %487 = vmatmul.bf16.gmra.mxu0 %v326
  %v488 = vpop.f32.mrf.mxu0
  %v489 = vadd.f32 0.0, %v488
  %v490 = vpop.f32.mrf.mxu0
  %v491 = vadd.f32 0.0, %v490
  %492 = vmatmul.bf16.gmra.mxu0 %v329
  %v493 = vpop.f32.mrf.mxu0
  %v494 = vadd.f32 0.0, %v493
  %v495 = vpop.f32.mrf.mxu0
  %v496 = vadd.f32 0.0, %v495
  %497 = vmatmul.bf16.gmra.mxu0 %v332
  %v498 = vpop.f32.mrf.mxu0
  %v499 = vadd.f32 0.0, %v498
  %v500 = vpop.f32.mrf.mxu0
  %v501 = vadd.f32 0.0, %v500
  %502 = vmatmul.bf16.gmra.mxu0 %v335
  %v503 = vpop.f32.mrf.mxu0
  %v504 = vadd.f32 0.0, %v503
  %v505 = vpop.f32.mrf.mxu0
  %v506 = vadd.f32 0.0, %v505
  %507 = vmatmul.bf16.gmra.mxu0 %v338
  %v508 = vpop.f32.mrf.mxu0
  %v509 = vadd.f32 0.0, %v508
  %v510 = vpop.f32.mrf.mxu0
  %v511 = vadd.f32 0.0, %v510
  %512 = vdwg.mxu0
  %v513 = vld [vmem:[%s2] sm:$0x1]
  %v515 = vperm.slane %v513, 0
  %v517 = vmul.f32 %v354, %v515
  %v518 = vmul.f32 %v356, %v515
  %v519 = vmul.f32 %v359, %v515
  %v520 = vmul.f32 %v361, %v515
  %v521 = vmul.f32 %v364, %v515
  %v522 = vmul.f32 %v366, %v515
  %v523 = vmul.f32 %v369, %v515
  %v524 = vmul.f32 %v371, %v515
  %v525 = vmul.f32 %v374, %v515
  %v526 = vmul.f32 %v376, %v515
  %v527 = vmul.f32 %v379, %v515
  %v528 = vmul.f32 %v381, %v515
  %v529 = vmul.f32 %v384, %v515
  %v530 = vmul.f32 %v386, %v515
  %v531 = vmul.f32 %v389, %v515
  %v532 = vmul.f32 %v391, %v515
  %v533 = vmul.f32 %v394, %v515
  %v534 = vmul.f32 %v396, %v515
  %v535 = vmul.f32 %v399, %v515
  %v536 = vmul.f32 %v401, %v515
  %v537 = vmul.f32 %v404, %v515
  %v538 = vmul.f32 %v406, %v515
  %v539 = vmul.f32 %v409, %v515
  %v540 = vmul.f32 %v411, %v515
  %v541 = vmul.f32 %v414, %v515
  %v542 = vmul.f32 %v416, %v515
  %v543 = vmul.f32 %v419, %v515
  %v544 = vmul.f32 %v421, %v515
  %v545 = vmul.f32 %v424, %v515
  %v546 = vmul.f32 %v426, %v515
  %v547 = vmul.f32 %v429, %v515
  %v548 = vmul.f32 %v431, %v515
  %v549 = vmul.f32 %v434, %v515
  %v550 = vmul.f32 %v436, %v515
  %v551 = vmul.f32 %v439, %v515
  %v552 = vmul.f32 %v441, %v515
  %v553 = vmul.f32 %v444, %v515
  %v554 = vmul.f32 %v446, %v515
  %v555 = vmul.f32 %v449, %v515
  %v556 = vmul.f32 %v451, %v515
  %v557 = vmul.f32 %v454, %v515
  %v558 = vmul.f32 %v456, %v515
  %v559 = vmul.f32 %v459, %v515
  %v560 = vmul.f32 %v461, %v515
  %v561 = vmul.f32 %v464, %v515
  %v562 = vmul.f32 %v466, %v515
  %v563 = vmul.f32 %v469, %v515
  %v564 = vmul.f32 %v471, %v515
  %v565 = vmul.f32 %v474, %v515
  %v566 = vmul.f32 %v476, %v515
  %v567 = vmul.f32 %v479, %v515
  %v568 = vmul.f32 %v481, %v515
  %v569 = vmul.f32 %v484, %v515
  %v570 = vmul.f32 %v486, %v515
  %v571 = vmul.f32 %v489, %v515
  %v572 = vmul.f32 %v491, %v515
  %v573 = vmul.f32 %v494, %v515
  %v574 = vmul.f32 %v496, %v515
  %v575 = vmul.f32 %v499, %v515
  %v576 = vmul.f32 %v501, %v515
  %v577 = vmul.f32 %v504, %v515
  %v578 = vmul.f32 %v506, %v515
  %v579 = vmul.f32 %v509, %v515
  %v580 = vmul.f32 %v511, %v515
  %v581 = vld [vmem:[%s3] sm:$0x1]
  %v583 = vperm.slane %v581, 0
  %v585 = vadd.f32 %v517, %v583
  %v586 = vadd.f32 %v518, %v583
  %v587 = vadd.f32 %v519, %v583
  %v588 = vadd.f32 %v520, %v583
  %v589 = vadd.f32 %v521, %v583
  %v590 = vadd.f32 %v522, %v583
  %v591 = vadd.f32 %v523, %v583
  %v592 = vadd.f32 %v524, %v583
  %v593 = vadd.f32 %v525, %v583
  %v594 = vadd.f32 %v526, %v583
  %v595 = vadd.f32 %v527, %v583
  %v596 = vadd.f32 %v528, %v583
  %v597 = vadd.f32 %v529, %v583
  %v598 = vadd.f32 %v530, %v583
  %v599 = vadd.f32 %v531, %v583
  %v600 = vadd.f32 %v532, %v583
  %v601 = vadd.f32 %v533, %v583
  %v602 = vadd.f32 %v534, %v583
  %v603 = vadd.f32 %v535, %v583
  %v604 = vadd.f32 %v536, %v583
  %v605 = vadd.f32 %v537, %v583
  %v606 = vadd.f32 %v538, %v583
  %v607 = vadd.f32 %v539, %v583
  %v608 = vadd.f32 %v540, %v583
  %v609 = vadd.f32 %v541, %v583
  %v610 = vadd.f32 %v542, %v583
  %v611 = vadd.f32 %v543, %v583
  %v612 = vadd.f32 %v544, %v583
  %v613 = vadd.f32 %v545, %v583
  %v614 = vadd.f32 %v546, %v583
  %v615 = vadd.f32 %v547, %v583
  %v616 = vadd.f32 %v548, %v583
  %v617 = vadd.f32 %v549, %v583
  %v618 = vadd.f32 %v550, %v583
  %v619 = vadd.f32 %v551, %v583
  %v620 = vadd.f32 %v552, %v583
  %v621 = vadd.f32 %v553, %v583
  %v622 = vadd.f32 %v554, %v583
  %v623 = vadd.f32 %v555, %v583
  %v624 = vadd.f32 %v556, %v583
  %v625 = vadd.f32 %v557, %v583
  %v626 = vadd.f32 %v558, %v583
  %v627 = vadd.f32 %v559, %v583
  %v628 = vadd.f32 %v560, %v583
  %v629 = vadd.f32 %v561, %v583
  %v630 = vadd.f32 %v562, %v583
  %v631 = vadd.f32 %v563, %v583
  %v632 = vadd.f32 %v564, %v583
  %v633 = vadd.f32 %v565, %v583
  %v634 = vadd.f32 %v566, %v583
  %v635 = vadd.f32 %v567, %v583
  %v636 = vadd.f32 %v568, %v583
  %v637 = vadd.f32 %v569, %v583
  %v638 = vadd.f32 %v570, %v583
  %v639 = vadd.f32 %v571, %v583
  %v640 = vadd.f32 %v572, %v583
  %v641 = vadd.f32 %v573, %v583
  %v642 = vadd.f32 %v574, %v583
  %v643 = vadd.f32 %v575, %v583
  %v644 = vadd.f32 %v576, %v583
  %v645 = vadd.f32 %v577, %v583
  %v646 = vadd.f32 %v578, %v583
  %v647 = vadd.f32 %v579, %v583
  %v648 = vadd.f32 %v580, %v583
  %v649 = vmax.f32 %v585, 0.0
  %v650 = vmax.f32 %v586, 0.0
  %v651 = vmax.f32 %v587, 0.0
  %v652 = vmax.f32 %v588, 0.0
  %v653 = vmax.f32 %v589, 0.0
  %v654 = vmax.f32 %v590, 0.0
  %v655 = vmax.f32 %v591, 0.0
  %v656 = vmax.f32 %v592, 0.0
  %v657 = vmax.f32 %v593, 0.0
  %v658 = vmax.f32 %v594, 0.0
  %v659 = vmax.f32 %v595, 0.0
  %v660 = vmax.f32 %v596, 0.0
  %v661 = vmax.f32 %v597, 0.0
  %v662 = vmax.f32 %v598, 0.0
  %v663 = vmax.f32 %v599, 0.0
  %v664 = vmax.f32 %v600, 0.0
  %v665 = vmax.f32 %v601, 0.0
  %v666 = vmax.f32 %v602, 0.0
  %v667 = vmax.f32 %v603, 0.0
  %v668 = vmax.f32 %v604, 0.0
  %v669 = vmax.f32 %v605, 0.0
  %v670 = vmax.f32 %v606, 0.0
  %v671 = vmax.f32 %v607, 0.0
  %v672 = vmax.f32 %v608, 0.0
  %v673 = vmax.f32 %v609, 0.0
  %v674 = vmax.f32 %v610, 0.0
  %v675 = vmax.f32 %v611, 0.0
  %v676 = vmax.f32 %v612, 0.0
  %v677 = vmax.f32 %v613, 0.0
  %v678 = vmax.f32 %v614, 0.0
  %v679 = vmax.f32 %v615, 0.0
  %v680 = vmax.f32 %v616, 0.0
  %v681 = vmax.f32 %v617, 0.0
  %v682 = vmax.f32 %v618, 0.0
  %v683 = vmax.f32 %v619, 0.0
  %v684 = vmax.f32 %v620, 0.0
  %v685 = vmax.f32 %v621, 0.0
  %v686 = vmax.f32 %v622, 0.0
  %v687 = vmax.f32 %v623, 0.0
  %v688 = vmax.f32 %v624, 0.0
  %v689 = vmax.f32 %v625, 0.0
  %v690 = vmax.f32 %v626, 0.0
  %v691 = vmax.f32 %v627, 0.0
  %v692 = vmax.f32 %v628, 0.0
  %v693 = vmax.f32 %v629, 0.0
  %v694 = vmax.f32 %v630, 0.0
  %v695 = vmax.f32 %v631, 0.0
  %v696 = vmax.f32 %v632, 0.0
  %v697 = vmax.f32 %v633, 0.0
  %v698 = vmax.f32 %v634, 0.0
  %v699 = vmax.f32 %v635, 0.0
  %v700 = vmax.f32 %v636, 0.0
  %v701 = vmax.f32 %v637, 0.0
  %v702 = vmax.f32 %v638, 0.0
  %v703 = vmax.f32 %v639, 0.0
  %v704 = vmax.f32 %v640, 0.0
  %v705 = vmax.f32 %v641, 0.0
  %v706 = vmax.f32 %v642, 0.0
  %v707 = vmax.f32 %v643, 0.0
  %v708 = vmax.f32 %v644, 0.0
  %v709 = vmax.f32 %v645, 0.0
  %v710 = vmax.f32 %v646, 0.0
  %v711 = vmax.f32 %v647, 0.0
  %v712 = vmax.f32 %v648, 0.0
  %v713 = vpack.c.bf16 %v649, %v649
  %v714 = vpack.c.bf16 %v650, %v650
  %v715 = vpack.c.bf16 %v651, %v651
  %v716 = vpack.c.bf16 %v652, %v652
  %v717 = vpack.c.bf16 %v653, %v653
  %v718 = vpack.c.bf16 %v654, %v654
  %v719 = vpack.c.bf16 %v655, %v655
  %v720 = vpack.c.bf16 %v656, %v656
  %v721 = vpack.c.bf16 %v657, %v657
  %v722 = vpack.c.bf16 %v658, %v658
  %v723 = vpack.c.bf16 %v659, %v659
  %v724 = vpack.c.bf16 %v660, %v660
  %v725 = vpack.c.bf16 %v661, %v661
  %v726 = vpack.c.bf16 %v662, %v662
  %v727 = vpack.c.bf16 %v663, %v663
  %v728 = vpack.c.bf16 %v664, %v664
  %v729 = vpack.c.bf16 %v665, %v665
  %v730 = vpack.c.bf16 %v666, %v666
  %v731 = vpack.c.bf16 %v667, %v667
  %v732 = vpack.c.bf16 %v668, %v668
  %v733 = vpack.c.bf16 %v669, %v669
  %v734 = vpack.c.bf16 %v670, %v670
  %v735 = vpack.c.bf16 %v671, %v671
  %v736 = vpack.c.bf16 %v672, %v672
  %v737 = vpack.c.bf16 %v673, %v673
  %v738 = vpack.c.bf16 %v674, %v674
  %v739 = vpack.c.bf16 %v675, %v675
  %v740 = vpack.c.bf16 %v676, %v676
  %v741 = vpack.c.bf16 %v677, %v677
  %v742 = vpack.c.bf16 %v678, %v678
  %v743 = vpack.c.bf16 %v679, %v679
  %v744 = vpack.c.bf16 %v680, %v680
  %v745 = vpack.c.bf16 %v681, %v681
  %v746 = vpack.c.bf16 %v682, %v682
  %v747 = vpack.c.bf16 %v683, %v683
  %v748 = vpack.c.bf16 %v684, %v684
  %v749 = vpack.c.bf16 %v685, %v685
  %v750 = vpack.c.bf16 %v686, %v686
  %v751 = vpack.c.bf16 %v687, %v687
  %v752 = vpack.c.bf16 %v688, %v688
  %v753 = vpack.c.bf16 %v689, %v689
  %v754 = vpack.c.bf16 %v690, %v690
  %v755 = vpack.c.bf16 %v691, %v691
  %v756 = vpack.c.bf16 %v692, %v692
  %v757 = vpack.c.bf16 %v693, %v693
  %v758 = vpack.c.bf16 %v694, %v694
  %v759 = vpack.c.bf16 %v695, %v695
  %v760 = vpack.c.bf16 %v696, %v696
  %v761 = vpack.c.bf16 %v697, %v697
  %v762 = vpack.c.bf16 %v698, %v698
  %v763 = vpack.c.bf16 %v699, %v699
  %v764 = vpack.c.bf16 %v700, %v700
  %v765 = vpack.c.bf16 %v701, %v701
  %v766 = vpack.c.bf16 %v702, %v702
  %v767 = vpack.c.bf16 %v703, %v703
  %v768 = vpack.c.bf16 %v704, %v704
  %v769 = vpack.c.bf16 %v705, %v705
  %v770 = vpack.c.bf16 %v706, %v706
  %v771 = vpack.c.bf16 %v707, %v707
  %v772 = vpack.c.bf16 %v708, %v708
  %v773 = vpack.c.bf16 %v709, %v709
  %v774 = vpack.c.bf16 %v710, %v710
  %v775 = vpack.c.bf16 %v711, %v711
  %v776 = vpack.c.bf16 %v712, %v712
  %vm777 = vcmask 60416
  %778 = vst.msk [vmem:[%s4] sm:$0xf] %vm777, %v713
  %779 = vst.msk [vmem:[%s4 + $0x4] sm:$0xf] %vm777, %v714
  %780 = vst.msk [vmem:[%s4 + $0x8] sm:$0xf] %vm777, %v715
  %781 = vst.msk [vmem:[%s4 + $0xc] sm:$0xf] %vm777, %v716
  %782 = vst.msk [vmem:[%s4 + $0x10] sm:$0xf] %vm777, %v717
  %783 = vst.msk [vmem:[%s4 + $0x14] sm:$0xf] %vm777, %v718
  %784 = vst.msk [vmem:[%s4 + $0x18] sm:$0xf] %vm777, %v719
  %785 = vst.msk [vmem:[%s4 + $0x1c] sm:$0xf] %vm777, %v720
  %786 = vst.msk [vmem:[%s4 + $0x20] sm:$0xf] %vm777, %v721
  %787 = vst.msk [vmem:[%s4 + $0x24] sm:$0xf] %vm777, %v722
  %788 = vst.msk [vmem:[%s4 + $0x28] sm:$0xf] %vm777, %v723
  %789 = vst.msk [vmem:[%s4 + $0x2c] sm:$0xf] %vm777, %v724
  %790 = vst.msk [vmem:[%s4 + $0x30] sm:$0xf] %vm777, %v725
  %791 = vst.msk [vmem:[%s4 + $0x34] sm:$0xf] %vm777, %v726
  %792 = vst.msk [vmem:[%s4 + $0x38] sm:$0xf] %vm777, %v727
  %793 = vst.msk [vmem:[%s4 + $0x3c] sm:$0xf] %vm777, %v728
  %794 = vst.msk [vmem:[%s4 + $0x40] sm:$0xf] %vm777, %v729
  %795 = vst.msk [vmem:[%s4 + $0x44] sm:$0xf] %vm777, %v730
  %796 = vst.msk [vmem:[%s4 + $0x48] sm:$0xf] %vm777, %v731
  %797 = vst.msk [vmem:[%s4 + $0x4c] sm:$0xf] %vm777, %v732
  %798 = vst.msk [vmem:[%s4 + $0x50] sm:$0xf] %vm777, %v733
  %799 = vst.msk [vmem:[%s4 + $0x54] sm:$0xf] %vm777, %v734
  %800 = vst.msk [vmem:[%s4 + $0x58] sm:$0xf] %vm777, %v735
  %801 = vst.msk [vmem:[%s4 + $0x5c] sm:$0xf] %vm777, %v736
  %802 = vst.msk [vmem:[%s4 + $0x60] sm:$0xf] %vm777, %v737
  %803 = vst.msk [vmem:[%s4 + $0x64] sm:$0xf] %vm777, %v738
  %804 = vst.msk [vmem:[%s4 + $0x68] sm:$0xf] %vm777, %v739
  %805 = vst.msk [vmem:[%s4 + $0x6c] sm:$0xf] %vm777, %v740
  %806 = vst.msk [vmem:[%s4 + $0x70] sm:$0xf] %vm777, %v741
  %807 = vst.msk [vmem:[%s4 + $0x74] sm:$0xf] %vm777, %v742
  %808 = vst.msk [vmem:[%s4 + $0x78] sm:$0xf] %vm777, %v743
  %809 = vst.msk [vmem:[%s4 + $0x7c] sm:$0xf] %vm777, %v744
  %810 = vst.msk [vmem:[%s4 + $0x80] sm:$0xf] %vm777, %v745
  %811 = vst.msk [vmem:[%s4 + $0x84] sm:$0xf] %vm777, %v746
  %812 = vst.msk [vmem:[%s4 + $0x88] sm:$0xf] %vm777, %v747
  %813 = vst.msk [vmem:[%s4 + $0x8c] sm:$0xf] %vm777, %v748
  %814 = vst.msk [vmem:[%s4 + $0x90] sm:$0xf] %vm777, %v749
  %815 = vst.msk [vmem:[%s4 + $0x94] sm:$0xf] %vm777, %v750
  %816 = vst.msk [vmem:[%s4 + $0x98] sm:$0xf] %vm777, %v751
  %817 = vst.msk [vmem:[%s4 + $0x9c] sm:$0xf] %vm777, %v752
  %818 = vst.msk [vmem:[%s4 + $0xa0] sm:$0xf] %vm777, %v753
  %819 = vst.msk [vmem:[%s4 + $0xa4] sm:$0xf] %vm777, %v754
  %820 = vst.msk [vmem:[%s4 + $0xa8] sm:$0xf] %vm777, %v755
  %821 = vst.msk [vmem:[%s4 + $0xac] sm:$0xf] %vm777, %v756
  %822 = vst.msk [vmem:[%s4 + $0xb0] sm:$0xf] %vm777, %v757
  %823 = vst.msk [vmem:[%s4 + $0xb4] sm:$0xf] %vm777, %v758
  %824 = vst.msk [vmem:[%s4 + $0xb8] sm:$0xf] %vm777, %v759
  %825 = vst.msk [vmem:[%s4 + $0xbc] sm:$0xf] %vm777, %v760
  %826 = vst.msk [vmem:[%s4 + $0xc0] sm:$0xf] %vm777, %v761
  %827 = vst.msk [vmem:[%s4 + $0xc4] sm:$0xf] %vm777, %v762
  %828 = vst.msk [vmem:[%s4 + $0xc8] sm:$0xf] %vm777, %v763
  %829 = vst.msk [vmem:[%s4 + $0xcc] sm:$0xf] %vm777, %v764
  %830 = vst.msk [vmem:[%s4 + $0xd0] sm:$0xf] %vm777, %v765
  %831 = vst.msk [vmem:[%s4 + $0xd4] sm:$0xf] %vm777, %v766
  %832 = vst.msk [vmem:[%s4 + $0xd8] sm:$0xf] %vm777, %v767
  %833 = vst.msk [vmem:[%s4 + $0xdc] sm:$0xf] %vm777, %v768
  %834 = vst.msk [vmem:[%s4 + $0xe0] sm:$0xf] %vm777, %v769
  %835 = vst.msk [vmem:[%s4 + $0xe4] sm:$0xf] %vm777, %v770
  %836 = vst.msk [vmem:[%s4 + $0xe8] sm:$0xf] %vm777, %v771
  %837 = vst.msk [vmem:[%s4 + $0xec] sm:$0xf] %vm777, %v772
  %838 = vst.msk [vmem:[%s4 + $0xf0] sm:$0xf] %vm777, %v773
  %839 = vst.msk [vmem:[%s4 + $0xf4] sm:$0xf] %vm777, %v774
  %840 = vst.msk [vmem:[%s4 + $0xf8] sm:$0xf] %vm777, %v775
  %841 = vst.msk [vmem:[%s4 + $0xfc] sm:$0xf] %vm777, %v776
  // Predicated region
  $region18: #{downsample_unit_forward.6} parent=0 // pred_check
    _
  $region19: #{downsample_unit_forward.6} parent=0 // pred_check_branch
    %843 = sbr.rel (0) target = $region21
  $region20: #{downsample_unit_forward.6} parent=0 // pred_region
    _
  $region21: #{downsample_unit_forward.6} parent=0 // pred_fallthru
    _
  // Predicated region
  $region22: #{downsample_unit_forward.6} parent=0 // pred_check
    _
  $region23: #{downsample_unit_forward.6} parent=0 // pred_check_branch
    %845 = sbr.rel (0) target = $region25
  $region24: #{downsample_unit_forward.6} parent=0 // pred_region
    _
  $region25: #{downsample_unit_forward.6} parent=0 // pred_fallthru
    _

// kernel: tile.7
$region0: #{tile.7}
  %s0 = inlined_call_operand.vmem [shape: f32[9,8,1,1,16], index: 0, kind: input, shape index: {}]
  %s1 = inlined_call_operand.vmem [shape: f32[9,128], index: 1, kind: output, shape index: {}]
  %v2 = vld [vmem:[%s0] ss:$8 sm:$0xf]
  %v3 = vld [vmem:[%s0] ss:$8 sm:$0xf0]
  %vm4 = vcmask 1047556
  %v5 = vsel %vm4, %v3, %v2
  %vm6 = vcmask 130048
  %7 = vst.msk [vmem:[%s1] sm:$0xff] %vm6, %v5
  %s8 = scalar_lea.vmem %s0, 64
  %v9 = vld [vmem:[%s8] sm:$0x1]
  %vm10 = vcmask 130048
  %s11 = scalar_lea.vmem %s1, 8
  %12 = vst.msk [vmem:[%s11] sm:$0x1] %vm10, %v9
  %s13 = scalar_lea.vmem %s0, 7
  %v14 = vld [vmem:[%s13] ss:$8 sm:$0xf]
  %s15 = scalar_lea.vmem %s0, 7
  %v16 = vld [vmem:[%s15] ss:$8 sm:$0xf0]
  %vm17 = vcmask 1047556
  %v18 = vsel %vm17, %v16, %v14
  %19 = vrot.lane.b32.xlu0 %v18, 112
  %v20 = vpop.permute.xlu0 %19
  %vm21 = vcmask 1048448
  %22 = vst.msk [vmem:[%s1] sm:$0xff] %vm21, %v20
  %s23 = scalar_lea.vmem %s0, 71
  %v24 = vld [vmem:[%s23] sm:$0x1]
  %25 = vrot.lane.b32.xlu0 %v24, 112
  %v26 = vpop.permute.xlu0 %25
  %vm27 = vcmask 1048448
  %s28 = scalar_lea.vmem %s1, 8
  %29 = vst.msk [vmem:[%s28] sm:$0x1] %vm27, %v26
  %s30 = scalar_lea.vmem %s0, 6
  %v31 = vld [vmem:[%s30] ss:$8 sm:$0xf]
  %s32 = scalar_lea.vmem %s0, 6
  %v33 = vld [vmem:[%s32] ss:$8 sm:$0xf0]
  %vm34 = vcmask 1047556
  %v35 = vsel %vm34, %v33, %v31
  %36 = vrot.lane.b32.xlu0 %v35, 96
  %v37 = vpop.permute.xlu0 %36
  %vm38 = vcmask 917248
  %39 = vst.msk [vmem:[%s1] sm:$0xff] %vm38, %v37
  %s40 = scalar_lea.vmem %s0, 70
  %v41 = vld [vmem:[%s40] sm:$0x1]
  %42 = vrot.lane.b32.xlu0 %v41, 96
  %v43 = vpop.permute.xlu0 %42
  %vm44 = vcmask 917248
  %s45 = scalar_lea.vmem %s1, 8
  %46 = vst.msk [vmem:[%s45] sm:$0x1] %vm44, %v43
  %s47 = scalar_lea.vmem %s0, 5
  %v48 = vld [vmem:[%s47] ss:$8 sm:$0xf]
  %s49 = scalar_lea.vmem %s0, 5
  %v50 = vld [vmem:[%s49] ss:$8 sm:$0xf0]
  %vm51 = vcmask 1047556
  %v52 = vsel %vm51, %v50, %v48
  %53 = vrot.lane.b32.xlu0 %v52, 80
  %v54 = vpop.permute.xlu0 %53
  %vm55 = vcmask 786048
  %56 = vst.msk [vmem:[%s1] sm:$0xff] %vm55, %v54
  %s57 = scalar_lea.vmem %s0, 69
  %v58 = vld [vmem:[%s57] sm:$0x1]
  %59 = vrot.lane.b32.xlu0 %v58, 80
  %v60 = vpop.permute.xlu0 %59
  %vm61 = vcmask 786048
  %s62 = scalar_lea.vmem %s1, 8
  %63 = vst.msk [vmem:[%s62] sm:$0x1] %vm61, %v60
  %s64 = scalar_lea.vmem %s0, 4
  %v65 = vld [vmem:[%s64] ss:$8 sm:$0xf]
  %s66 = scalar_lea.vmem %s0, 4
  %v67 = vld [vmem:[%s66] ss:$8 sm:$0xf0]
  %vm68 = vcmask 1047556
  %v69 = vsel %vm68, %v67, %v65
  %70 = vrot.lane.b32.xlu0 %v69, 64
  %v71 = vpop.permute.xlu0 %70
  %vm72 = vcmask 654848
  %73 = vst.msk [vmem:[%s1] sm:$0xff] %vm72, %v71
  %s74 = scalar_lea.vmem %s0, 68
  %v75 = vld [vmem:[%s74] sm:$0x1]
  %76 = vrot.lane.b32.xlu0 %v75, 64
  %v77 = vpop.permute.xlu0 %76
  %vm78 = vcmask 654848
  %s79 = scalar_lea.vmem %s1, 8
  %80 = vst.msk [vmem:[%s79] sm:$0x1] %vm78, %v77
  %s81 = scalar_lea.vmem %s0, 3
  %v82 = vld [vmem:[%s81] ss:$8 sm:$0xf]
  %s83 = scalar_lea.vmem %s0, 3
  %v84 = vld [vmem:[%s83] ss:$8 sm:$0xf0]
  %vm85 = vcmask 1047556
  %v86 = vsel %vm85, %v84, %v82
  %87 = vrot.lane.b32.xlu0 %v86, 48
  %v88 = vpop.permute.xlu0 %87
  %vm89 = vcmask 523648
  %90 = vst.msk [vmem:[%s1] sm:$0xff] %vm89, %v88
  %s91 = scalar_lea.vmem %s0, 67
  %v92 = vld [vmem:[%s91] sm:$0x1]
  %93 = vrot.lane.b32.xlu0 %v92, 48
  %v94 = vpop.permute.xlu0 %93
  %vm95 = vcmask 523648
  %s96 = scalar_lea.vmem %s1, 8
  %97 = vst.msk [vmem:[%s96] sm:$0x1] %vm95, %v94
  %s98 = scalar_lea.vmem %s0, 2
  %v99 = vld [vmem:[%s98] ss:$8 sm:$0xf]
  %s100 = scalar_lea.vmem %s0, 2
  %v101 = vld [vmem:[%s100] ss:$8 sm:$0xf0]
  %vm102 = vcmask 1047556
  %v103 = vsel %vm102, %v101, %v99
  %104 = vrot.lane.b32.xlu0 %v103, 32
  %v105 = vpop.permute.xlu0 %104
  %vm106 = vcmask 392448
  %107 = vst.msk [vmem:[%s1] sm:$0xff] %vm106, %v105
  %s108 = scalar_lea.vmem %s0, 66
  %v109 = vld [vmem:[%s108] sm:$0x1]
  %110 = vrot.lane.b32.xlu0 %v109, 32
  %v111 = vpop.permute.xlu0 %110
  %vm112 = vcmask 392448
  %s113 = scalar_lea.vmem %s1, 8
  %114 = vst.msk [vmem:[%s113] sm:$0x1] %vm112, %v111
  %s115 = scalar_lea.vmem %s0, 1
  %v116 = vld [vmem:[%s115] ss:$8 sm:$0xf]
  %s117 = scalar_lea.vmem %s0, 1
  %v118 = vld [vmem:[%s117] ss:$8 sm:$0xf0]
  %vm119 = vcmask 1047556
  %v120 = vsel %vm119, %v118, %v116
  %121 = vrot.lane.b32.xlu0 %v120, 16
  %v122 = vpop.permute.xlu0 %121
  %vm123 = vcmask 261248
  %124 = vst.msk [vmem:[%s1] sm:$0xff] %vm123, %v122
  %s125 = scalar_lea.vmem %s0, 65
  %v126 = vld [vmem:[%s125] sm:$0x1]
  %127 = vrot.lane.b32.xlu0 %v126, 16
  %v128 = vpop.permute.xlu0 %127
  %vm129 = vcmask 261248
  %s130 = scalar_lea.vmem %s1, 8
  %131 = vst.msk [vmem:[%s130] sm:$0x1] %vm129, %v128

// kernel: downsample_unit_forward.7
$region0: #{downsample_unit_forward.7}
  #allocation0 [shape = 'u32[]', space=smem, size = 0x4, offset = 0x4, fixed_abs, tag = 'smem constant byte address 0x4 - core index']
  #allocation1 [shape = 'u32[72,128]{1,0:T(1,128)}', space=vmem, size = 0x9000, scoped, tag = 'internal scratch']
  %s0 = inlined_call_operand.vmem [shape: bf16[2,4,9,144], index: 0, kind: input, shape index: {}]
  %s1 = inlined_call_operand.vmem [shape: f32[9,128], index: 1, kind: input, shape index: {}]
  %s2 = inlined_call_operand.vmem [shape: bf16[2,8,128], index: 2, kind: output, shape index: {0}]
  %s3 = inlined_call_operand.vmem [shape: f32[2,1,128], index: 3, kind: output, shape index: {1}]
  %s4 = inlined_call_operand.vmem [shape: f32[2,1,128], index: 4, kind: output, shape index: {2}]
  %5 = xla_tuple %s2, %s3, %s4
  %s6 = sld [smem:[#allocation0]]
  $region57: #{downsample_unit_forward.7} parent=0
    _
  %s8 = ssub.s32 1, %s6
  %s9 = scalar_select 0, %s8, %s6
  loop: start=0, step=1, limit=4
  $region2: #{downsample_unit_forward.7} parent=0 // loop_pre_header
    _
  $region3: #{downsample_unit_forward.7} parent=0 // loop_header
    %s11 = sphi 0, %s15
    %p12 = scmp.ge.s32.totalorder %s11, 4
    %s21 = sphi 0, %s23
    %s24 = sphi 0, %s21
    %s25 = sphi 0, %s24
    %s41 = sphi 0, %s25
    %s45 = sphi 0, %s45
    %s47 = sphi 0, %s45
    %s48 = sphi 0, %s47
    %s62 = sphi 0, %s48
    %s68 = sphi 0, %s70
    %s71 = sphi 0, %s68
    %s72 = sphi 0, %s71
    %s88 = sphi 0, %s72
    %s94 = sphi 0, %s96
    %s97 = sphi 0, %s94
    %s98 = sphi 0, %s97
    %s114 = sphi 0, %s98
    %s120 = sphi 0, %s122
    %s123 = sphi 0, %s120
    %s124 = sphi 0, %s123
    %s140 = sphi 0, %s124
  $region4: #{downsample_unit_forward.7} parent=0 // loop_header_branch
    %14 = sbr.rel (%p12) target = $region8
  $region5: #{downsample_unit_forward.7} parent=0 // loop_body
    %s16 = ssub.s32 %s11, 1
    %s17 = ssub.s32 %s11, 2
    %s18 = sadd.s32 %s11, 1
    %s19 = ssub.s32 %s11, %s18
    %p20 = scmp.eq.s32.totalorder %s19, 0
    %s22 = sadd.s32 %s21, 1
    %s23 = scalar_select %p20, %s21, %s22
    %p26 = pneg %p20
    %p27 = scmp.eq.s32.totalorder %s11, 1
    %p28 = por %p26, %p27
    %p29 = scmp.ne.s32.totalorder %s21, %s24
    %p30 = scmp.eq.s32.totalorder %s11, 0
    %p31 = por %p29, %p30
    %p32 = scmp.ne.s32.totalorder %s21, %s24
    %p33 = scmp.eq.s32.totalorder %s16, 1
    %p34 = por %p32, %p33
    %p35 = scmp.ne.s32.totalorder %s24, %s25
    %p36 = scmp.eq.s32.totalorder %s16, 0
    %p37 = por %p35, %p36
    %p38 = scmp.ne.s32.totalorder %s24, %s25
    %p39 = scmp.eq.s32.totalorder %s17, 1
    %p40 = por %p38, %p39
    %p42 = scmp.ne.s32.totalorder %s25, %s41
    %p43 = scmp.eq.s32.totalorder %s17, 0
    %p44 = por %p42, %p43
    %s46 = sadd.s32 %s45, 1
    %p49 = scmp.eq.s32.totalorder %s11, 1
    %p50 = scmp.ne.s32.totalorder %s45, %s47
    %p51 = scmp.eq.s32.totalorder %s11, 0
    %p52 = por %p50, %p51
    %p53 = scmp.ne.s32.totalorder %s45, %s47
    %p54 = scmp.eq.s32.totalorder %s16, 1
    %p55 = por %p53, %p54
    %p56 = scmp.ne.s32.totalorder %s47, %s48
    %p57 = scmp.eq.s32.totalorder %s16, 0
    %p58 = por %p56, %p57
    %p59 = scmp.ne.s32.totalorder %s47, %s48
    %p60 = scmp.eq.s32.totalorder %s17, 1
    %p61 = por %p59, %p60
    %p63 = scmp.ne.s32.totalorder %s48, %s62
    %p64 = scmp.eq.s32.totalorder %s17, 0
    %p65 = por %p63, %p64
    %s66 = ssub.s32 %s11, %s18
    %p67 = scmp.eq.s32.totalorder %s66, 0
    %s69 = sadd.s32 %s68, 1
    %s70 = scalar_select %p67, %s68, %s69
    %p73 = pneg %p67
    %p74 = scmp.eq.s32.totalorder %s11, 1
    %p75 = por %p73, %p74
    %p76 = scmp.ne.s32.totalorder %s68, %s71
    %p77 = scmp.eq.s32.totalorder %s11, 0
    %p78 = por %p76, %p77
    %p79 = scmp.ne.s32.totalorder %s68, %s71
    %p80 = scmp.eq.s32.totalorder %s16, 1
    %p81 = por %p79, %p80
    %p82 = scmp.ne.s32.totalorder %s71, %s72
    %p83 = scmp.eq.s32.totalorder %s16, 0
    %p84 = por %p82, %p83
    %p85 = scmp.ne.s32.totalorder %s71, %s72
    %p86 = scmp.eq.s32.totalorder %s17, 1
    %p87 = por %p85, %p86
    %p89 = scmp.ne.s32.totalorder %s72, %s88
    %p90 = scmp.eq.s32.totalorder %s17, 0
    %p91 = por %p89, %p90
    %s92 = ssub.s32 %s11, %s18
    %p93 = scmp.eq.s32.totalorder %s92, 0
    %s95 = sadd.s32 %s94, 1
    %s96 = scalar_select %p93, %s94, %s95
    %p99 = pneg %p93
    %p100 = scmp.eq.s32.totalorder %s11, 1
    %p101 = por %p99, %p100
    %p102 = scmp.ne.s32.totalorder %s94, %s97
    %p103 = scmp.eq.s32.totalorder %s11, 0
    %p104 = por %p102, %p103
    %p105 = scmp.ne.s32.totalorder %s94, %s97
    %p106 = scmp.eq.s32.totalorder %s16, 1
    %p107 = por %p105, %p106
    %p108 = scmp.ne.s32.totalorder %s97, %s98
    %p109 = scmp.eq.s32.totalorder %s16, 0
    %p110 = por %p108, %p109
    %p111 = scmp.ne.s32.totalorder %s97, %s98
    %p112 = scmp.eq.s32.totalorder %s17, 1
    %p113 = por %p111, %p112
    %p115 = scmp.ne.s32.totalorder %s98, %s114
    %p116 = scmp.eq.s32.totalorder %s17, 0
    %p117 = por %p115, %p116
    %s118 = ssub.s32 %s11, %s18
    %p119 = scmp.eq.s32.totalorder %s118, 0
    %s121 = sadd.s32 %s120, 1
    %s122 = scalar_select %p119, %s120, %s121
    %p125 = pneg %p119
    %p126 = scmp.eq.s32.totalorder %s11, 1
    %p127 = por %p125, %p126
    %p128 = scmp.ne.s32.totalorder %s120, %s123
    %p129 = scmp.eq.s32.totalorder %s11, 0
    %p130 = por %p128, %p129
    %p131 = scmp.ne.s32.totalorder %s120, %s123
    %p132 = scmp.eq.s32.totalorder %s16, 1
    %p133 = por %p131, %p132
    %p134 = scmp.ne.s32.totalorder %s123, %s124
    %p135 = scmp.eq.s32.totalorder %s16, 0
    %p136 = por %p134, %p135
    %p137 = scmp.ne.s32.totalorder %s123, %s124
    %p138 = scmp.eq.s32.totalorder %s17, 1
    %p139 = por %p137, %p138
    %p141 = scmp.ne.s32.totalorder %s124, %s140
    %p142 = scmp.eq.s32.totalorder %s17, 0
    %p143 = por %p141, %p142
    %p144 = scmp.le.s32.totalorder 1, %s11
    %p145 = scmp.lt.s32.totalorder %s11, 3
    %p146 = pnand %p144, %p145
    %p147 = pneg %p146
    // Predicated region
    $region9: #{downsample_unit_forward.7} parent=5 // pred_check
      _
    $region10: #{downsample_unit_forward.7} parent=5 // pred_check_branch
      %149 = sbr.rel (%p146) target = $region12
    $region11: #{downsample_unit_forward.7} parent=5 // pred_region
      %s150 = ssub.s32 %s11, 1
      // Predicated region
      $region13: #{downsample_unit_forward.7} parent=11 // pred_check
        %p151 = pneg %p58
      $region14: #{downsample_unit_forward.7} parent=11 // pred_check_branch
        %153 = sbr.rel (%p151) target = $region16
      $region15: #{downsample_unit_forward.7} parent=11 // pred_region
        _
      $region16: #{downsample_unit_forward.7} parent=11 // pred_fallthru
        _
    $region12: #{downsample_unit_forward.7} parent=5 // pred_fallthru
      _
    %p154 = scmp.lt.s32.totalorder %s11, 2
    // Predicated region
    $region17: #{downsample_unit_forward.7} parent=5 // pred_check
      %p155 = pneg %p154
    $region18: #{downsample_unit_forward.7} parent=5 // pred_check_branch
      %157 = sbr.rel (%p155) target = $region20
    $region19: #{downsample_unit_forward.7} parent=5 // pred_region
      // Predicated region
      $region21: #{downsample_unit_forward.7} parent=19 // pred_check
        %p158 = pneg %p31
      $region22: #{downsample_unit_forward.7} parent=19 // pred_check_branch
        %160 = sbr.rel (%p158) target = $region24
      $region23: #{downsample_unit_forward.7} parent=19 // pred_region
        %p161 = scmp.lt.s32.totalorder %s11, 1
        %s162 = scalar_select %p161, %s11, 1
        %s163 = smul.addr %s162, 16
        %s164 = smul.addr %s163, 4
        %s165 = scalar_lea.vmem %s0, %s164
      $region24: #{downsample_unit_forward.7} parent=19 // pred_fallthru
        _
    $region20: #{downsample_unit_forward.7} parent=5 // pred_fallthru
      _
    %p166 = scmp.le.s32.totalorder 1, %s11
    %p167 = scmp.lt.s32.totalorder %s11, 3
    %p168 = pnand %p166, %p167
    %p169 = pneg %p168
    // Predicated region
    $region25: #{downsample_unit_forward.7} parent=5 // pred_check
      _
    $region26: #{downsample_unit_forward.7} parent=5 // pred_check_branch
      %171 = sbr.rel (%p168) target = $region28
    $region27: #{downsample_unit_forward.7} parent=5 // pred_region
      %s172 = ssub.s32 %s11, 1
      %p173 = scmp.lt.s32.totalorder %s16, 1
      %s174 = scalar_select %p173, %s16, 1
      %s175 = smul.addr %s174, 16
      %s176 = smul.addr %s175, 4
      %s177 = scalar_lea.vmem %s0, %s176
      %p178 = pneg %p37
      %p179 = pneg %p34
      %p180 = pneg %p58
      %p181 = pneg %p55
      %p182 = pneg %p84
      %p183 = pneg %p81
      %p184 = scmp.lt.s32.totalorder %s16, 1
      %s185 = scalar_select %p184, %s16, 1
      %s186 = smul.addr %s185, 4
      %s187 = scalar_lea.vmem %s2, %s186
      %p188 = pneg %p110
      %p189 = pneg %p107
      %p190 = scmp.lt.s32.totalorder %s16, 1
      %s191 = scalar_select %p190, %s16, 1
      %s192 = scalar_lea.vmem %s3, %s191
      %p193 = pneg %p136
      %p194 = pneg %p133
      %p195 = scmp.lt.s32.totalorder %s16, 1
      %s196 = scalar_select %p195, %s16, 1
      %s197 = scalar_lea.vmem %s4, %s196
      %p198 = scmp.lt.s32.totalorder %s16, 1
      %s199 = scalar_select %p198, %s16, 1
      %s200 = smul.addr %s199, 16
      %s201 = smul.addr %s200, 4
      %s202 = scalar_lea.vmem %s0, %s201
      %p203 = scmp.lt.s32.totalorder %s16, 1
      %s204 = scalar_select %p203, %s16, 1
      %s205 = smul.addr %s204, 4
      %s206 = scalar_lea.vmem %s2, %s205
      %p207 = scmp.lt.s32.totalorder %s16, 1
      %s208 = scalar_select %p207, %s16, 1
      %s209 = scalar_lea.vmem %s3, %s208
      %p210 = scmp.lt.s32.totalorder %s16, 1
      %s211 = scalar_select %p210, %s16, 1
      %s212 = scalar_lea.vmem %s4, %s211
      %v213 = vld [vmem:[%s202] sm:$0xff]
      %v214 = vld [vmem:[%s202 + $0x8] sm:$0x11]
      %v215 = vunpack.c.l.bf16 %v213
      %v216 = vunpack.c.h.bf16 %v213
      %v217 = vunpack.c.l.bf16 %v214
      %v218 = vunpack.c.h.bf16 %v214
      %s219 = scalar_lea.vmem %s202, 16
      %v220 = vld [vmem:[%s219] sm:$0xff]
      %v221 = vld [vmem:[%s219 + $0x8] sm:$0x11]
      %v222 = vunpack.c.l.bf16 %v220
      %v223 = vunpack.c.l.bf16 %v221
      %s224 = scalar_lea.vmem %s202, 32
      %v225 = vld [vmem:[%s224] sm:$0xff]
      %v226 = vunpack.c.l.bf16 %v225
      %v227 = vunpack.c.h.bf16 %v225
      %s228 = scalar_lea.vmem %s202, 48
      %v229 = vld [vmem:[%s228] sm:$0xff]
      %v230 = vunpack.c.l.bf16 %v229
      %v231 = vld [vmem:[%s1] sm:$0x1]
      %v232 = vperm.slane %v231, 0
      %v233 = vmul.f32 %v215, %v232
      %v234 = vld [vmem:[%s1 + $0x1] sm:$0x1]
      %v235 = vperm.slane %v234, 0
      %v236 = vmul.f32 %v222, %v235
      %v237 = vadd.f32 %v233, %v236
      %v238 = vld [vmem:[%s1 + $0x2] sm:$0x1]
      %v239 = vperm.slane %v238, 0
      %241 = vrot.lane.b32.xlu0 %v239, 16
      %v242 = vpop.permute.xlu0 %241
      %v244 = vmul.f32 %v215, %v242
      %v245 = vmul.f32 %v216, %v242
      %248 = vrot.lane.b32.xlu0 %v244, 112
      %v249 = vpop.permute.xlu0 %248
      %250 = vrot.lane.b32.xlu0 %v245, 112
      %v251 = vpop.permute.xlu0 %250
      %vm252 = vcmask 916480
      %v253 = vsel %vm252, %v249, %v251
      %v255 = vadd.f32 %v237, %v253
      %v256 = vld [vmem:[%s1 + $0x3] sm:$0x1]
      %v257 = vperm.slane %v256, 0
      %v258 = vmul.f32 %v226, %v257
      %v259 = vadd.f32 %v255, %v258
      %v260 = vld [vmem:[%s1 + $0x4] sm:$0x1]
      %v261 = vperm.slane %v260, 0
      %v262 = vmul.f32 %v230, %v261
      %v263 = vadd.f32 %v259, %v262
      %v264 = vld [vmem:[%s1 + $0x5] sm:$0x1]
      %v265 = vperm.slane %v264, 0
      %267 = vrot.lane.b32.xlu0 %v265, 16
      %v268 = vpop.permute.xlu0 %267
      %v270 = vmul.f32 %v226, %v268
      %v271 = vmul.f32 %v227, %v268
      %274 = vrot.lane.b32.xlu0 %v270, 112
      %v275 = vpop.permute.xlu0 %274
      %276 = vrot.lane.b32.xlu0 %v271, 112
      %v277 = vpop.permute.xlu0 %276
      %v278 = vsel %vm252, %v275, %v277
      %v280 = vadd.f32 %v263, %v278
      %v281 = vld [vmem:[%s1 + $0x6] sm:$0x1]
      %v282 = vperm.slane %v281, 0
      %v283 = vmul.f32 %v215, %v282
      %v284 = vmul.f32 %v217, %v282
      %vm287 = vcmask 1046528
      %v288 = vrot.slane %v283, 1
      %v289 = vrot.slane %v284, 1
      %v290 = vsel %vm287, %v288, %v289
      %v292 = vadd.f32 %v280, %v290
      %v293 = vld [vmem:[%s1 + $0x7] sm:$0x1]
      %v294 = vperm.slane %v293, 0
      %v295 = vmul.f32 %v222, %v294
      %v296 = vmul.f32 %v223, %v294
      %v299 = vrot.slane %v295, 1
      %v300 = vrot.slane %v296, 1
      %v301 = vsel %vm287, %v299, %v300
      %v303 = vadd.f32 %v292, %v301
      %v304 = vld [vmem:[%s1 + $0x8] sm:$0x1]
      %v305 = vperm.slane %v304, 0
      %307 = vrot.lane.b32.xlu0 %v305, 16
      %v308 = vpop.permute.xlu0 %307
      %v310 = vmul.f32 %v215, %v308
      %v311 = vmul.f32 %v216, %v308
      %v312 = vmul.f32 %v217, %v308
      %v313 = vmul.f32 %v218, %v308
      %v318 = vrot.slane %v310, 1
      %v319 = vrot.slane %v312, 1
      %v320 = vsel %vm287, %v318, %v319
      %v321 = vrot.slane %v311, 1
      %v322 = vrot.slane %v313, 1
      %v323 = vsel %vm287, %v321, %v322
      %324 = vrot.lane.b32.xlu0 %v320, 112
      %v325 = vpop.permute.xlu0 %324
      %326 = vrot.lane.b32.xlu0 %v323, 112
      %v327 = vpop.permute.xlu0 %326
      %v328 = vsel %vm252, %v325, %v327
      %v330 = vadd.f32 %v303, %v328
      %v331 = vpack.c.bf16 %v330, %v330
      %332 = vst [vmem:[%s206] sm:$0xf] %v331
      %v333 = vrot.slane %v330, 4
      %v334 = vadd.f32 %v330, %v333
      %v335 = vrot.slane %v334, 2
      %v336 = vadd.f32 %v334, %v335
      %v337 = vrot.slane %v336, 1
      %v338 = vadd.f32 %v336, %v337
      %339 = vst [vmem:[%s209] sm:$0x1] %v338
      %v340 = vmul.f32 %v330, %v330
      %v341 = vrot.slane %v340, 4
      %v342 = vadd.f32 %v340, %v341
      %v343 = vrot.slane %v342, 2
      %v344 = vadd.f32 %v342, %v343
      %v345 = vrot.slane %v344, 1
      %v346 = vadd.f32 %v344, %v345
      %347 = vst [vmem:[%s212] sm:$0x1] %v346
      %p348 = scmp.lt.s32.totalorder %s16, 1
      %s349 = scalar_select %p348, %s16, 1
      %s350 = smul.addr %s349, 4
      %s351 = scalar_lea.vmem %s2, %s350
      %p352 = scmp.lt.s32.totalorder %s16, 1
      %s353 = scalar_select %p352, %s16, 1
      %s354 = scalar_lea.vmem %s3, %s353
      %p355 = scmp.lt.s32.totalorder %s16, 1
      %s356 = scalar_select %p355, %s16, 1
      %s357 = scalar_lea.vmem %s4, %s356
      // Predicated region
      $region29: #{downsample_unit_forward.7} parent=27 // pred_check
        %p358 = pneg %p81
      $region30: #{downsample_unit_forward.7} parent=27 // pred_check_branch
        %360 = sbr.rel (%p358) target = $region32
      $region31: #{downsample_unit_forward.7} parent=27 // pred_region
        _
      $region32: #{downsample_unit_forward.7} parent=27 // pred_fallthru
        _
      // Predicated region
      $region33: #{downsample_unit_forward.7} parent=27 // pred_check
        %p361 = pneg %p107
      $region34: #{downsample_unit_forward.7} parent=27 // pred_check_branch
        %363 = sbr.rel (%p361) target = $region36
      $region35: #{downsample_unit_forward.7} parent=27 // pred_region
        _
      $region36: #{downsample_unit_forward.7} parent=27 // pred_fallthru
        _
      // Predicated region
      $region37: #{downsample_unit_forward.7} parent=27 // pred_check
        %p364 = pneg %p133
      $region38: #{downsample_unit_forward.7} parent=27 // pred_check_branch
        %366 = sbr.rel (%p364) target = $region40
      $region39: #{downsample_unit_forward.7} parent=27 // pred_region
        _
      $region40: #{downsample_unit_forward.7} parent=27 // pred_fallthru
        _
    $region28: #{downsample_unit_forward.7} parent=5 // pred_fallthru
      _
    %p367 = scmp.le.s32.totalorder 2, %s11
    // Predicated region
    $region41: #{downsample_unit_forward.7} parent=5 // pred_check
      %p368 = pneg %p367
    $region42: #{downsample_unit_forward.7} parent=5 // pred_check_branch
      %370 = sbr.rel (%p368) target = $region44
    $region43: #{downsample_unit_forward.7} parent=5 // pred_region
      %s371 = ssub.s32 %s11, 2
      // Predicated region
      $region45: #{downsample_unit_forward.7} parent=43 // pred_check
        %p372 = pneg %p87
      $region46: #{downsample_unit_forward.7} parent=43 // pred_check_branch
        %374 = sbr.rel (%p372) target = $region48
      $region47: #{downsample_unit_forward.7} parent=43 // pred_region
        %p375 = scmp.lt.s32.totalorder %s17, 1
        %s376 = scalar_select %p375, %s17, 1
        %s377 = smul.addr %s376, 4
        %s378 = scalar_lea.vmem %s2, %s377
      $region48: #{downsample_unit_forward.7} parent=43 // pred_fallthru
        _
      // Predicated region
      $region49: #{downsample_unit_forward.7} parent=43 // pred_check
        %p379 = pneg %p113
      $region50: #{downsample_unit_forward.7} parent=43 // pred_check_branch
        %381 = sbr.rel (%p379) target = $region52
      $region51: #{downsample_unit_forward.7} parent=43 // pred_region
        %p382 = scmp.lt.s32.totalorder %s17, 1
        %s383 = scalar_select %p382, %s17, 1
        %s384 = scalar_lea.vmem %s3, %s383
      $region52: #{downsample_unit_forward.7} parent=43 // pred_fallthru
        _
      // Predicated region
      $region53: #{downsample_unit_forward.7} parent=43 // pred_check
        %p385 = pneg %p139
      $region54: #{downsample_unit_forward.7} parent=43 // pred_check_branch
        %387 = sbr.rel (%p385) target = $region56
      $region55: #{downsample_unit_forward.7} parent=43 // pred_region
        %p388 = scmp.lt.s32.totalorder %s17, 1
        %s389 = scalar_select %p388, %s17, 1
        %s390 = scalar_lea.vmem %s4, %s389
      $region56: #{downsample_unit_forward.7} parent=43 // pred_fallthru
        _
    $region44: #{downsample_unit_forward.7} parent=5 // pred_fallthru
      _
  $region6: #{downsample_unit_forward.7} parent=0 // loop_footer
    %s15 = sadd.s32 1, %s11
  $region7: #{downsample_unit_forward.7} parent=0 // loop_footer_branch
    %10 = sbr.rel target = $region3
  $region8: #{downsample_unit_forward.7} parent=0 // loop_exit
    _

// kernel: downsample_unit_forward.9
$region0: #{downsample_unit_forward.9}
  #allocation0 [shape = 'u32[]', space=smem, size = 0x4, offset = 0x4, fixed_abs, tag = 'smem constant byte address 0x4 - core index']
  #allocation1 [shape = 'u32[72,128]{1,0:T(1,128)}', space=vmem, size = 0x9000, scoped, tag = 'internal scratch']
  %s0 = inlined_call_operand.vmem [shape: bf16[128,16], index: 0, kind: input, shape index: {}]
  %s1 = inlined_call_operand.vmem [shape: bf16[16,16], index: 1, kind: input, shape index: {}]
  %s2 = inlined_call_operand.vmem [shape: f32[1,16], index: 2, kind: input, shape index: {}]
  %s3 = inlined_call_operand.vmem [shape: f32[1,16], index: 3, kind: input, shape index: {}]
  %s4 = inlined_call_operand.hbm [shape: f32[128,16], index: 4, kind: output, shape index: {}]
  %s5 = sld [smem:[#allocation0]]
  $region26: #{downsample_unit_forward.9} parent=0
    _
  %s7 = ssub.s32 1, %s5
  %s8 = scalar_select 0, %s7, %s5
  $region1: #{downsample_unit_forward.9} parent=0
    #allocation2 [shape = 'u8[65536]{0}', space=vmem, size = 0x10000, scoped, tag = 'output window, operand 0, single buffered']
    #allocation3 [shape = 's32[1]{0}', space=sflag, size = 0x4, scoped, tag = 'scoped memory for downsample_unit_forward.9']
    %9 = vsyncpa [#allocation3], 0
    // Predicated region
    $region2: #{downsample_unit_forward.9} parent=1 // pred_check
      _
    $region3: #{downsample_unit_forward.9} parent=1 // pred_check_branch
      %11 = sbr.rel (0) target = $region5
    $region4: #{downsample_unit_forward.9} parent=1 // pred_region
      _
    $region5: #{downsample_unit_forward.9} parent=1 // pred_fallthru
      _
    // Predicated region
    $region6: #{downsample_unit_forward.9} parent=1 // pred_check
      _
    $region7: #{downsample_unit_forward.9} parent=1 // pred_check_branch
      %13 = sbr.rel (0) target = $region9
    $region8: #{downsample_unit_forward.9} parent=1 // pred_region
      _
    $region9: #{downsample_unit_forward.9} parent=1 // pred_fallthru
      _
    // Predicated region
    $region10: #{downsample_unit_forward.9} parent=1 // pred_check
      _
    $region11: #{downsample_unit_forward.9} parent=1 // pred_check_branch
      %15 = sbr.rel (0) target = $region13
    $region12: #{downsample_unit_forward.9} parent=1 // pred_region
      _
    $region13: #{downsample_unit_forward.9} parent=1 // pred_fallthru
      _
    // Predicated region
    $region14: #{downsample_unit_forward.9} parent=1 // pred_check
      _
    $region15: #{downsample_unit_forward.9} parent=1 // pred_check_branch
      %17 = sbr.rel (0) target = $region17
    $region16: #{downsample_unit_forward.9} parent=1 // pred_region
      _
    $region17: #{downsample_unit_forward.9} parent=1 // pred_fallthru
      _
    %v19 = vld [vmem:[%s0] sm:$0xf]
    %v20 = vld [vmem:[%s0 + $0x4] sm:$0xf]
    %v21 = vld [vmem:[%s0 + $0x8] sm:$0xf]
    %v22 = vld [vmem:[%s0 + $0xc] sm:$0xf]
    %v23 = vld [vmem:[%s0 + $0x10] sm:$0xf]
    %v24 = vld [vmem:[%s0 + $0x14] sm:$0xf]
    %v25 = vld [vmem:[%s0 + $0x18] sm:$0xf]
    %v26 = vld [vmem:[%s0 + $0x1c] sm:$0xf]
    %v27 = vld [vmem:[%s0 + $0x20] sm:$0xf]
    %v28 = vld [vmem:[%s0 + $0x24] sm:$0xf]
    %v29 = vld [vmem:[%s0 + $0x28] sm:$0xf]
    %v30 = vld [vmem:[%s0 + $0x2c] sm:$0xf]
    %v31 = vld [vmem:[%s0 + $0x30] sm:$0xf]
    %v32 = vld [vmem:[%s0 + $0x34] sm:$0xf]
    %v33 = vld [vmem:[%s0 + $0x38] sm:$0xf]
    %v34 = vld [vmem:[%s0 + $0x3c] sm:$0xf]
    %v35 = vld [vmem:[%s1] sm:$0xf]
    %v36 = vld [vmem:[%s1 + $0x4] sm:$0xf]
    %v53 = vunpack.c.l.b16 %v19
    %v54 = vunpack.c.l.b16 %v20
    %v55 = vunpack.c.l.b16 %v21
    %v56 = vunpack.c.l.b16 %v22
    %v57 = vunpack.c.l.b16 %v23
    %v58 = vunpack.c.l.b16 %v24
    %v59 = vunpack.c.l.b16 %v25
    %v60 = vunpack.c.l.b16 %v26
    %v61 = vunpack.c.l.b16 %v27
    %v62 = vunpack.c.l.b16 %v28
    %v63 = vunpack.c.l.b16 %v29
    %v64 = vunpack.c.l.b16 %v30
    %v65 = vunpack.c.l.b16 %v31
    %v66 = vunpack.c.l.b16 %v32
    %v67 = vunpack.c.l.b16 %v33
    %v68 = vunpack.c.l.b16 %v34
    %v69 = vpack.c.b16 %v54, %v53
    %v70 = vpack.c.b16 %v56, %v55
    %v71 = vpack.c.b16 %v58, %v57
    %v72 = vpack.c.b16 %v60, %v59
    %v73 = vpack.c.b16 %v62, %v61
    %v74 = vpack.c.b16 %v64, %v63
    %v75 = vpack.c.b16 %v66, %v65
    %v76 = vpack.c.b16 %v68, %v67
    %v79 = vunpack.c.l.b16 %v35
    %v80 = vunpack.c.l.b16 %v36
    %v81 = vpack.c.b16 %v80, %v79
    %vm83 = vcmask 130048
    %v85 = vsel %vm83, %v69, 0
    %v88 = vsel %vm83, %v70, 0
    %v91 = vsel %vm83, %v71, 0
    %v94 = vsel %vm83, %v72, 0
    %v97 = vsel %vm83, %v73, 0
    %v100 = vsel %vm83, %v74, 0
    %v103 = vsel %vm83, %v75, 0
    %v106 = vsel %vm83, %v76, 0
    %108 = vmatpush.bf16.msra.mxu0 0
    %109 = vmatpush.bf16.msra.mxu0 0
    %110 = vmatpush.bf16.msra.mxu0 0
    %111 = vmatpush.bf16.msra.mxu0 0
    %112 = vmatpush.bf16.msra.mxu0 0
    %113 = vmatpush.bf16.msra.mxu0 0
    %114 = vmatpush.bf16.msra.mxu0 0
    %115 = vmatpush.bf16.msra.mxu0 %v81
    %116 = vmatmul.bf16.gmra.mxu0 %v85
    %v117 = vpop.f32.mrf.mxu0
    %v118 = vadd.f32 0.0, %v117
    %v119 = vpop.f32.mrf.mxu0
    %v120 = vadd.f32 0.0, %v119
    %121 = vmatmul.bf16.gmra.mxu0 %v88
    %v122 = vpop.f32.mrf.mxu0
    %v123 = vadd.f32 0.0, %v122
    %v124 = vpop.f32.mrf.mxu0
    %v125 = vadd.f32 0.0, %v124
    %126 = vmatmul.bf16.gmra.mxu0 %v91
    %v127 = vpop.f32.mrf.mxu0
    %v128 = vadd.f32 0.0, %v127
    %v129 = vpop.f32.mrf.mxu0
    %v130 = vadd.f32 0.0, %v129
    %131 = vmatmul.bf16.gmra.mxu0 %v94
    %v132 = vpop.f32.mrf.mxu0
    %v133 = vadd.f32 0.0, %v132
    %v134 = vpop.f32.mrf.mxu0
    %v135 = vadd.f32 0.0, %v134
    %136 = vmatmul.bf16.gmra.mxu0 %v97
    %v137 = vpop.f32.mrf.mxu0
    %v138 = vadd.f32 0.0, %v137
    %v139 = vpop.f32.mrf.mxu0
    %v140 = vadd.f32 0.0, %v139
    %141 = vmatmul.bf16.gmra.mxu0 %v100
    %v142 = vpop.f32.mrf.mxu0
    %v143 = vadd.f32 0.0, %v142
    %v144 = vpop.f32.mrf.mxu0
    %v145 = vadd.f32 0.0, %v144
    %146 = vmatmul.bf16.gmra.mxu0 %v103
    %v147 = vpop.f32.mrf.mxu0
    %v148 = vadd.f32 0.0, %v147
    %v149 = vpop.f32.mrf.mxu0
    %v150 = vadd.f32 0.0, %v149
    %151 = vmatmul.bf16.gmra.mxu0 %v106
    %v152 = vpop.f32.mrf.mxu0
    %v153 = vadd.f32 0.0, %v152
    %v154 = vpop.f32.mrf.mxu0
    %v155 = vadd.f32 0.0, %v154
    %156 = vdwg.mxu0
    %v157 = vld [vmem:[%s2] sm:$0x1]
    %v159 = vperm.slane %v157, 0
    %v161 = vmul.f32 %v118, %v159
    %v162 = vmul.f32 %v120, %v159
    %v163 = vmul.f32 %v123, %v159
    %v164 = vmul.f32 %v125, %v159
    %v165 = vmul.f32 %v128, %v159
    %v166 = vmul.f32 %v130, %v159
    %v167 = vmul.f32 %v133, %v159
    %v168 = vmul.f32 %v135, %v159
    %v169 = vmul.f32 %v138, %v159
    %v170 = vmul.f32 %v140, %v159
    %v171 = vmul.f32 %v143, %v159
    %v172 = vmul.f32 %v145, %v159
    %v173 = vmul.f32 %v148, %v159
    %v174 = vmul.f32 %v150, %v159
    %v175 = vmul.f32 %v153, %v159
    %v176 = vmul.f32 %v155, %v159
    %v177 = vld [vmem:[%s3] sm:$0x1]
    %v179 = vperm.slane %v177, 0
    %v181 = vadd.f32 %v161, %v179
    %v182 = vadd.f32 %v162, %v179
    %v183 = vadd.f32 %v163, %v179
    %v184 = vadd.f32 %v164, %v179
    %v185 = vadd.f32 %v165, %v179
    %v186 = vadd.f32 %v166, %v179
    %v187 = vadd.f32 %v167, %v179
    %v188 = vadd.f32 %v168, %v179
    %v189 = vadd.f32 %v169, %v179
    %v190 = vadd.f32 %v170, %v179
    %v191 = vadd.f32 %v171, %v179
    %v192 = vadd.f32 %v172, %v179
    %v193 = vadd.f32 %v173, %v179
    %v194 = vadd.f32 %v174, %v179
    %v195 = vadd.f32 %v175, %v179
    %v196 = vadd.f32 %v176, %v179
    %v197 = vmax.f32 %v181, 0.0
    %v198 = vmax.f32 %v182, 0.0
    %v199 = vmax.f32 %v183, 0.0
    %v200 = vmax.f32 %v184, 0.0
    %v201 = vmax.f32 %v185, 0.0
    %v202 = vmax.f32 %v186, 0.0
    %v203 = vmax.f32 %v187, 0.0
    %v204 = vmax.f32 %v188, 0.0
    %v205 = vmax.f32 %v189, 0.0
    %v206 = vmax.f32 %v190, 0.0
    %v207 = vmax.f32 %v191, 0.0
    %v208 = vmax.f32 %v192, 0.0
    %v209 = vmax.f32 %v193, 0.0
    %v210 = vmax.f32 %v194, 0.0
    %v211 = vmax.f32 %v195, 0.0
    %v212 = vmax.f32 %v196, 0.0
    %213 = vst.msk [vmem:[#allocation2] sm:$0xff] %vm83, %v197
    %214 = vst.msk [vmem:[#allocation2 + $0x8] sm:$0xff] %vm83, %v198
    %215 = vst.msk [vmem:[#allocation2 + $0x10] sm:$0xff] %vm83, %v199
    %216 = vst.msk [vmem:[#allocation2 + $0x18] sm:$0xff] %vm83, %v200
    %217 = vst.msk [vmem:[#allocation2 + $0x20] sm:$0xff] %vm83, %v201
    %218 = vst.msk [vmem:[#allocation2 + $0x28] sm:$0xff] %vm83, %v202
    %219 = vst.msk [vmem:[#allocation2 + $0x30] sm:$0xff] %vm83, %v203
    %220 = vst.msk [vmem:[#allocation2 + $0x38] sm:$0xff] %vm83, %v204
    %221 = vst.msk [vmem:[#allocation2 + $0x40] sm:$0xff] %vm83, %v205
    %222 = vst.msk [vmem:[#allocation2 + $0x48] sm:$0xff] %vm83, %v206
    %223 = vst.msk [vmem:[#allocation2 + $0x50] sm:$0xff] %vm83, %v207
    %224 = vst.msk [vmem:[#allocation2 + $0x58] sm:$0xff] %vm83, %v208
    %225 = vst.msk [vmem:[#allocation2 + $0x60] sm:$0xff] %vm83, %v209
    %226 = vst.msk [vmem:[#allocation2 + $0x68] sm:$0xff] %vm83, %v210
    %227 = vst.msk [vmem:[#allocation2 + $0x70] sm:$0xff] %vm83, %v211
    %228 = vst.msk [vmem:[#allocation2 + $0x78] sm:$0xff] %vm83, %v212
    // Predicated region
    $region18: #{downsample_unit_forward.9} parent=1 // pred_check
      _
    $region19: #{downsample_unit_forward.9} parent=1 // pred_check_branch
      %230 = sbr.rel (0) target = $region21
    $region20: #{downsample_unit_forward.9} parent=1 // pred_region
      %232 = vsyncadd [#allocation3], 0
      %s233 = sshll.u32 [#allocation2], 4
      %s234 = int_to_ptr.vmem [resolvable:$true] %s233
      %s235 = sshll.u32 %s4, 4
      %s236 = int_to_ptr.hbm [resolvable:$true] %s235
      %241 = dma.vmem_to_hbm [thread:$0]  %s234, 2048, %s236, [#allocation3], 128, 128, 8
    $region21: #{downsample_unit_forward.9} parent=1 // pred_fallthru
      _
    // Predicated region
    $region22: #{downsample_unit_forward.9} parent=1 // pred_check
      _
    $region23: #{downsample_unit_forward.9} parent=1 // pred_check_branch
      %243 = sbr.rel (0) target = $region25
    $region24: #{downsample_unit_forward.9} parent=1 // pred_region
      %245 = dma.done [#allocation3], 2048
    $region25: #{downsample_unit_forward.9} parent=1 // pred_fallthru
      _
    %246 = vsyncpa [#allocation3], 1

// kernel: downsample_unit_forward.8
$region0: #{downsample_unit_forward.8}
  #allocation0 [shape = 'u32[]', space=smem, size = 0x4, offset = 0x4, fixed_abs, tag = 'smem constant byte address 0x4 - core index']
  #allocation1 [shape = 'u32[72,128]{1,0:T(1,128)}', space=vmem, size = 0x9000, scoped, tag = 'internal scratch']
  %s0 = inlined_call_operand.vmem [shape: bf16[128,16], index: 0, kind: input, shape index: {}]
  %s1 = inlined_call_operand.vmem [shape: bf16[16,16], index: 1, kind: input, shape index: {}]
  %s2 = inlined_call_operand.vmem [shape: f32[1,16], index: 2, kind: input, shape index: {}]
  %s3 = inlined_call_operand.vmem [shape: f32[1,1,16], index: 3, kind: output, shape index: {0}]
  %s4 = inlined_call_operand.vmem [shape: f32[1,1,16], index: 4, kind: output, shape index: {1}]
  %5 = xla_tuple %s3, %s4
  %s6 = sld [smem:[#allocation0]]
  $region30: #{downsample_unit_forward.8} parent=0
    _
  %s8 = ssub.s32 1, %s6
  %s9 = scalar_select 0, %s8, %s6
  // Predicated region
  $region2: #{downsample_unit_forward.8} parent=0 // pred_check
    _
  $region3: #{downsample_unit_forward.8} parent=0 // pred_check_branch
    %11 = sbr.rel (0) target = $region5
  $region4: #{downsample_unit_forward.8} parent=0 // pred_region
    _
  $region5: #{downsample_unit_forward.8} parent=0 // pred_fallthru
    _
  // Predicated region
  $region6: #{downsample_unit_forward.8} parent=0 // pred_check
    _
  $region7: #{downsample_unit_forward.8} parent=0 // pred_check_branch
    %13 = sbr.rel (0) target = $region9
  $region8: #{downsample_unit_forward.8} parent=0 // pred_region
    _
  $region9: #{downsample_unit_forward.8} parent=0 // pred_fallthru
    _
  // Predicated region
  $region10: #{downsample_unit_forward.8} parent=0 // pred_check
    _
  $region11: #{downsample_unit_forward.8} parent=0 // pred_check_branch
    %15 = sbr.rel (0) target = $region13
  $region12: #{downsample_unit_forward.8} parent=0 // pred_region
    _
  $region13: #{downsample_unit_forward.8} parent=0 // pred_fallthru
    _
  %v17 = vld [vmem:[%s0] sm:$0xf]
  %v18 = vld [vmem:[%s0 + $0x4] sm:$0xf]
  %v19 = vld [vmem:[%s0 + $0x8] sm:$0xf]
  %v20 = vld [vmem:[%s0 + $0xc] sm:$0xf]
  %v21 = vld [vmem:[%s0 + $0x10] sm:$0xf]
  %v22 = vld [vmem:[%s0 + $0x14] sm:$0xf]
  %v23 = vld [vmem:[%s0 + $0x18] sm:$0xf]
  %v24 = vld [vmem:[%s0 + $0x1c] sm:$0xf]
  %v25 = vld [vmem:[%s0 + $0x20] sm:$0xf]
  %v26 = vld [vmem:[%s0 + $0x24] sm:$0xf]
  %v27 = vld [vmem:[%s0 + $0x28] sm:$0xf]
  %v28 = vld [vmem:[%s0 + $0x2c] sm:$0xf]
  %v29 = vld [vmem:[%s0 + $0x30] sm:$0xf]
  %v30 = vld [vmem:[%s0 + $0x34] sm:$0xf]
  %v31 = vld [vmem:[%s0 + $0x38] sm:$0xf]
  %v32 = vld [vmem:[%s0 + $0x3c] sm:$0xf]
  %v33 = vld [vmem:[%s1] sm:$0xf]
  %v34 = vld [vmem:[%s1 + $0x4] sm:$0xf]
  %v35 = vld [vmem:[%s2] sm:$0x1]
  %v37 = vperm.slane %v35, 0
  %v55 = vunpack.c.l.b16 %v17
  %v56 = vunpack.c.l.b16 %v18
  %v57 = vunpack.c.l.b16 %v19
  %v58 = vunpack.c.l.b16 %v20
  %v59 = vunpack.c.l.b16 %v21
  %v60 = vunpack.c.l.b16 %v22
  %v61 = vunpack.c.l.b16 %v23
  %v62 = vunpack.c.l.b16 %v24
  %v63 = vunpack.c.l.b16 %v25
  %v64 = vunpack.c.l.b16 %v26
  %v65 = vunpack.c.l.b16 %v27
  %v66 = vunpack.c.l.b16 %v28
  %v67 = vunpack.c.l.b16 %v29
  %v68 = vunpack.c.l.b16 %v30
  %v69 = vunpack.c.l.b16 %v31
  %v70 = vunpack.c.l.b16 %v32
  %v71 = vpack.c.b16 %v56, %v55
  %v72 = vpack.c.b16 %v58, %v57
  %v73 = vpack.c.b16 %v60, %v59
  %v74 = vpack.c.b16 %v62, %v61
  %v75 = vpack.c.b16 %v64, %v63
  %v76 = vpack.c.b16 %v66, %v65
  %v77 = vpack.c.b16 %v68, %v67
  %v78 = vpack.c.b16 %v70, %v69
  %v81 = vunpack.c.l.b16 %v33
  %v82 = vunpack.c.l.b16 %v34
  %v83 = vpack.c.b16 %v82, %v81
  %vm85 = vcmask 130048
  %v87 = vsel %vm85, %v71, 0
  %v90 = vsel %vm85, %v72, 0
  %v93 = vsel %vm85, %v73, 0
  %v96 = vsel %vm85, %v74, 0
  %v99 = vsel %vm85, %v75, 0
  %v102 = vsel %vm85, %v76, 0
  %v105 = vsel %vm85, %v77, 0
  %v108 = vsel %vm85, %v78, 0
  %110 = vmatpush.bf16.msra.mxu0 0
  %111 = vmatpush.bf16.msra.mxu0 0
  %112 = vmatpush.bf16.msra.mxu0 0
  %113 = vmatpush.bf16.msra.mxu0 0
  %114 = vmatpush.bf16.msra.mxu0 0
  %115 = vmatpush.bf16.msra.mxu0 0
  %116 = vmatpush.bf16.msra.mxu0 0
  %117 = vmatpush.bf16.msra.mxu0 %v83
  %118 = vmatmul.bf16.gmra.mxu0 %v87
  %v119 = vpop.f32.mrf.mxu0
  %v120 = vadd.f32 %v37, %v119
  %v121 = vpop.f32.mrf.mxu0
  %v122 = vadd.f32 %v37, %v121
  %123 = vmatmul.bf16.gmra.mxu0 %v90
  %v124 = vpop.f32.mrf.mxu0
  %v125 = vadd.f32 %v37, %v124
  %v126 = vpop.f32.mrf.mxu0
  %v127 = vadd.f32 %v37, %v126
  %128 = vmatmul.bf16.gmra.mxu0 %v93
  %v129 = vpop.f32.mrf.mxu0
  %v130 = vadd.f32 %v37, %v129
  %v131 = vpop.f32.mrf.mxu0
  %v132 = vadd.f32 %v37, %v131
  %133 = vmatmul.bf16.gmra.mxu0 %v96
  %v134 = vpop.f32.mrf.mxu0
  %v135 = vadd.f32 %v37, %v134
  %v136 = vpop.f32.mrf.mxu0
  %v137 = vadd.f32 %v37, %v136
  %138 = vmatmul.bf16.gmra.mxu0 %v99
  %v139 = vpop.f32.mrf.mxu0
  %v140 = vadd.f32 %v37, %v139
  %v141 = vpop.f32.mrf.mxu0
  %v142 = vadd.f32 %v37, %v141
  %143 = vmatmul.bf16.gmra.mxu0 %v102
  %v144 = vpop.f32.mrf.mxu0
  %v145 = vadd.f32 %v37, %v144
  %v146 = vpop.f32.mrf.mxu0
  %v147 = vadd.f32 %v37, %v146
  %148 = vmatmul.bf16.gmra.mxu0 %v105
  %v149 = vpop.f32.mrf.mxu0
  %v150 = vadd.f32 %v37, %v149
  %v151 = vpop.f32.mrf.mxu0
  %v152 = vadd.f32 %v37, %v151
  %153 = vmatmul.bf16.gmra.mxu0 %v108
  %v154 = vpop.f32.mrf.mxu0
  %v155 = vadd.f32 %v37, %v154
  %v156 = vpop.f32.mrf.mxu0
  %v157 = vadd.f32 %v37, %v156
  %158 = vdwg.mxu0
  %v159 = vsel %vm85, %v120, 0.0
  %v160 = vsel %vm85, %v122, 0.0
  %v161 = vadd.f32 %v159, %v160
  %v162 = vsel %vm85, %v125, 0.0
  %v163 = vadd.f32 %v161, %v162
  %v164 = vsel %vm85, %v127, 0.0
  %v165 = vadd.f32 %v163, %v164
  %v166 = vsel %vm85, %v130, 0.0
  %v167 = vadd.f32 %v165, %v166
  %v168 = vsel %vm85, %v132, 0.0
  %v169 = vadd.f32 %v167, %v168
  %v170 = vsel %vm85, %v135, 0.0
  %v171 = vadd.f32 %v169, %v170
  %v172 = vsel %vm85, %v137, 0.0
  %v173 = vadd.f32 %v171, %v172
  %v174 = vsel %vm85, %v140, 0.0
  %v175 = vadd.f32 %v173, %v174
  %v176 = vsel %vm85, %v142, 0.0
  %v177 = vadd.f32 %v175, %v176
  %v178 = vsel %vm85, %v145, 0.0
  %v179 = vadd.f32 %v177, %v178
  %v180 = vsel %vm85, %v147, 0.0
  %v181 = vadd.f32 %v179, %v180
  %v182 = vsel %vm85, %v150, 0.0
  %v183 = vadd.f32 %v181, %v182
  %v184 = vsel %vm85, %v152, 0.0
  %v185 = vadd.f32 %v183, %v184
  %v186 = vsel %vm85, %v155, 0.0
  %v187 = vadd.f32 %v185, %v186
  %v188 = vsel %vm85, %v157, 0.0
  %v189 = vadd.f32 %v187, %v188
  %v190 = vrot.slane %v189, 4
  %v191 = vadd.f32 %v189, %v190
  %v192 = vrot.slane %v191, 2
  %v193 = vadd.f32 %v191, %v192
  %v194 = vrot.slane %v193, 1
  %v195 = vadd.f32 %v193, %v194
  %vm196 = vcmask 122880
  %197 = vst.msk [vmem:[%s3] sm:$0x1] %vm196, %v195
  %v198 = vmul.f32 %v120, %v120
  %v199 = vmul.f32 %v122, %v122
  %v200 = vmul.f32 %v125, %v125
  %v201 = vmul.f32 %v127, %v127
  %v202 = vmul.f32 %v130, %v130
  %v203 = vmul.f32 %v132, %v132
  %v204 = vmul.f32 %v135, %v135
  %v205 = vmul.f32 %v137, %v137
  %v206 = vmul.f32 %v140, %v140
  %v207 = vmul.f32 %v142, %v142
  %v208 = vmul.f32 %v145, %v145
  %v209 = vmul.f32 %v147, %v147
  %v210 = vmul.f32 %v150, %v150
  %v211 = vmul.f32 %v152, %v152
  %v212 = vmul.f32 %v155, %v155
  %v213 = vmul.f32 %v157, %v157
  %v214 = vsel %vm85, %v198, 0.0
  %v215 = vsel %vm85, %v199, 0.0
  %v216 = vadd.f32 %v214, %v215
  %v217 = vsel %vm85, %v200, 0.0
  %v218 = vadd.f32 %v216, %v217
  %v219 = vsel %vm85, %v201, 0.0
  %v220 = vadd.f32 %v218, %v219
  %v221 = vsel %vm85, %v202, 0.0
  %v222 = vadd.f32 %v220, %v221
  %v223 = vsel %vm85, %v203, 0.0
  %v224 = vadd.f32 %v222, %v223
  %v225 = vsel %vm85, %v204, 0.0
  %v226 = vadd.f32 %v224, %v225
  %v227 = vsel %vm85, %v205, 0.0
  %v228 = vadd.f32 %v226, %v227
  %v229 = vsel %vm85, %v206, 0.0
  %v230 = vadd.f32 %v228, %v229
  %v231 = vsel %vm85, %v207, 0.0
  %v232 = vadd.f32 %v230, %v231
  %v233 = vsel %vm85, %v208, 0.0
  %v234 = vadd.f32 %v232, %v233
  %v235 = vsel %vm85, %v209, 0.0
  %v236 = vadd.f32 %v234, %v235
  %v237 = vsel %vm85, %v210, 0.0
  %v238 = vadd.f32 %v236, %v237
  %v239 = vsel %vm85, %v211, 0.0
  %v240 = vadd.f32 %v238, %v239
  %v241 = vsel %vm85, %v212, 0.0
  %v242 = vadd.f32 %v240, %v241
  %v243 = vsel %vm85, %v213, 0.0
  %v244 = vadd.f32 %v242, %v243
  %v245 = vrot.slane %v244, 4
  %v246 = vadd.f32 %v244, %v245
  %v247 = vrot.slane %v246, 2
  %v248 = vadd.f32 %v246, %v247
  %v249 = vrot.slane %v248, 1
  %v250 = vadd.f32 %v248, %v249
  %251 = vst.msk [vmem:[%s4] sm:$0x1] %vm196, %v250
  // Predicated region
  $region14: #{downsample_unit_forward.8} parent=0 // pred_check
    _
  $region15: #{downsample_unit_forward.8} parent=0 // pred_check_branch
    %253 = sbr.rel (0) target = $region17
  $region16: #{downsample_unit_forward.8} parent=0 // pred_region
    _
  $region17: #{downsample_unit_forward.8} parent=0 // pred_fallthru
    _
  // Predicated region
  $region18: #{downsample_unit_forward.8} parent=0 // pred_check
    _
  $region19: #{downsample_unit_forward.8} parent=0 // pred_check_branch
    %255 = sbr.rel (0) target = $region21
  $region20: #{downsample_unit_forward.8} parent=0 // pred_region
    _
  $region21: #{downsample_unit_forward.8} parent=0 // pred_fallthru
    _
  // Predicated region
  $region22: #{downsample_unit_forward.8} parent=0 // pred_check
    _
  $region23: #{downsample_unit_forward.8} parent=0 // pred_check_branch
    %257 = sbr.rel (0) target = $region25
  $region24: #{downsample_unit_forward.8} parent=0 // pred_region
    _
  $region25: #{downsample_unit_forward.8} parent=0 // pred_fallthru
    _
  // Predicated region
  $region26: #{downsample_unit_forward.8} parent=0 // pred_check
    _
  $region27: #{downsample_unit_forward.8} parent=0 // pred_check_branch
    %259 = sbr.rel (0) target = $region29
  $region28: #{downsample_unit_forward.8} parent=0 // pred_region
    _
  $region29: #{downsample_unit_forward.8} parent=0 // pred_fallthru
    _

</llo_original>
